<compile_context>
chip_gen: v7x
topology: tpu7x:2x2x1
jax: 0.10.0
libtpu: 0.0.40
codegen_flags: <defaults>
</compile_context>

<pallas_src>
import math
import functools

import jax
import jax.numpy as jnp
from jax.experimental import pallas as pl

# ---------------- synthetic "BertConfig" (small) ----------------
VOCAB = 64
HIDDEN = 32
N_LAYERS = 2
N_HEADS = 4
HEAD_DIM = HIDDEN // N_HEADS
INTERMEDIATE = 64
MAX_POS = 16
TYPE_VOCAB = 2
PAD_ID = 1            # self.pad_token_id = 1 in the PyTorch module
LN_EPS = 1e-12
OUTPUT_SIZE = 1
HEAD_PAD = 128        # lane-dense padded width of the final head output


# ---------------- in-kernel helpers ----------------
def _layernorm(v, g, b, eps=LN_EPS):
    mu = jnp.mean(v, axis=-1, keepdims=True)
    var = jnp.mean((v - mu) ** 2, axis=-1, keepdims=True)
    return (v - mu) * jax.lax.rsqrt(var + eps) * g + b


def _gelu(x):
    # TODO(synk): HF BERT default activation is exact erf-GELU; tanh approximation used here.
    c = math.sqrt(2.0 / math.pi)
    return 0.5 * x * (1.0 + jnp.tanh(c * (x + 0.044715 * x * x * x)))


# ---------------- fused kernel: embeddings LN -> N encoder layers -> head ----------------
def fused_bert_kernel(emb_ref, maskb_ref, embg_ref, embb_ref,
                      wqkv_ref, bqkv_ref, wo_ref, bo_ref,
                      g1_ref, be1_ref, wi_ref, bi_ref,
                      w2_ref, b2_ref, g2_ref, be2_ref,
                      hw_ref, hb_ref,
                      out_ref,
                      *, B, S):
    # ---- embeddings LayerNorm ----
    x = _layernorm(emb_ref[...], embg_ref[...], embb_ref[...])     # (B*S, H) f32
    mask3 = maskb_ref[...]                                          # (B, 1, S) additive bias

    # ---- encoder layers: static unroll, all weights VMEM resident ----
    for l in range(N_LAYERS):
        xb = x.astype(jnp.bfloat16)

        # fused Q|K|V projection (one MXU push, 96-lane output);
        # softmax 1/sqrt(head_dim) already folded into Wq / bq at init time.
        qkv = jnp.dot(xb, wqkv_ref[l],
                      preferred_element_type=jnp.float32) + bqkv_ref[l]
        q16 = qkv[:, :HIDDEN].astype(jnp.bfloat16)
        k16 = qkv[:, HIDDEN:2 * HIDDEN].astype(jnp.bfloat16)
        v16 = qkv[:, 2 * HIDDEN:].astype(jnp.bfloat16)

        ctx_heads = []
        for h in range(N_HEADS):                 # static loop, batched over B per head
            sl = slice(h * HEAD_DIM, (h + 1) * HEAD_DIM)
            qh = q16[:, sl].reshape(B, S, HEAD_DIM)
            kh = k16[:, sl].reshape(B, S, HEAD_DIM)
            vh = v16[:, sl].reshape(B, S, HEAD_DIM)
            s = jnp.einsum('bqd,bkd->bqk', qh, kh,
                           preferred_element_type=jnp.float32) + mask3
            s = s - jnp.max(s, axis=-1, keepdims=True)
            p = jnp.exp(s)
            p = p * pl.reciprocal(jnp.sum(p, axis=-1, keepdims=True), approx=True)
            ctxh = jnp.einsum('bqk,bkd->bqd', p.astype(jnp.bfloat16), vh,
                              preferred_element_type=jnp.float32)   # (B, S, HD)
            ctx_heads.append(ctxh.reshape(B * S, HEAD_DIM))
        # in-register lane concat -> single Wo matmul (no VMEM scratch, no masked stores)
        ctx = jnp.concatenate(ctx_heads, axis=-1).astype(jnp.bfloat16)   # (B*S, H)

        attn = jnp.dot(ctx, wo_ref[l],
                       preferred_element_type=jnp.float32) + bo_ref[l]
        h1 = _layernorm(x + attn, g1_ref[l], be1_ref[l])

        # ---- feed-forward ----
        ff = jnp.dot(h1.astype(jnp.bfloat16), wi_ref[l],
                     preferred_element_type=jnp.float32) + bi_ref[l]
        ff = _gelu(ff)
        ff = jnp.dot(ff.astype(jnp.bfloat16), w2_ref[l],
                     preferred_element_type=jnp.float32) + b2_ref[l]
        x = _layernorm(h1 + ff, g2_ref[l], be2_ref[l])

    # ---- CLS token (row 0 of each sequence) + dropout(identity at eval) + head ----
    cls = x.reshape(B, S, HIDDEN)[:, 0, :]                          # (B, H) sublane slice
    out_ref[...] = (jnp.dot(cls, hw_ref[...],
                            preferred_element_type=jnp.float32)
                    + hb_ref[...])                                   # lane-dense (B, 128)


# ---------------- full forward (Bert.forward) ----------------
def bert_dssm_forward(input_ids, params):
    B, S = input_ids.shape

    # attention_mask = input_ids != pad_token_id  ->  additive bias (B, 1, S)
    mask_bias = jnp.where(input_ids != PAD_ID, 0.0, -1e9).astype(jnp.float32)
    mask_bias = mask_bias.reshape(B, 1, S)

    # embeddings (gather is glue; everything else runs inside the fused kernel)
    pos_ids = jnp.arange(S)
    # TODO(synk): token_type_ids assumed all-zero (BertModel default when omitted).
    emb = (params["word_emb"][input_ids]
           + params["pos_emb"][pos_ids][None, :, :]
           + params["type_emb"][0][None, None, :]).astype(jnp.float32)
    emb = emb.reshape(B * S, HIDDEN)

    kernel = functools.partial(fused_bert_kernel, B=B, S=S)

    # Gridless call: the whole (tiny) problem lives in VMEM for the call's duration.
    # TODO(synk): for real BERT dims / large batch, reintroduce a
    # (batch-"parallel", layer-"arbitrary") grid with per-layer weight streaming
    # and an explicit vmem_limit_bytes budget (v7x only has 64 MiB VMEM).
    out_padded = pl.pallas_call(
        kernel,
        out_shape=jax.ShapeDtypeStruct((B, HEAD_PAD), jnp.float32),
    )(emb, mask_bias,
      params["emb_ln_g"], params["emb_ln_b"],
      params["wqkv"], params["bqkv"], params["wo"], params["bo"],
      params["ln1_g"], params["ln1_b"],
      params["wi"], params["bi"], params["w2"], params["b2"],
      params["ln2_g"], params["ln2_b"],
      params["head_w"], params["head_b"])
    return out_padded[:, :OUTPUT_SIZE]


# ---------------- parameter init (deterministic, synthetic) ----------------
def init_params(key):
    ks = jax.random.split(key, 10)

    def nrm(k, shape):
        return 0.02 * jax.random.normal(k, shape, jnp.float32)

    # Fold the 1/sqrt(head_dim) softmax scale into Wq (bq is zero, so scaling it is a no-op).
    scale = 1.0 / math.sqrt(HEAD_DIM)
    wq = nrm(ks[3], (N_LAYERS, HIDDEN, HIDDEN)) * scale
    wk = nrm(ks[4], (N_LAYERS, HIDDEN, HIDDEN))
    wv = nrm(ks[5], (N_LAYERS, HIDDEN, HIDDEN))
    wqkv = jnp.concatenate([wq, wk, wv], axis=-1).astype(jnp.bfloat16)   # (L, H, 3H)

    # head.weight.data.normal_(0, 0.02); stored transposed and padded to 128 lanes.
    head_w = jnp.zeros((HIDDEN, HEAD_PAD), jnp.float32)
    head_w = head_w.at[:, :OUTPUT_SIZE].set(nrm(ks[9], (HIDDEN, OUTPUT_SIZE)))

    p = {
        "word_emb": nrm(ks[0], (VOCAB, HIDDEN)),
        "pos_emb": nrm(ks[1], (MAX_POS, HIDDEN)),
        "type_emb": nrm(ks[2], (TYPE_VOCAB, HIDDEN)),
        "emb_ln_g": jnp.ones((1, HIDDEN), jnp.float32),
        "emb_ln_b": jnp.zeros((1, HIDDEN), jnp.float32),
        # encoder weights stacked over layers; matmul weights in bf16 (MXU native),
        # biases / LayerNorm params stay f32.
        "wqkv": wqkv,                                                    # (L, H, 3H) bf16
        "bqkv": jnp.zeros((N_LAYERS, 1, 3 * HIDDEN), jnp.float32),
        "wo": nrm(ks[6], (N_LAYERS, HIDDEN, HIDDEN)).astype(jnp.bfloat16),
        "bo": jnp.zeros((N_LAYERS, 1, HIDDEN), jnp.float32),
        "ln1_g": jnp.ones((N_LAYERS, 1, HIDDEN), jnp.float32),
        "ln1_b": jnp.zeros((N_LAYERS, 1, HIDDEN), jnp.float32),
        "wi": nrm(ks[7], (N_LAYERS, HIDDEN, INTERMEDIATE)).astype(jnp.bfloat16),
        "bi": jnp.zeros((N_LAYERS, 1, INTERMEDIATE), jnp.float32),
        "w2": nrm(ks[8], (N_LAYERS, INTERMEDIATE, HIDDEN)).astype(jnp.bfloat16),
        "b2": jnp.zeros((N_LAYERS, 1, HIDDEN), jnp.float32),
        "ln2_g": jnp.ones((N_LAYERS, 1, HIDDEN), jnp.float32),
        "ln2_b": jnp.zeros((N_LAYERS, 1, HIDDEN), jnp.float32),
        "head_w": head_w,                                                # (H, 128) f32
        "head_b": jnp.zeros((1, HEAD_PAD), jnp.float32),
    }
    return p


if __name__ == "__main__":
    B, S = 2, 8
    key = jax.random.PRNGKey(0)
    k_ids, k_params = jax.random.split(key)

    input_ids = jax.random.randint(k_ids, (B, S), 0, VOCAB, dtype=jnp.int32)
    input_ids = input_ids.at[1, 5:].set(PAD_ID)   # some padding to exercise the mask

    params = init_params(k_params)
    fwd = jax.jit(bert_dssm_forward)
    out = fwd(input_ids, params)
    out = jax.block_until_ready(out)
    assert out.shape == (B, OUTPUT_SIZE) and out.dtype == jnp.float32
    print("KERNEL_OK")
</pallas_src>

<mosaic_0001>
module attributes {stable_mosaic.version = 11 : i64} {
  func.func @fused_bert_kernel(%arg0: memref<16x32xf32, #tpu.memory_space<vmem>>, %arg1: memref<2x1x8xf32, #tpu.memory_space<vmem>>, %arg2: memref<1x32xf32, #tpu.memory_space<vmem>>, %arg3: memref<1x32xf32, #tpu.memory_space<vmem>>, %arg4: memref<2x32x96xbf16, #tpu.memory_space<vmem>>, %arg5: memref<2x1x96xf32, #tpu.memory_space<vmem>>, %arg6: memref<2x32x32xbf16, #tpu.memory_space<vmem>>, %arg7: memref<2x1x32xf32, #tpu.memory_space<vmem>>, %arg8: memref<2x1x32xf32, #tpu.memory_space<vmem>>, %arg9: memref<2x1x32xf32, #tpu.memory_space<vmem>>, %arg10: memref<2x32x64xbf16, #tpu.memory_space<vmem>>, %arg11: memref<2x1x64xf32, #tpu.memory_space<vmem>>, %arg12: memref<2x64x32xbf16, #tpu.memory_space<vmem>>, %arg13: memref<2x1x32xf32, #tpu.memory_space<vmem>>, %arg14: memref<2x1x32xf32, #tpu.memory_space<vmem>>, %arg15: memref<2x1x32xf32, #tpu.memory_space<vmem>>, %arg16: memref<32x128xf32, #tpu.memory_space<vmem>>, %arg17: memref<1x128xf32, #tpu.memory_space<vmem>>, %arg18: memref<2x128xf32, #tpu.memory_space<vmem>>) attributes {dimension_semantics = [], scalar_prefetch = 0 : i64, scratch_operands = 0 : i64, tpu.core_type = #tpu.core_type<tc>} {
    %c0 = arith.constant 0 : index
    %c0_0 = arith.constant 0 : index
    %0 = vector.load %arg0[%c0, %c0_0] : memref<16x32xf32, #tpu.memory_space<vmem>>, vector<16x32xf32>
    %c0_1 = arith.constant 0 : index
    %c0_2 = arith.constant 0 : index
    %1 = vector.load %arg2[%c0_1, %c0_2] : memref<1x32xf32, #tpu.memory_space<vmem>>, vector<1x32xf32>
    %c0_3 = arith.constant 0 : index
    %c0_4 = arith.constant 0 : index
    %2 = vector.load %arg3[%c0_3, %c0_4] : memref<1x32xf32, #tpu.memory_space<vmem>>, vector<1x32xf32>
    %cst = arith.constant dense<0.000000e+00> : vector<16xf32>
    %3 = vector.multi_reduction <add>, %0, %cst [1] : vector<16x32xf32> to vector<16xf32>
    %4 = vector.shape_cast %3 : vector<16xf32> to vector<16x1xf32>
    %cst_5 = arith.constant 3.200000e+01 : f32
    %5 = vector.broadcast %cst_5 : f32 to vector<16x1xf32>
    %6 = arith.divf %4, %5 : vector<16x1xf32>
    %7 = vector.broadcast %6 : vector<16x1xf32> to vector<16x32xf32>
    %8 = arith.subf %0, %7 : vector<16x32xf32>
    %9 = arith.mulf %8, %8 : vector<16x32xf32>
    %cst_6 = arith.constant dense<0.000000e+00> : vector<16xf32>
    %10 = vector.multi_reduction <add>, %9, %cst_6 [1] : vector<16x32xf32> to vector<16xf32>
    %11 = vector.shape_cast %10 : vector<16xf32> to vector<16x1xf32>
    %cst_7 = arith.constant 3.200000e+01 : f32
    %12 = vector.broadcast %cst_7 : f32 to vector<16x1xf32>
    %13 = arith.divf %11, %12 : vector<16x1xf32>
    %14 = vector.broadcast %6 : vector<16x1xf32> to vector<16x32xf32>
    %15 = arith.subf %0, %14 : vector<16x32xf32>
    %cst_8 = arith.constant 9.99999996E-13 : f32
    %16 = vector.broadcast %cst_8 : f32 to vector<16x1xf32>
    %17 = arith.addf %13, %16 : vector<16x1xf32>
    %18 = math.rsqrt %17 : vector<16x1xf32>
    %19 = vector.broadcast %18 : vector<16x1xf32> to vector<16x32xf32>
    %20 = arith.mulf %15, %19 : vector<16x32xf32>
    %21 = vector.broadcast %1 : vector<1x32xf32> to vector<16x32xf32>
    %22 = arith.mulf %20, %21 : vector<16x32xf32>
    %23 = vector.broadcast %2 : vector<1x32xf32> to vector<16x32xf32>
    %24 = arith.addf %22, %23 : vector<16x32xf32>
    %c0_9 = arith.constant 0 : index
    %c0_10 = arith.constant 0 : index
    %c0_11 = arith.constant 0 : index
    %25 = vector.load %arg1[%c0_9, %c0_10, %c0_11] : memref<2x1x8xf32, #tpu.memory_space<vmem>>, vector<2x1x8xf32>
    %26 = arith.truncf %24 : vector<16x32xf32> to vector<16x32xbf16>
    %c0_12 = arith.constant 0 : index
    %c0_13 = arith.constant 0 : index
    %c0_14 = arith.constant 0 : index
    %27 = vector.load %arg4[%c0_12, %c0_13, %c0_14] : memref<2x32x96xbf16, #tpu.memory_space<vmem>>, vector<1x32x96xbf16>
    %28 = vector.shape_cast %27 : vector<1x32x96xbf16> to vector<32x96xbf16>
    %cst_15 = arith.constant dense<0.000000e+00> : vector<16x96xf32>
    %29 = tpu.matmul %26, %28, %cst_15 {dimension_numbers = #tpu.dot_dimension_numbers<[1], [0], [0], [1], [0, 0, 1, 1], [], []>} : vector<16x32xbf16>, vector<32x96xbf16>, vector<16x96xf32> -> vector<16x96xf32>
    %c0_16 = arith.constant 0 : index
    %c0_17 = arith.constant 0 : index
    %c0_18 = arith.constant 0 : index
    %30 = vector.load %arg5[%c0_16, %c0_17, %c0_18] : memref<2x1x96xf32, #tpu.memory_space<vmem>>, vector<1x1x96xf32>
    %31 = vector.shape_cast %30 : vector<1x1x96xf32> to vector<1x96xf32>
    %32 = vector.broadcast %31 : vector<1x96xf32> to vector<16x96xf32>
    %33 = arith.addf %29, %32 : vector<16x96xf32>
    %34 = vector.extract_strided_slice %33 {offsets = [0, 0], sizes = [16, 32], strides = [1, 1]} : vector<16x96xf32> to vector<16x32xf32>
    %35 = arith.truncf %34 : vector<16x32xf32> to vector<16x32xbf16>
    %36 = vector.extract_strided_slice %33 {offsets = [0, 32], sizes = [16, 32], strides = [1, 1]} : vector<16x96xf32> to vector<16x32xf32>
    %37 = arith.truncf %36 : vector<16x32xf32> to vector<16x32xbf16>
    %38 = vector.extract_strided_slice %33 {offsets = [0, 64], sizes = [16, 32], strides = [1, 1]} : vector<16x96xf32> to vector<16x32xf32>
    %39 = arith.truncf %38 : vector<16x32xf32> to vector<16x32xbf16>
    %40 = vector.extract_strided_slice %35 {offsets = [0, 0], sizes = [16, 8], strides = [1, 1]} : vector<16x32xbf16> to vector<16x8xbf16>
    %41 = vector.shape_cast %40 : vector<16x8xbf16> to vector<2x8x8xbf16>
    %42 = vector.extract_strided_slice %37 {offsets = [0, 0], sizes = [16, 8], strides = [1, 1]} : vector<16x32xbf16> to vector<16x8xbf16>
    %43 = vector.shape_cast %42 : vector<16x8xbf16> to vector<2x8x8xbf16>
    %44 = vector.extract_strided_slice %39 {offsets = [0, 0], sizes = [16, 8], strides = [1, 1]} : vector<16x32xbf16> to vector<16x8xbf16>
    %45 = vector.shape_cast %44 : vector<16x8xbf16> to vector<2x8x8xbf16>
    "tpu.trace_start"() <{level = 10 : i32, message = "bqd,bkd->bqk"}> : () -> ()
    %cst_19 = arith.constant dense<0.000000e+00> : vector<2x8x8xf32>
    %46 = tpu.matmul %41, %43, %cst_19 {dimension_numbers = #tpu.dot_dimension_numbers<[2], [2], [1], [1], [0, 0, 0, 1, 1, 1], [0], [0]>} : vector<2x8x8xbf16>, vector<2x8x8xbf16>, vector<2x8x8xf32> -> vector<2x8x8xf32>
    "tpu.trace_stop"() : () -> ()
    %47 = vector.broadcast %25 : vector<2x1x8xf32> to vector<2x8x8xf32>
    %48 = arith.addf %46, %47 : vector<2x8x8xf32>
    %cst_20 = arith.constant dense<0xFF800000> : vector<2x8xf32>
    %49 = vector.multi_reduction <maximumf>, %48, %cst_20 [2] : vector<2x8x8xf32> to vector<2x8xf32>
    %50 = vector.shape_cast %49 : vector<2x8xf32> to vector<2x8x1xf32>
    %51 = vector.broadcast %50 : vector<2x8x1xf32> to vector<2x8x8xf32>
    %52 = arith.subf %48, %51 : vector<2x8x8xf32>
    %53 = math.exp %52 : vector<2x8x8xf32>
    %cst_21 = arith.constant dense<0.000000e+00> : vector<2x8xf32>
    %54 = vector.multi_reduction <add>, %53, %cst_21 [2] : vector<2x8x8xf32> to vector<2x8xf32>
    %55 = vector.shape_cast %54 : vector<2x8xf32> to vector<2x8x1xf32>
    %56 = tpu.reciprocal %55 {approx = true} : vector<2x8x1xf32> -> vector<2x8x1xf32>
    %57 = vector.broadcast %56 : vector<2x8x1xf32> to vector<2x8x8xf32>
    %58 = arith.mulf %53, %57 : vector<2x8x8xf32>
    %59 = arith.truncf %58 : vector<2x8x8xf32> to vector<2x8x8xbf16>
    "tpu.trace_start"() <{level = 10 : i32, message = "bqk,bkd->bqd"}> : () -> ()
    %cst_22 = arith.constant dense<0.000000e+00> : vector<2x8x8xf32>
    %60 = tpu.matmul %59, %45, %cst_22 {dimension_numbers = #tpu.dot_dimension_numbers<[2], [1], [1], [2], [0, 0, 0, 1, 1, 2], [0], [0]>} : vector<2x8x8xbf16>, vector<2x8x8xbf16>, vector<2x8x8xf32> -> vector<2x8x8xf32>
    "tpu.trace_stop"() : () -> ()
    %61 = vector.shape_cast %60 : vector<2x8x8xf32> to vector<16x8xf32>
    %62 = vector.extract_strided_slice %35 {offsets = [0, 8], sizes = [16, 8], strides = [1, 1]} : vector<16x32xbf16> to vector<16x8xbf16>
    %63 = vector.shape_cast %62 : vector<16x8xbf16> to vector<2x8x8xbf16>
    %64 = vector.extract_strided_slice %37 {offsets = [0, 8], sizes = [16, 8], strides = [1, 1]} : vector<16x32xbf16> to vector<16x8xbf16>
    %65 = vector.shape_cast %64 : vector<16x8xbf16> to vector<2x8x8xbf16>
    %66 = vector.extract_strided_slice %39 {offsets = [0, 8], sizes = [16, 8], strides = [1, 1]} : vector<16x32xbf16> to vector<16x8xbf16>
    %67 = vector.shape_cast %66 : vector<16x8xbf16> to vector<2x8x8xbf16>
    "tpu.trace_start"() <{level = 10 : i32, message = "bqd,bkd->bqk"}> : () -> ()
    %cst_23 = arith.constant dense<0.000000e+00> : vector<2x8x8xf32>
    %68 = tpu.matmul %63, %65, %cst_23 {dimension_numbers = #tpu.dot_dimension_numbers<[2], [2], [1], [1], [0, 0, 0, 1, 1, 1], [0], [0]>} : vector<2x8x8xbf16>, vector<2x8x8xbf16>, vector<2x8x8xf32> -> vector<2x8x8xf32>
    "tpu.trace_stop"() : () -> ()
    %69 = vector.broadcast %25 : vector<2x1x8xf32> to vector<2x8x8xf32>
    %70 = arith.addf %68, %69 : vector<2x8x8xf32>
    %cst_24 = arith.constant dense<0xFF800000> : vector<2x8xf32>
    %71 = vector.multi_reduction <maximumf>, %70, %cst_24 [2] : vector<2x8x8xf32> to vector<2x8xf32>
    %72 = vector.shape_cast %71 : vector<2x8xf32> to vector<2x8x1xf32>
    %73 = vector.broadcast %72 : vector<2x8x1xf32> to vector<2x8x8xf32>
    %74 = arith.subf %70, %73 : vector<2x8x8xf32>
    %75 = math.exp %74 : vector<2x8x8xf32>
    %cst_25 = arith.constant dense<0.000000e+00> : vector<2x8xf32>
    %76 = vector.multi_reduction <add>, %75, %cst_25 [2] : vector<2x8x8xf32> to vector<2x8xf32>
    %77 = vector.shape_cast %76 : vector<2x8xf32> to vector<2x8x1xf32>
    %78 = tpu.reciprocal %77 {approx = true} : vector<2x8x1xf32> -> vector<2x8x1xf32>
    %79 = vector.broadcast %78 : vector<2x8x1xf32> to vector<2x8x8xf32>
    %80 = arith.mulf %75, %79 : vector<2x8x8xf32>
    %81 = arith.truncf %80 : vector<2x8x8xf32> to vector<2x8x8xbf16>
    "tpu.trace_start"() <{level = 10 : i32, message = "bqk,bkd->bqd"}> : () -> ()
    %cst_26 = arith.constant dense<0.000000e+00> : vector<2x8x8xf32>
    %82 = tpu.matmul %81, %67, %cst_26 {dimension_numbers = #tpu.dot_dimension_numbers<[2], [1], [1], [2], [0, 0, 0, 1, 1, 2], [0], [0]>} : vector<2x8x8xbf16>, vector<2x8x8xbf16>, vector<2x8x8xf32> -> vector<2x8x8xf32>
    "tpu.trace_stop"() : () -> ()
    %83 = vector.shape_cast %82 : vector<2x8x8xf32> to vector<16x8xf32>
    %84 = vector.extract_strided_slice %35 {offsets = [0, 16], sizes = [16, 8], strides = [1, 1]} : vector<16x32xbf16> to vector<16x8xbf16>
    %85 = vector.shape_cast %84 : vector<16x8xbf16> to vector<2x8x8xbf16>
    %86 = vector.extract_strided_slice %37 {offsets = [0, 16], sizes = [16, 8], strides = [1, 1]} : vector<16x32xbf16> to vector<16x8xbf16>
    %87 = vector.shape_cast %86 : vector<16x8xbf16> to vector<2x8x8xbf16>
    %88 = vector.extract_strided_slice %39 {offsets = [0, 16], sizes = [16, 8], strides = [1, 1]} : vector<16x32xbf16> to vector<16x8xbf16>
    %89 = vector.shape_cast %88 : vector<16x8xbf16> to vector<2x8x8xbf16>
    "tpu.trace_start"() <{level = 10 : i32, message = "bqd,bkd->bqk"}> : () -> ()
    %cst_27 = arith.constant dense<0.000000e+00> : vector<2x8x8xf32>
    %90 = tpu.matmul %85, %87, %cst_27 {dimension_numbers = #tpu.dot_dimension_numbers<[2], [2], [1], [1], [0, 0, 0, 1, 1, 1], [0], [0]>} : vector<2x8x8xbf16>, vector<2x8x8xbf16>, vector<2x8x8xf32> -> vector<2x8x8xf32>
    "tpu.trace_stop"() : () -> ()
    %91 = vector.broadcast %25 : vector<2x1x8xf32> to vector<2x8x8xf32>
    %92 = arith.addf %90, %91 : vector<2x8x8xf32>
    %cst_28 = arith.constant dense<0xFF800000> : vector<2x8xf32>
    %93 = vector.multi_reduction <maximumf>, %92, %cst_28 [2] : vector<2x8x8xf32> to vector<2x8xf32>
    %94 = vector.shape_cast %93 : vector<2x8xf32> to vector<2x8x1xf32>
    %95 = vector.broadcast %94 : vector<2x8x1xf32> to vector<2x8x8xf32>
    %96 = arith.subf %92, %95 : vector<2x8x8xf32>
    %97 = math.exp %96 : vector<2x8x8xf32>
    %cst_29 = arith.constant dense<0.000000e+00> : vector<2x8xf32>
    %98 = vector.multi_reduction <add>, %97, %cst_29 [2] : vector<2x8x8xf32> to vector<2x8xf32>
    %99 = vector.shape_cast %98 : vector<2x8xf32> to vector<2x8x1xf32>
    %100 = tpu.reciprocal %99 {approx = true} : vector<2x8x1xf32> -> vector<2x8x1xf32>
    %101 = vector.broadcast %100 : vector<2x8x1xf32> to vector<2x8x8xf32>
    %102 = arith.mulf %97, %101 : vector<2x8x8xf32>
    %103 = arith.truncf %102 : vector<2x8x8xf32> to vector<2x8x8xbf16>
    "tpu.trace_start"() <{level = 10 : i32, message = "bqk,bkd->bqd"}> : () -> ()
    %cst_30 = arith.constant dense<0.000000e+00> : vector<2x8x8xf32>
    %104 = tpu.matmul %103, %89, %cst_30 {dimension_numbers = #tpu.dot_dimension_numbers<[2], [1], [1], [2], [0, 0, 0, 1, 1, 2], [0], [0]>} : vector<2x8x8xbf16>, vector<2x8x8xbf16>, vector<2x8x8xf32> -> vector<2x8x8xf32>
    "tpu.trace_stop"() : () -> ()
    %105 = vector.shape_cast %104 : vector<2x8x8xf32> to vector<16x8xf32>
    %106 = vector.extract_strided_slice %35 {offsets = [0, 24], sizes = [16, 8], strides = [1, 1]} : vector<16x32xbf16> to vector<16x8xbf16>
    %107 = vector.shape_cast %106 : vector<16x8xbf16> to vector<2x8x8xbf16>
    %108 = vector.extract_strided_slice %37 {offsets = [0, 24], sizes = [16, 8], strides = [1, 1]} : vector<16x32xbf16> to vector<16x8xbf16>
    %109 = vector.shape_cast %108 : vector<16x8xbf16> to vector<2x8x8xbf16>
    %110 = vector.extract_strided_slice %39 {offsets = [0, 24], sizes = [16, 8], strides = [1, 1]} : vector<16x32xbf16> to vector<16x8xbf16>
    %111 = vector.shape_cast %110 : vector<16x8xbf16> to vector<2x8x8xbf16>
    "tpu.trace_start"() <{level = 10 : i32, message = "bqd,bkd->bqk"}> : () -> ()
    %cst_31 = arith.constant dense<0.000000e+00> : vector<2x8x8xf32>
    %112 = tpu.matmul %107, %109, %cst_31 {dimension_numbers = #tpu.dot_dimension_numbers<[2], [2], [1], [1], [0, 0, 0, 1, 1, 1], [0], [0]>} : vector<2x8x8xbf16>, vector<2x8x8xbf16>, vector<2x8x8xf32> -> vector<2x8x8xf32>
    "tpu.trace_stop"() : () -> ()
    %113 = vector.broadcast %25 : vector<2x1x8xf32> to vector<2x8x8xf32>
    %114 = arith.addf %112, %113 : vector<2x8x8xf32>
    %cst_32 = arith.constant dense<0xFF800000> : vector<2x8xf32>
    %115 = vector.multi_reduction <maximumf>, %114, %cst_32 [2] : vector<2x8x8xf32> to vector<2x8xf32>
    %116 = vector.shape_cast %115 : vector<2x8xf32> to vector<2x8x1xf32>
    %117 = vector.broadcast %116 : vector<2x8x1xf32> to vector<2x8x8xf32>
    %118 = arith.subf %114, %117 : vector<2x8x8xf32>
    %119 = math.exp %118 : vector<2x8x8xf32>
    %cst_33 = arith.constant dense<0.000000e+00> : vector<2x8xf32>
    %120 = vector.multi_reduction <add>, %119, %cst_33 [2] : vector<2x8x8xf32> to vector<2x8xf32>
    %121 = vector.shape_cast %120 : vector<2x8xf32> to vector<2x8x1xf32>
    %122 = tpu.reciprocal %121 {approx = true} : vector<2x8x1xf32> -> vector<2x8x1xf32>
    %123 = vector.broadcast %122 : vector<2x8x1xf32> to vector<2x8x8xf32>
    %124 = arith.mulf %119, %123 : vector<2x8x8xf32>
    %125 = arith.truncf %124 : vector<2x8x8xf32> to vector<2x8x8xbf16>
    "tpu.trace_start"() <{level = 10 : i32, message = "bqk,bkd->bqd"}> : () -> ()
    %cst_34 = arith.constant dense<0.000000e+00> : vector<2x8x8xf32>
    %126 = tpu.matmul %125, %111, %cst_34 {dimension_numbers = #tpu.dot_dimension_numbers<[2], [1], [1], [2], [0, 0, 0, 1, 1, 2], [0], [0]>} : vector<2x8x8xbf16>, vector<2x8x8xbf16>, vector<2x8x8xf32> -> vector<2x8x8xf32>
    "tpu.trace_stop"() : () -> ()
    %127 = vector.shape_cast %126 : vector<2x8x8xf32> to vector<16x8xf32>
    %128 = tpu.concatenate %61, %83, %105, %127 in 1 : vector<16x8xf32>, vector<16x8xf32>, vector<16x8xf32>, vector<16x8xf32> -> vector<16x32xf32>
    %129 = arith.truncf %128 : vector<16x32xf32> to vector<16x32xbf16>
    %c0_35 = arith.constant 0 : index
    %c0_36 = arith.constant 0 : index
    %c0_37 = arith.constant 0 : index
    %130 = vector.load %arg6[%c0_35, %c0_36, %c0_37] : memref<2x32x32xbf16, #tpu.memory_space<vmem>>, vector<1x32x32xbf16>
    %131 = vector.shape_cast %130 : vector<1x32x32xbf16> to vector<32x32xbf16>
    %cst_38 = arith.constant dense<0.000000e+00> : vector<16x32xf32>
    %132 = tpu.matmul %129, %131, %cst_38 {dimension_numbers = #tpu.dot_dimension_numbers<[1], [0], [0], [1], [0, 0, 1, 1], [], []>} : vector<16x32xbf16>, vector<32x32xbf16>, vector<16x32xf32> -> vector<16x32xf32>
    %c0_39 = arith.constant 0 : index
    %c0_40 = arith.constant 0 : index
    %c0_41 = arith.constant 0 : index
    %133 = vector.load %arg7[%c0_39, %c0_40, %c0_41] : memref<2x1x32xf32, #tpu.memory_space<vmem>>, vector<1x1x32xf32>
    %134 = vector.shape_cast %133 : vector<1x1x32xf32> to vector<1x32xf32>
    %135 = vector.broadcast %134 : vector<1x32xf32> to vector<16x32xf32>
    %136 = arith.addf %132, %135 : vector<16x32xf32>
    %137 = arith.addf %24, %136 : vector<16x32xf32>
    %c0_42 = arith.constant 0 : index
    %c0_43 = arith.constant 0 : index
    %c0_44 = arith.constant 0 : index
    %138 = vector.load %arg8[%c0_42, %c0_43, %c0_44] : memref<2x1x32xf32, #tpu.memory_space<vmem>>, vector<1x1x32xf32>
    %139 = vector.shape_cast %138 : vector<1x1x32xf32> to vector<1x32xf32>
    %c0_45 = arith.constant 0 : index
    %c0_46 = arith.constant 0 : index
    %c0_47 = arith.constant 0 : index
    %140 = vector.load %arg9[%c0_45, %c0_46, %c0_47] : memref<2x1x32xf32, #tpu.memory_space<vmem>>, vector<1x1x32xf32>
    %141 = vector.shape_cast %140 : vector<1x1x32xf32> to vector<1x32xf32>
    %cst_48 = arith.constant dense<0.000000e+00> : vector<16xf32>
    %142 = vector.multi_reduction <add>, %137, %cst_48 [1] : vector<16x32xf32> to vector<16xf32>
    %143 = vector.shape_cast %142 : vector<16xf32> to vector<16x1xf32>
    %cst_49 = arith.constant 3.200000e+01 : f32
    %144 = vector.broadcast %cst_49 : f32 to vector<16x1xf32>
    %145 = arith.divf %143, %144 : vector<16x1xf32>
    %146 = vector.broadcast %145 : vector<16x1xf32> to vector<16x32xf32>
    %147 = arith.subf %137, %146 : vector<16x32xf32>
    %148 = arith.mulf %147, %147 : vector<16x32xf32>
    %cst_50 = arith.constant dense<0.000000e+00> : vector<16xf32>
    %149 = vector.multi_reduction <add>, %148, %cst_50 [1] : vector<16x32xf32> to vector<16xf32>
    %150 = vector.shape_cast %149 : vector<16xf32> to vector<16x1xf32>
    %cst_51 = arith.constant 3.200000e+01 : f32
    %151 = vector.broadcast %cst_51 : f32 to vector<16x1xf32>
    %152 = arith.divf %150, %151 : vector<16x1xf32>
    %153 = vector.broadcast %145 : vector<16x1xf32> to vector<16x32xf32>
    %154 = arith.subf %137, %153 : vector<16x32xf32>
    %cst_52 = arith.constant 9.99999996E-13 : f32
    %155 = vector.broadcast %cst_52 : f32 to vector<16x1xf32>
    %156 = arith.addf %152, %155 : vector<16x1xf32>
    %157 = math.rsqrt %156 : vector<16x1xf32>
    %158 = vector.broadcast %157 : vector<16x1xf32> to vector<16x32xf32>
    %159 = arith.mulf %154, %158 : vector<16x32xf32>
    %160 = vector.broadcast %139 : vector<1x32xf32> to vector<16x32xf32>
    %161 = arith.mulf %159, %160 : vector<16x32xf32>
    %162 = vector.broadcast %141 : vector<1x32xf32> to vector<16x32xf32>
    %163 = arith.addf %161, %162 : vector<16x32xf32>
    %164 = arith.truncf %163 : vector<16x32xf32> to vector<16x32xbf16>
    %c0_53 = arith.constant 0 : index
    %c0_54 = arith.constant 0 : index
    %c0_55 = arith.constant 0 : index
    %165 = vector.load %arg10[%c0_53, %c0_54, %c0_55] : memref<2x32x64xbf16, #tpu.memory_space<vmem>>, vector<1x32x64xbf16>
    %166 = vector.shape_cast %165 : vector<1x32x64xbf16> to vector<32x64xbf16>
    %cst_56 = arith.constant dense<0.000000e+00> : vector<16x64xf32>
    %167 = tpu.matmul %164, %166, %cst_56 {dimension_numbers = #tpu.dot_dimension_numbers<[1], [0], [0], [1], [0, 0, 1, 1], [], []>} : vector<16x32xbf16>, vector<32x64xbf16>, vector<16x64xf32> -> vector<16x64xf32>
    %c0_57 = arith.constant 0 : index
    %c0_58 = arith.constant 0 : index
    %c0_59 = arith.constant 0 : index
    %168 = vector.load %arg11[%c0_57, %c0_58, %c0_59] : memref<2x1x64xf32, #tpu.memory_space<vmem>>, vector<1x1x64xf32>
    %169 = vector.shape_cast %168 : vector<1x1x64xf32> to vector<1x64xf32>
    %170 = vector.broadcast %169 : vector<1x64xf32> to vector<16x64xf32>
    %171 = arith.addf %167, %170 : vector<16x64xf32>
    %cst_60 = arith.constant 5.000000e-01 : f32
    %172 = vector.broadcast %cst_60 : f32 to vector<16x64xf32>
    %173 = arith.mulf %172, %171 : vector<16x64xf32>
    %cst_61 = arith.constant 4.471500e-02 : f32
    %174 = vector.broadcast %cst_61 : f32 to vector<16x64xf32>
    %175 = arith.mulf %174, %171 : vector<16x64xf32>
    %176 = arith.mulf %175, %171 : vector<16x64xf32>
    %177 = arith.mulf %176, %171 : vector<16x64xf32>
    %178 = arith.addf %171, %177 : vector<16x64xf32>
    %cst_62 = arith.constant 0.797884583 : f32
    %179 = vector.broadcast %cst_62 : f32 to vector<16x64xf32>
    %180 = arith.mulf %179, %178 : vector<16x64xf32>
    %181 = math.tanh %180 : vector<16x64xf32>
    %cst_63 = arith.constant 1.000000e+00 : f32
    %182 = vector.broadcast %cst_63 : f32 to vector<16x64xf32>
    %183 = arith.addf %182, %181 : vector<16x64xf32>
    %184 = arith.mulf %173, %183 : vector<16x64xf32>
    %185 = arith.truncf %184 : vector<16x64xf32> to vector<16x64xbf16>
    %c0_64 = arith.constant 0 : index
    %c0_65 = arith.constant 0 : index
    %c0_66 = arith.constant 0 : index
    %186 = vector.load %arg12[%c0_64, %c0_65, %c0_66] : memref<2x64x32xbf16, #tpu.memory_space<vmem>>, vector<1x64x32xbf16>
    %187 = vector.shape_cast %186 : vector<1x64x32xbf16> to vector<64x32xbf16>
    %cst_67 = arith.constant dense<0.000000e+00> : vector<16x32xf32>
    %188 = tpu.matmul %185, %187, %cst_67 {dimension_numbers = #tpu.dot_dimension_numbers<[1], [0], [0], [1], [0, 0, 1, 1], [], []>} : vector<16x64xbf16>, vector<64x32xbf16>, vector<16x32xf32> -> vector<16x32xf32>
    %c0_68 = arith.constant 0 : index
    %c0_69 = arith.constant 0 : index
    %c0_70 = arith.constant 0 : index
    %189 = vector.load %arg13[%c0_68, %c0_69, %c0_70] : memref<2x1x32xf32, #tpu.memory_space<vmem>>, vector<1x1x32xf32>
    %190 = vector.shape_cast %189 : vector<1x1x32xf32> to vector<1x32xf32>
    %191 = vector.broadcast %190 : vector<1x32xf32> to vector<16x32xf32>
    %192 = arith.addf %188, %191 : vector<16x32xf32>
    %193 = arith.addf %163, %192 : vector<16x32xf32>
    %c0_71 = arith.constant 0 : index
    %c0_72 = arith.constant 0 : index
    %c0_73 = arith.constant 0 : index
    %194 = vector.load %arg14[%c0_71, %c0_72, %c0_73] : memref<2x1x32xf32, #tpu.memory_space<vmem>>, vector<1x1x32xf32>
    %195 = vector.shape_cast %194 : vector<1x1x32xf32> to vector<1x32xf32>
    %c0_74 = arith.constant 0 : index
    %c0_75 = arith.constant 0 : index
    %c0_76 = arith.constant 0 : index
    %196 = vector.load %arg15[%c0_74, %c0_75, %c0_76] : memref<2x1x32xf32, #tpu.memory_space<vmem>>, vector<1x1x32xf32>
    %197 = vector.shape_cast %196 : vector<1x1x32xf32> to vector<1x32xf32>
    %cst_77 = arith.constant dense<0.000000e+00> : vector<16xf32>
    %198 = vector.multi_reduction <add>, %193, %cst_77 [1] : vector<16x32xf32> to vector<16xf32>
    %199 = vector.shape_cast %198 : vector<16xf32> to vector<16x1xf32>
    %cst_78 = arith.constant 3.200000e+01 : f32
    %200 = vector.broadcast %cst_78 : f32 to vector<16x1xf32>
    %201 = arith.divf %199, %200 : vector<16x1xf32>
    %202 = vector.broadcast %201 : vector<16x1xf32> to vector<16x32xf32>
    %203 = arith.subf %193, %202 : vector<16x32xf32>
    %204 = arith.mulf %203, %203 : vector<16x32xf32>
    %cst_79 = arith.constant dense<0.000000e+00> : vector<16xf32>
    %205 = vector.multi_reduction <add>, %204, %cst_79 [1] : vector<16x32xf32> to vector<16xf32>
    %206 = vector.shape_cast %205 : vector<16xf32> to vector<16x1xf32>
    %cst_80 = arith.constant 3.200000e+01 : f32
    %207 = vector.broadcast %cst_80 : f32 to vector<16x1xf32>
    %208 = arith.divf %206, %207 : vector<16x1xf32>
    %209 = vector.broadcast %201 : vector<16x1xf32> to vector<16x32xf32>
    %210 = arith.subf %193, %209 : vector<16x32xf32>
    %cst_81 = arith.constant 9.99999996E-13 : f32
    %211 = vector.broadcast %cst_81 : f32 to vector<16x1xf32>
    %212 = arith.addf %208, %211 : vector<16x1xf32>
    %213 = math.rsqrt %212 : vector<16x1xf32>
    %214 = vector.broadcast %213 : vector<16x1xf32> to vector<16x32xf32>
    %215 = arith.mulf %210, %214 : vector<16x32xf32>
    %216 = vector.broadcast %195 : vector<1x32xf32> to vector<16x32xf32>
    %217 = arith.mulf %215, %216 : vector<16x32xf32>
    %218 = vector.broadcast %197 : vector<1x32xf32> to vector<16x32xf32>
    %219 = arith.addf %217, %218 : vector<16x32xf32>
    %220 = arith.truncf %219 : vector<16x32xf32> to vector<16x32xbf16>
    %c1 = arith.constant 1 : index
    %c0_82 = arith.constant 0 : index
    %c0_83 = arith.constant 0 : index
    %221 = vector.load %arg4[%c1, %c0_82, %c0_83] : memref<2x32x96xbf16, #tpu.memory_space<vmem>>, vector<1x32x96xbf16>
    %222 = vector.shape_cast %221 : vector<1x32x96xbf16> to vector<32x96xbf16>
    %cst_84 = arith.constant dense<0.000000e+00> : vector<16x96xf32>
    %223 = tpu.matmul %220, %222, %cst_84 {dimension_numbers = #tpu.dot_dimension_numbers<[1], [0], [0], [1], [0, 0, 1, 1], [], []>} : vector<16x32xbf16>, vector<32x96xbf16>, vector<16x96xf32> -> vector<16x96xf32>
    %c1_85 = arith.constant 1 : index
    %c0_86 = arith.constant 0 : index
    %c0_87 = arith.constant 0 : index
    %224 = vector.load %arg5[%c1_85, %c0_86, %c0_87] : memref<2x1x96xf32, #tpu.memory_space<vmem>>, vector<1x1x96xf32>
    %225 = vector.shape_cast %224 : vector<1x1x96xf32> to vector<1x96xf32>
    %226 = vector.broadcast %225 : vector<1x96xf32> to vector<16x96xf32>
    %227 = arith.addf %223, %226 : vector<16x96xf32>
    %228 = vector.extract_strided_slice %227 {offsets = [0, 0], sizes = [16, 32], strides = [1, 1]} : vector<16x96xf32> to vector<16x32xf32>
    %229 = arith.truncf %228 : vector<16x32xf32> to vector<16x32xbf16>
    %230 = vector.extract_strided_slice %227 {offsets = [0, 32], sizes = [16, 32], strides = [1, 1]} : vector<16x96xf32> to vector<16x32xf32>
    %231 = arith.truncf %230 : vector<16x32xf32> to vector<16x32xbf16>
    %232 = vector.extract_strided_slice %227 {offsets = [0, 64], sizes = [16, 32], strides = [1, 1]} : vector<16x96xf32> to vector<16x32xf32>
    %233 = arith.truncf %232 : vector<16x32xf32> to vector<16x32xbf16>
    %234 = vector.extract_strided_slice %229 {offsets = [0, 0], sizes = [16, 8], strides = [1, 1]} : vector<16x32xbf16> to vector<16x8xbf16>
    %235 = vector.shape_cast %234 : vector<16x8xbf16> to vector<2x8x8xbf16>
    %236 = vector.extract_strided_slice %231 {offsets = [0, 0], sizes = [16, 8], strides = [1, 1]} : vector<16x32xbf16> to vector<16x8xbf16>
    %237 = vector.shape_cast %236 : vector<16x8xbf16> to vector<2x8x8xbf16>
    %238 = vector.extract_strided_slice %233 {offsets = [0, 0], sizes = [16, 8], strides = [1, 1]} : vector<16x32xbf16> to vector<16x8xbf16>
    %239 = vector.shape_cast %238 : vector<16x8xbf16> to vector<2x8x8xbf16>
    "tpu.trace_start"() <{level = 10 : i32, message = "bqd,bkd->bqk"}> : () -> ()
    %cst_88 = arith.constant dense<0.000000e+00> : vector<2x8x8xf32>
    %240 = tpu.matmul %235, %237, %cst_88 {dimension_numbers = #tpu.dot_dimension_numbers<[2], [2], [1], [1], [0, 0, 0, 1, 1, 1], [0], [0]>} : vector<2x8x8xbf16>, vector<2x8x8xbf16>, vector<2x8x8xf32> -> vector<2x8x8xf32>
    "tpu.trace_stop"() : () -> ()
    %241 = vector.broadcast %25 : vector<2x1x8xf32> to vector<2x8x8xf32>
    %242 = arith.addf %240, %241 : vector<2x8x8xf32>
    %cst_89 = arith.constant dense<0xFF800000> : vector<2x8xf32>
    %243 = vector.multi_reduction <maximumf>, %242, %cst_89 [2] : vector<2x8x8xf32> to vector<2x8xf32>
    %244 = vector.shape_cast %243 : vector<2x8xf32> to vector<2x8x1xf32>
    %245 = vector.broadcast %244 : vector<2x8x1xf32> to vector<2x8x8xf32>
    %246 = arith.subf %242, %245 : vector<2x8x8xf32>
    %247 = math.exp %246 : vector<2x8x8xf32>
    %cst_90 = arith.constant dense<0.000000e+00> : vector<2x8xf32>
    %248 = vector.multi_reduction <add>, %247, %cst_90 [2] : vector<2x8x8xf32> to vector<2x8xf32>
    %249 = vector.shape_cast %248 : vector<2x8xf32> to vector<2x8x1xf32>
    %250 = tpu.reciprocal %249 {approx = true} : vector<2x8x1xf32> -> vector<2x8x1xf32>
    %251 = vector.broadcast %250 : vector<2x8x1xf32> to vector<2x8x8xf32>
    %252 = arith.mulf %247, %251 : vector<2x8x8xf32>
    %253 = arith.truncf %252 : vector<2x8x8xf32> to vector<2x8x8xbf16>
    "tpu.trace_start"() <{level = 10 : i32, message = "bqk,bkd->bqd"}> : () -> ()
    %cst_91 = arith.constant dense<0.000000e+00> : vector<2x8x8xf32>
    %254 = tpu.matmul %253, %239, %cst_91 {dimension_numbers = #tpu.dot_dimension_numbers<[2], [1], [1], [2], [0, 0, 0, 1, 1, 2], [0], [0]>} : vector<2x8x8xbf16>, vector<2x8x8xbf16>, vector<2x8x8xf32> -> vector<2x8x8xf32>
    "tpu.trace_stop"() : () -> ()
    %255 = vector.shape_cast %254 : vector<2x8x8xf32> to vector<16x8xf32>
    %256 = vector.extract_strided_slice %229 {offsets = [0, 8], sizes = [16, 8], strides = [1, 1]} : vector<16x32xbf16> to vector<16x8xbf16>
    %257 = vector.shape_cast %256 : vector<16x8xbf16> to vector<2x8x8xbf16>
    %258 = vector.extract_strided_slice %231 {offsets = [0, 8], sizes = [16, 8], strides = [1, 1]} : vector<16x32xbf16> to vector<16x8xbf16>
    %259 = vector.shape_cast %258 : vector<16x8xbf16> to vector<2x8x8xbf16>
    %260 = vector.extract_strided_slice %233 {offsets = [0, 8], sizes = [16, 8], strides = [1, 1]} : vector<16x32xbf16> to vector<16x8xbf16>
    %261 = vector.shape_cast %260 : vector<16x8xbf16> to vector<2x8x8xbf16>
    "tpu.trace_start"() <{level = 10 : i32, message = "bqd,bkd->bqk"}> : () -> ()
    %cst_92 = arith.constant dense<0.000000e+00> : vector<2x8x8xf32>
    %262 = tpu.matmul %257, %259, %cst_92 {dimension_numbers = #tpu.dot_dimension_numbers<[2], [2], [1], [1], [0, 0, 0, 1, 1, 1], [0], [0]>} : vector<2x8x8xbf16>, vector<2x8x8xbf16>, vector<2x8x8xf32> -> vector<2x8x8xf32>
    "tpu.trace_stop"() : () -> ()
    %263 = vector.broadcast %25 : vector<2x1x8xf32> to vector<2x8x8xf32>
    %264 = arith.addf %262, %263 : vector<2x8x8xf32>
    %cst_93 = arith.constant dense<0xFF800000> : vector<2x8xf32>
    %265 = vector.multi_reduction <maximumf>, %264, %cst_93 [2] : vector<2x8x8xf32> to vector<2x8xf32>
    %266 = vector.shape_cast %265 : vector<2x8xf32> to vector<2x8x1xf32>
    %267 = vector.broadcast %266 : vector<2x8x1xf32> to vector<2x8x8xf32>
    %268 = arith.subf %264, %267 : vector<2x8x8xf32>
    %269 = math.exp %268 : vector<2x8x8xf32>
    %cst_94 = arith.constant dense<0.000000e+00> : vector<2x8xf32>
    %270 = vector.multi_reduction <add>, %269, %cst_94 [2] : vector<2x8x8xf32> to vector<2x8xf32>
    %271 = vector.shape_cast %270 : vector<2x8xf32> to vector<2x8x1xf32>
    %272 = tpu.reciprocal %271 {approx = true} : vector<2x8x1xf32> -> vector<2x8x1xf32>
    %273 = vector.broadcast %272 : vector<2x8x1xf32> to vector<2x8x8xf32>
    %274 = arith.mulf %269, %273 : vector<2x8x8xf32>
    %275 = arith.truncf %274 : vector<2x8x8xf32> to vector<2x8x8xbf16>
    "tpu.trace_start"() <{level = 10 : i32, message = "bqk,bkd->bqd"}> : () -> ()
    %cst_95 = arith.constant dense<0.000000e+00> : vector<2x8x8xf32>
    %276 = tpu.matmul %275, %261, %cst_95 {dimension_numbers = #tpu.dot_dimension_numbers<[2], [1], [1], [2], [0, 0, 0, 1, 1, 2], [0], [0]>} : vector<2x8x8xbf16>, vector<2x8x8xbf16>, vector<2x8x8xf32> -> vector<2x8x8xf32>
    "tpu.trace_stop"() : () -> ()
    %277 = vector.shape_cast %276 : vector<2x8x8xf32> to vector<16x8xf32>
    %278 = vector.extract_strided_slice %229 {offsets = [0, 16], sizes = [16, 8], strides = [1, 1]} : vector<16x32xbf16> to vector<16x8xbf16>
    %279 = vector.shape_cast %278 : vector<16x8xbf16> to vector<2x8x8xbf16>
    %280 = vector.extract_strided_slice %231 {offsets = [0, 16], sizes = [16, 8], strides = [1, 1]} : vector<16x32xbf16> to vector<16x8xbf16>
    %281 = vector.shape_cast %280 : vector<16x8xbf16> to vector<2x8x8xbf16>
    %282 = vector.extract_strided_slice %233 {offsets = [0, 16], sizes = [16, 8], strides = [1, 1]} : vector<16x32xbf16> to vector<16x8xbf16>
    %283 = vector.shape_cast %282 : vector<16x8xbf16> to vector<2x8x8xbf16>
    "tpu.trace_start"() <{level = 10 : i32, message = "bqd,bkd->bqk"}> : () -> ()
    %cst_96 = arith.constant dense<0.000000e+00> : vector<2x8x8xf32>
    %284 = tpu.matmul %279, %281, %cst_96 {dimension_numbers = #tpu.dot_dimension_numbers<[2], [2], [1], [1], [0, 0, 0, 1, 1, 1], [0], [0]>} : vector<2x8x8xbf16>, vector<2x8x8xbf16>, vector<2x8x8xf32> -> vector<2x8x8xf32>
    "tpu.trace_stop"() : () -> ()
    %285 = vector.broadcast %25 : vector<2x1x8xf32> to vector<2x8x8xf32>
    %286 = arith.addf %284, %285 : vector<2x8x8xf32>
    %cst_97 = arith.constant dense<0xFF800000> : vector<2x8xf32>
    %287 = vector.multi_reduction <maximumf>, %286, %cst_97 [2] : vector<2x8x8xf32> to vector<2x8xf32>
    %288 = vector.shape_cast %287 : vector<2x8xf32> to vector<2x8x1xf32>
    %289 = vector.broadcast %288 : vector<2x8x1xf32> to vector<2x8x8xf32>
    %290 = arith.subf %286, %289 : vector<2x8x8xf32>
    %291 = math.exp %290 : vector<2x8x8xf32>
    %cst_98 = arith.constant dense<0.000000e+00> : vector<2x8xf32>
    %292 = vector.multi_reduction <add>, %291, %cst_98 [2] : vector<2x8x8xf32> to vector<2x8xf32>
    %293 = vector.shape_cast %292 : vector<2x8xf32> to vector<2x8x1xf32>
    %294 = tpu.reciprocal %293 {approx = true} : vector<2x8x1xf32> -> vector<2x8x1xf32>
    %295 = vector.broadcast %294 : vector<2x8x1xf32> to vector<2x8x8xf32>
    %296 = arith.mulf %291, %295 : vector<2x8x8xf32>
    %297 = arith.truncf %296 : vector<2x8x8xf32> to vector<2x8x8xbf16>
    "tpu.trace_start"() <{level = 10 : i32, message = "bqk,bkd->bqd"}> : () -> ()
    %cst_99 = arith.constant dense<0.000000e+00> : vector<2x8x8xf32>
    %298 = tpu.matmul %297, %283, %cst_99 {dimension_numbers = #tpu.dot_dimension_numbers<[2], [1], [1], [2], [0, 0, 0, 1, 1, 2], [0], [0]>} : vector<2x8x8xbf16>, vector<2x8x8xbf16>, vector<2x8x8xf32> -> vector<2x8x8xf32>
    "tpu.trace_stop"() : () -> ()
    %299 = vector.shape_cast %298 : vector<2x8x8xf32> to vector<16x8xf32>
    %300 = vector.extract_strided_slice %229 {offsets = [0, 24], sizes = [16, 8], strides = [1, 1]} : vector<16x32xbf16> to vector<16x8xbf16>
    %301 = vector.shape_cast %300 : vector<16x8xbf16> to vector<2x8x8xbf16>
    %302 = vector.extract_strided_slice %231 {offsets = [0, 24], sizes = [16, 8], strides = [1, 1]} : vector<16x32xbf16> to vector<16x8xbf16>
    %303 = vector.shape_cast %302 : vector<16x8xbf16> to vector<2x8x8xbf16>
    %304 = vector.extract_strided_slice %233 {offsets = [0, 24], sizes = [16, 8], strides = [1, 1]} : vector<16x32xbf16> to vector<16x8xbf16>
    %305 = vector.shape_cast %304 : vector<16x8xbf16> to vector<2x8x8xbf16>
    "tpu.trace_start"() <{level = 10 : i32, message = "bqd,bkd->bqk"}> : () -> ()
    %cst_100 = arith.constant dense<0.000000e+00> : vector<2x8x8xf32>
    %306 = tpu.matmul %301, %303, %cst_100 {dimension_numbers = #tpu.dot_dimension_numbers<[2], [2], [1], [1], [0, 0, 0, 1, 1, 1], [0], [0]>} : vector<2x8x8xbf16>, vector<2x8x8xbf16>, vector<2x8x8xf32> -> vector<2x8x8xf32>
    "tpu.trace_stop"() : () -> ()
    %307 = vector.broadcast %25 : vector<2x1x8xf32> to vector<2x8x8xf32>
    %308 = arith.addf %306, %307 : vector<2x8x8xf32>
    %cst_101 = arith.constant dense<0xFF800000> : vector<2x8xf32>
    %309 = vector.multi_reduction <maximumf>, %308, %cst_101 [2] : vector<2x8x8xf32> to vector<2x8xf32>
    %310 = vector.shape_cast %309 : vector<2x8xf32> to vector<2x8x1xf32>
    %311 = vector.broadcast %310 : vector<2x8x1xf32> to vector<2x8x8xf32>
    %312 = arith.subf %308, %311 : vector<2x8x8xf32>
    %313 = math.exp %312 : vector<2x8x8xf32>
    %cst_102 = arith.constant dense<0.000000e+00> : vector<2x8xf32>
    %314 = vector.multi_reduction <add>, %313, %cst_102 [2] : vector<2x8x8xf32> to vector<2x8xf32>
    %315 = vector.shape_cast %314 : vector<2x8xf32> to vector<2x8x1xf32>
    %316 = tpu.reciprocal %315 {approx = true} : vector<2x8x1xf32> -> vector<2x8x1xf32>
    %317 = vector.broadcast %316 : vector<2x8x1xf32> to vector<2x8x8xf32>
    %318 = arith.mulf %313, %317 : vector<2x8x8xf32>
    %319 = arith.truncf %318 : vector<2x8x8xf32> to vector<2x8x8xbf16>
    "tpu.trace_start"() <{level = 10 : i32, message = "bqk,bkd->bqd"}> : () -> ()
    %cst_103 = arith.constant dense<0.000000e+00> : vector<2x8x8xf32>
    %320 = tpu.matmul %319, %305, %cst_103 {dimension_numbers = #tpu.dot_dimension_numbers<[2], [1], [1], [2], [0, 0, 0, 1, 1, 2], [0], [0]>} : vector<2x8x8xbf16>, vector<2x8x8xbf16>, vector<2x8x8xf32> -> vector<2x8x8xf32>
    "tpu.trace_stop"() : () -> ()
    %321 = vector.shape_cast %320 : vector<2x8x8xf32> to vector<16x8xf32>
    %322 = tpu.concatenate %255, %277, %299, %321 in 1 : vector<16x8xf32>, vector<16x8xf32>, vector<16x8xf32>, vector<16x8xf32> -> vector<16x32xf32>
    %323 = arith.truncf %322 : vector<16x32xf32> to vector<16x32xbf16>
    %c1_104 = arith.constant 1 : index
    %c0_105 = arith.constant 0 : index
    %c0_106 = arith.constant 0 : index
    %324 = vector.load %arg6[%c1_104, %c0_105, %c0_106] : memref<2x32x32xbf16, #tpu.memory_space<vmem>>, vector<1x32x32xbf16>
    %325 = vector.shape_cast %324 : vector<1x32x32xbf16> to vector<32x32xbf16>
    %cst_107 = arith.constant dense<0.000000e+00> : vector<16x32xf32>
    %326 = tpu.matmul %323, %325, %cst_107 {dimension_numbers = #tpu.dot_dimension_numbers<[1], [0], [0], [1], [0, 0, 1, 1], [], []>} : vector<16x32xbf16>, vector<32x32xbf16>, vector<16x32xf32> -> vector<16x32xf32>
    %c1_108 = arith.constant 1 : index
    %c0_109 = arith.constant 0 : index
    %c0_110 = arith.constant 0 : index
    %327 = vector.load %arg7[%c1_108, %c0_109, %c0_110] : memref<2x1x32xf32, #tpu.memory_space<vmem>>, vector<1x1x32xf32>
    %328 = vector.shape_cast %327 : vector<1x1x32xf32> to vector<1x32xf32>
    %329 = vector.broadcast %328 : vector<1x32xf32> to vector<16x32xf32>
    %330 = arith.addf %326, %329 : vector<16x32xf32>
    %331 = arith.addf %219, %330 : vector<16x32xf32>
    %c1_111 = arith.constant 1 : index
    %c0_112 = arith.constant 0 : index
    %c0_113 = arith.constant 0 : index
    %332 = vector.load %arg8[%c1_111, %c0_112, %c0_113] : memref<2x1x32xf32, #tpu.memory_space<vmem>>, vector<1x1x32xf32>
    %333 = vector.shape_cast %332 : vector<1x1x32xf32> to vector<1x32xf32>
    %c1_114 = arith.constant 1 : index
    %c0_115 = arith.constant 0 : index
    %c0_116 = arith.constant 0 : index
    %334 = vector.load %arg9[%c1_114, %c0_115, %c0_116] : memref<2x1x32xf32, #tpu.memory_space<vmem>>, vector<1x1x32xf32>
    %335 = vector.shape_cast %334 : vector<1x1x32xf32> to vector<1x32xf32>
    %cst_117 = arith.constant dense<0.000000e+00> : vector<16xf32>
    %336 = vector.multi_reduction <add>, %331, %cst_117 [1] : vector<16x32xf32> to vector<16xf32>
    %337 = vector.shape_cast %336 : vector<16xf32> to vector<16x1xf32>
    %cst_118 = arith.constant 3.200000e+01 : f32
    %338 = vector.broadcast %cst_118 : f32 to vector<16x1xf32>
    %339 = arith.divf %337, %338 : vector<16x1xf32>
    %340 = vector.broadcast %339 : vector<16x1xf32> to vector<16x32xf32>
    %341 = arith.subf %331, %340 : vector<16x32xf32>
    %342 = arith.mulf %341, %341 : vector<16x32xf32>
    %cst_119 = arith.constant dense<0.000000e+00> : vector<16xf32>
    %343 = vector.multi_reduction <add>, %342, %cst_119 [1] : vector<16x32xf32> to vector<16xf32>
    %344 = vector.shape_cast %343 : vector<16xf32> to vector<16x1xf32>
    %cst_120 = arith.constant 3.200000e+01 : f32
    %345 = vector.broadcast %cst_120 : f32 to vector<16x1xf32>
    %346 = arith.divf %344, %345 : vector<16x1xf32>
    %347 = vector.broadcast %339 : vector<16x1xf32> to vector<16x32xf32>
    %348 = arith.subf %331, %347 : vector<16x32xf32>
    %cst_121 = arith.constant 9.99999996E-13 : f32
    %349 = vector.broadcast %cst_121 : f32 to vector<16x1xf32>
    %350 = arith.addf %346, %349 : vector<16x1xf32>
    %351 = math.rsqrt %350 : vector<16x1xf32>
    %352 = vector.broadcast %351 : vector<16x1xf32> to vector<16x32xf32>
    %353 = arith.mulf %348, %352 : vector<16x32xf32>
    %354 = vector.broadcast %333 : vector<1x32xf32> to vector<16x32xf32>
    %355 = arith.mulf %353, %354 : vector<16x32xf32>
    %356 = vector.broadcast %335 : vector<1x32xf32> to vector<16x32xf32>
    %357 = arith.addf %355, %356 : vector<16x32xf32>
    %358 = arith.truncf %357 : vector<16x32xf32> to vector<16x32xbf16>
    %c1_122 = arith.constant 1 : index
    %c0_123 = arith.constant 0 : index
    %c0_124 = arith.constant 0 : index
    %359 = vector.load %arg10[%c1_122, %c0_123, %c0_124] : memref<2x32x64xbf16, #tpu.memory_space<vmem>>, vector<1x32x64xbf16>
    %360 = vector.shape_cast %359 : vector<1x32x64xbf16> to vector<32x64xbf16>
    %cst_125 = arith.constant dense<0.000000e+00> : vector<16x64xf32>
    %361 = tpu.matmul %358, %360, %cst_125 {dimension_numbers = #tpu.dot_dimension_numbers<[1], [0], [0], [1], [0, 0, 1, 1], [], []>} : vector<16x32xbf16>, vector<32x64xbf16>, vector<16x64xf32> -> vector<16x64xf32>
    %c1_126 = arith.constant 1 : index
    %c0_127 = arith.constant 0 : index
    %c0_128 = arith.constant 0 : index
    %362 = vector.load %arg11[%c1_126, %c0_127, %c0_128] : memref<2x1x64xf32, #tpu.memory_space<vmem>>, vector<1x1x64xf32>
    %363 = vector.shape_cast %362 : vector<1x1x64xf32> to vector<1x64xf32>
    %364 = vector.broadcast %363 : vector<1x64xf32> to vector<16x64xf32>
    %365 = arith.addf %361, %364 : vector<16x64xf32>
    %cst_129 = arith.constant 5.000000e-01 : f32
    %366 = vector.broadcast %cst_129 : f32 to vector<16x64xf32>
    %367 = arith.mulf %366, %365 : vector<16x64xf32>
    %cst_130 = arith.constant 4.471500e-02 : f32
    %368 = vector.broadcast %cst_130 : f32 to vector<16x64xf32>
    %369 = arith.mulf %368, %365 : vector<16x64xf32>
    %370 = arith.mulf %369, %365 : vector<16x64xf32>
    %371 = arith.mulf %370, %365 : vector<16x64xf32>
    %372 = arith.addf %365, %371 : vector<16x64xf32>
    %cst_131 = arith.constant 0.797884583 : f32
    %373 = vector.broadcast %cst_131 : f32 to vector<16x64xf32>
    %374 = arith.mulf %373, %372 : vector<16x64xf32>
    %375 = math.tanh %374 : vector<16x64xf32>
    %cst_132 = arith.constant 1.000000e+00 : f32
    %376 = vector.broadcast %cst_132 : f32 to vector<16x64xf32>
    %377 = arith.addf %376, %375 : vector<16x64xf32>
    %378 = arith.mulf %367, %377 : vector<16x64xf32>
    %379 = arith.truncf %378 : vector<16x64xf32> to vector<16x64xbf16>
    %c1_133 = arith.constant 1 : index
    %c0_134 = arith.constant 0 : index
    %c0_135 = arith.constant 0 : index
    %380 = vector.load %arg12[%c1_133, %c0_134, %c0_135] : memref<2x64x32xbf16, #tpu.memory_space<vmem>>, vector<1x64x32xbf16>
    %381 = vector.shape_cast %380 : vector<1x64x32xbf16> to vector<64x32xbf16>
    %cst_136 = arith.constant dense<0.000000e+00> : vector<16x32xf32>
    %382 = tpu.matmul %379, %381, %cst_136 {dimension_numbers = #tpu.dot_dimension_numbers<[1], [0], [0], [1], [0, 0, 1, 1], [], []>} : vector<16x64xbf16>, vector<64x32xbf16>, vector<16x32xf32> -> vector<16x32xf32>
    %c1_137 = arith.constant 1 : index
    %c0_138 = arith.constant 0 : index
    %c0_139 = arith.constant 0 : index
    %383 = vector.load %arg13[%c1_137, %c0_138, %c0_139] : memref<2x1x32xf32, #tpu.memory_space<vmem>>, vector<1x1x32xf32>
    %384 = vector.shape_cast %383 : vector<1x1x32xf32> to vector<1x32xf32>
    %385 = vector.broadcast %384 : vector<1x32xf32> to vector<16x32xf32>
    %386 = arith.addf %382, %385 : vector<16x32xf32>
    %387 = arith.addf %357, %386 : vector<16x32xf32>
    %c1_140 = arith.constant 1 : index
    %c0_141 = arith.constant 0 : index
    %c0_142 = arith.constant 0 : index
    %388 = vector.load %arg14[%c1_140, %c0_141, %c0_142] : memref<2x1x32xf32, #tpu.memory_space<vmem>>, vector<1x1x32xf32>
    %389 = vector.shape_cast %388 : vector<1x1x32xf32> to vector<1x32xf32>
    %c1_143 = arith.constant 1 : index
    %c0_144 = arith.constant 0 : index
    %c0_145 = arith.constant 0 : index
    %390 = vector.load %arg15[%c1_143, %c0_144, %c0_145] : memref<2x1x32xf32, #tpu.memory_space<vmem>>, vector<1x1x32xf32>
    %391 = vector.shape_cast %390 : vector<1x1x32xf32> to vector<1x32xf32>
    %cst_146 = arith.constant dense<0.000000e+00> : vector<16xf32>
    %392 = vector.multi_reduction <add>, %387, %cst_146 [1] : vector<16x32xf32> to vector<16xf32>
    %393 = vector.shape_cast %392 : vector<16xf32> to vector<16x1xf32>
    %cst_147 = arith.constant 3.200000e+01 : f32
    %394 = vector.broadcast %cst_147 : f32 to vector<16x1xf32>
    %395 = arith.divf %393, %394 : vector<16x1xf32>
    %396 = vector.broadcast %395 : vector<16x1xf32> to vector<16x32xf32>
    %397 = arith.subf %387, %396 : vector<16x32xf32>
    %398 = arith.mulf %397, %397 : vector<16x32xf32>
    %cst_148 = arith.constant dense<0.000000e+00> : vector<16xf32>
    %399 = vector.multi_reduction <add>, %398, %cst_148 [1] : vector<16x32xf32> to vector<16xf32>
    %400 = vector.shape_cast %399 : vector<16xf32> to vector<16x1xf32>
    %cst_149 = arith.constant 3.200000e+01 : f32
    %401 = vector.broadcast %cst_149 : f32 to vector<16x1xf32>
    %402 = arith.divf %400, %401 : vector<16x1xf32>
    %403 = vector.broadcast %395 : vector<16x1xf32> to vector<16x32xf32>
    %404 = arith.subf %387, %403 : vector<16x32xf32>
    %cst_150 = arith.constant 9.99999996E-13 : f32
    %405 = vector.broadcast %cst_150 : f32 to vector<16x1xf32>
    %406 = arith.addf %402, %405 : vector<16x1xf32>
    %407 = math.rsqrt %406 : vector<16x1xf32>
    %408 = vector.broadcast %407 : vector<16x1xf32> to vector<16x32xf32>
    %409 = arith.mulf %404, %408 : vector<16x32xf32>
    %410 = vector.broadcast %389 : vector<1x32xf32> to vector<16x32xf32>
    %411 = arith.mulf %409, %410 : vector<16x32xf32>
    %412 = vector.broadcast %391 : vector<1x32xf32> to vector<16x32xf32>
    %413 = arith.addf %411, %412 : vector<16x32xf32>
    %414 = vector.shape_cast %413 : vector<16x32xf32> to vector<2x8x32xf32>
    %415 = vector.extract_strided_slice %414 {offsets = [0, 0, 0], sizes = [2, 1, 32], strides = [1, 1, 1]} : vector<2x8x32xf32> to vector<2x1x32xf32>
    %416 = vector.shape_cast %415 : vector<2x1x32xf32> to vector<2x32xf32>
    %c0_151 = arith.constant 0 : index
    %c0_152 = arith.constant 0 : index
    %417 = vector.load %arg16[%c0_151, %c0_152] : memref<32x128xf32, #tpu.memory_space<vmem>>, vector<32x128xf32>
    %cst_153 = arith.constant dense<0.000000e+00> : vector<2x128xf32>
    %418 = tpu.matmul %416, %417, %cst_153 {dimension_numbers = #tpu.dot_dimension_numbers<[1], [0], [0], [1], [0, 0, 1, 1], [], []>} : vector<2x32xf32>, vector<32x128xf32>, vector<2x128xf32> -> vector<2x128xf32>
    %c0_154 = arith.constant 0 : index
    %c0_155 = arith.constant 0 : index
    %419 = vector.load %arg17[%c0_154, %c0_155] : memref<1x128xf32, #tpu.memory_space<vmem>>, vector<1x128xf32>
    %420 = vector.broadcast %419 : vector<1x128xf32> to vector<2x128xf32>
    %421 = arith.addf %418, %420 : vector<2x128xf32>
    %c0_156 = arith.constant 0 : index
    %c0_157 = arith.constant 0 : index
    %422 = vector.load %arg18[%c0_156, %c0_157] : memref<2x128xf32, #tpu.memory_space<vmem>>, vector<2x128xf32>
    tpu.vector_store %arg18[%c0_156, %c0_157], %421 {strides = array<i32>} : memref<2x128xf32, #tpu.memory_space<vmem>>, vector<2x128xf32>,
    return
  }
}

</mosaic_0001>

<llo_original>
// kernel: bert_dssm_forward.1
$region0: #{bert_dssm_forward.1}
  #allocation0 [shape = 'u32[]', space=smem, size = 0x4, offset = 0x4, fixed_abs, tag = 'smem constant byte address 0x4 - core index']
  #allocation1 [shape = 'u32[144,128]{1,0:T(1,128)}', space=vmem, size = 0x12000, scoped, tag = 'internal scratch']
  %s0 = inlined_call_operand.vmem [shape: f32[16,32], index: 0, kind: input, shape index: {}]
  %s1 = inlined_call_operand.vmem [shape: f32[2,1,8], index: 1, kind: input, shape index: {}]
  %s2 = inlined_call_operand.vmem [shape: f32[1,32], index: 2, kind: input, shape index: {}]
  %s3 = inlined_call_operand.vmem [shape: f32[1,32], index: 3, kind: input, shape index: {}]
  %s4 = inlined_call_operand.vmem [shape: bf16[2,32,96], index: 4, kind: input, shape index: {}]
  %s5 = inlined_call_operand.vmem [shape: f32[2,1,96], index: 5, kind: input, shape index: {}]
  %s6 = inlined_call_operand.vmem [shape: bf16[2,32,32], index: 6, kind: input, shape index: {}]
  %s7 = inlined_call_operand.vmem [shape: f32[2,1,32], index: 7, kind: input, shape index: {}]
  %s8 = inlined_call_operand.vmem [shape: f32[2,1,32], index: 8, kind: input, shape index: {}]
  %s9 = inlined_call_operand.vmem [shape: f32[2,1,32], index: 9, kind: input, shape index: {}]
  %s10 = inlined_call_operand.vmem [shape: bf16[2,32,64], index: 10, kind: input, shape index: {}]
  %s11 = inlined_call_operand.vmem [shape: f32[2,1,64], index: 11, kind: input, shape index: {}]
  %s12 = inlined_call_operand.vmem [shape: bf16[2,64,32], index: 12, kind: input, shape index: {}]
  %s13 = inlined_call_operand.vmem [shape: f32[2,1,32], index: 13, kind: input, shape index: {}]
  %s14 = inlined_call_operand.vmem [shape: f32[2,1,32], index: 14, kind: input, shape index: {}]
  %s15 = inlined_call_operand.vmem [shape: f32[2,1,32], index: 15, kind: input, shape index: {}]
  %s16 = inlined_call_operand.vmem [shape: f32[32,128], index: 16, kind: input, shape index: {}]
  %s17 = inlined_call_operand.vmem [shape: f32[1,128], index: 17, kind: input, shape index: {}]
  %s18 = inlined_call_operand.vmem [shape: f32[2,128], index: 18, kind: output, shape index: {}]
  %s19 = sld [smem:[#allocation0]]
  $region82: #{bert_dssm_forward.1} parent=0
    _
  %s21 = ssub.s32 1, %s19
  %s22 = scalar_select 0, %s21, %s19
  // Predicated region
  $region2: #{bert_dssm_forward.1} parent=0 // pred_check
    _
  $region3: #{bert_dssm_forward.1} parent=0 // pred_check_branch
    %24 = sbr.rel (0) target = $region5
  $region4: #{bert_dssm_forward.1} parent=0 // pred_region
    _
  $region5: #{bert_dssm_forward.1} parent=0 // pred_fallthru
    _
  // Predicated region
  $region6: #{bert_dssm_forward.1} parent=0 // pred_check
    _
  $region7: #{bert_dssm_forward.1} parent=0 // pred_check_branch
    %26 = sbr.rel (0) target = $region9
  $region8: #{bert_dssm_forward.1} parent=0 // pred_region
    _
  $region9: #{bert_dssm_forward.1} parent=0 // pred_fallthru
    _
  // Predicated region
  $region10: #{bert_dssm_forward.1} parent=0 // pred_check
    _
  $region11: #{bert_dssm_forward.1} parent=0 // pred_check_branch
    %28 = sbr.rel (0) target = $region13
  $region12: #{bert_dssm_forward.1} parent=0 // pred_region
    _
  $region13: #{bert_dssm_forward.1} parent=0 // pred_fallthru
    _
  // Predicated region
  $region14: #{bert_dssm_forward.1} parent=0 // pred_check
    _
  $region15: #{bert_dssm_forward.1} parent=0 // pred_check_branch
    %30 = sbr.rel (0) target = $region17
  $region16: #{bert_dssm_forward.1} parent=0 // pred_region
    _
  $region17: #{bert_dssm_forward.1} parent=0 // pred_fallthru
    _
  // Predicated region
  $region18: #{bert_dssm_forward.1} parent=0 // pred_check
    _
  $region19: #{bert_dssm_forward.1} parent=0 // pred_check_branch
    %32 = sbr.rel (0) target = $region21
  $region20: #{bert_dssm_forward.1} parent=0 // pred_region
    _
  $region21: #{bert_dssm_forward.1} parent=0 // pred_fallthru
    _
  // Predicated region
  $region22: #{bert_dssm_forward.1} parent=0 // pred_check
    _
  $region23: #{bert_dssm_forward.1} parent=0 // pred_check_branch
    %34 = sbr.rel (0) target = $region25
  $region24: #{bert_dssm_forward.1} parent=0 // pred_region
    _
  $region25: #{bert_dssm_forward.1} parent=0 // pred_fallthru
    _
  // Predicated region
  $region26: #{bert_dssm_forward.1} parent=0 // pred_check
    _
  $region27: #{bert_dssm_forward.1} parent=0 // pred_check_branch
    %36 = sbr.rel (0) target = $region29
  $region28: #{bert_dssm_forward.1} parent=0 // pred_region
    _
  $region29: #{bert_dssm_forward.1} parent=0 // pred_fallthru
    _
  // Predicated region
  $region30: #{bert_dssm_forward.1} parent=0 // pred_check
    _
  $region31: #{bert_dssm_forward.1} parent=0 // pred_check_branch
    %38 = sbr.rel (0) target = $region33
  $region32: #{bert_dssm_forward.1} parent=0 // pred_region
    _
  $region33: #{bert_dssm_forward.1} parent=0 // pred_fallthru
    _
  // Predicated region
  $region34: #{bert_dssm_forward.1} parent=0 // pred_check
    _
  $region35: #{bert_dssm_forward.1} parent=0 // pred_check_branch
    %40 = sbr.rel (0) target = $region37
  $region36: #{bert_dssm_forward.1} parent=0 // pred_region
    _
  $region37: #{bert_dssm_forward.1} parent=0 // pred_fallthru
    _
  // Predicated region
  $region38: #{bert_dssm_forward.1} parent=0 // pred_check
    _
  $region39: #{bert_dssm_forward.1} parent=0 // pred_check_branch
    %42 = sbr.rel (0) target = $region41
  $region40: #{bert_dssm_forward.1} parent=0 // pred_region
    _
  $region41: #{bert_dssm_forward.1} parent=0 // pred_fallthru
    _
  // Predicated region
  $region42: #{bert_dssm_forward.1} parent=0 // pred_check
    _
  $region43: #{bert_dssm_forward.1} parent=0 // pred_check_branch
    %44 = sbr.rel (0) target = $region45
  $region44: #{bert_dssm_forward.1} parent=0 // pred_region
    _
  $region45: #{bert_dssm_forward.1} parent=0 // pred_fallthru
    _
  // Predicated region
  $region46: #{bert_dssm_forward.1} parent=0 // pred_check
    _
  $region47: #{bert_dssm_forward.1} parent=0 // pred_check_branch
    %46 = sbr.rel (0) target = $region49
  $region48: #{bert_dssm_forward.1} parent=0 // pred_region
    _
  $region49: #{bert_dssm_forward.1} parent=0 // pred_fallthru
    _
  // Predicated region
  $region50: #{bert_dssm_forward.1} parent=0 // pred_check
    _
  $region51: #{bert_dssm_forward.1} parent=0 // pred_check_branch
    %48 = sbr.rel (0) target = $region53
  $region52: #{bert_dssm_forward.1} parent=0 // pred_region
    _
  $region53: #{bert_dssm_forward.1} parent=0 // pred_fallthru
    _
  // Predicated region
  $region54: #{bert_dssm_forward.1} parent=0 // pred_check
    _
  $region55: #{bert_dssm_forward.1} parent=0 // pred_check_branch
    %50 = sbr.rel (0) target = $region57
  $region56: #{bert_dssm_forward.1} parent=0 // pred_region
    _
  $region57: #{bert_dssm_forward.1} parent=0 // pred_fallthru
    _
  // Predicated region
  $region58: #{bert_dssm_forward.1} parent=0 // pred_check
    _
  $region59: #{bert_dssm_forward.1} parent=0 // pred_check_branch
    %52 = sbr.rel (0) target = $region61
  $region60: #{bert_dssm_forward.1} parent=0 // pred_region
    _
  $region61: #{bert_dssm_forward.1} parent=0 // pred_fallthru
    _
  // Predicated region
  $region62: #{bert_dssm_forward.1} parent=0 // pred_check
    _
  $region63: #{bert_dssm_forward.1} parent=0 // pred_check_branch
    %54 = sbr.rel (0) target = $region65
  $region64: #{bert_dssm_forward.1} parent=0 // pred_region
    _
  $region65: #{bert_dssm_forward.1} parent=0 // pred_fallthru
    _
  // Predicated region
  $region66: #{bert_dssm_forward.1} parent=0 // pred_check
    _
  $region67: #{bert_dssm_forward.1} parent=0 // pred_check_branch
    %56 = sbr.rel (0) target = $region69
  $region68: #{bert_dssm_forward.1} parent=0 // pred_region
    _
  $region69: #{bert_dssm_forward.1} parent=0 // pred_fallthru
    _
  // Predicated region
  $region70: #{bert_dssm_forward.1} parent=0 // pred_check
    _
  $region71: #{bert_dssm_forward.1} parent=0 // pred_check_branch
    %58 = sbr.rel (0) target = $region73
  $region72: #{bert_dssm_forward.1} parent=0 // pred_region
    _
  $region73: #{bert_dssm_forward.1} parent=0 // pred_fallthru
    _
  %v60 = vld [vmem:[%s0] sm:$0xff]
  %v61 = vld [vmem:[%s0 + $0x8] sm:$0xff]
  %v62 = vld [vmem:[%s2] sm:$0x1]
  %v63 = vld [vmem:[%s3] sm:$0x1]
  %vm64 = vcmask 261120
  %v65 = vsel %vm64, %v60, 0.0
  %66 = vadd.xlane.f32.xlu0 %v65
  %v67 = vpop.xlane.xlu0 %66
  %v68 = vsel %vm64, %v61, 0.0
  %69 = vadd.xlane.f32.xlu0 %v68
  %v70 = vpop.xlane.xlu0 %69
  %v71 = vrcp.pop 32.0
  %v72 = vmul.f32 %v67, %v71
  %v73 = vmul.f32 %v70, %v71
  %v74 = vsub.f32 %v60, %v72
  %v75 = vsub.f32 %v61, %v73
  %v76 = vmul.f32 %v74, %v74
  %v77 = vmul.f32 %v75, %v75
  %v78 = vsel %vm64, %v76, 0.0
  %79 = vadd.xlane.f32.xlu0 %v78
  %v80 = vpop.xlane.xlu0 %79
  %v81 = vsel %vm64, %v77, 0.0
  %82 = vadd.xlane.f32.xlu0 %v81
  %v83 = vpop.xlane.xlu0 %82
  %v84 = vmul.f32 %v80, %v71
  %v85 = vmul.f32 %v83, %v71
  %v86 = vadd.f32 %v84, 1e-12
  %v87 = vadd.f32 %v85, 1e-12
  %v88 = vrsqrt.pop %v86
  %v89 = vrsqrt.pop %v87
  %v90 = vmul.f32 %v74, %v88
  %v91 = vmul.f32 %v75, %v89
  %v93 = vlaneseq
  %v94 = vshrl.u32 %v93, 7
  %v95 = vsub.s32 0, %v94
  %v96 = vrot.slane %v62, %v95
  %v98 = vmul.f32 %v90, %v96
  %v99 = vmul.f32 %v91, %v96
  %v101 = vlaneseq
  %v102 = vshrl.u32 %v101, 7
  %v103 = vsub.s32 0, %v102
  %v104 = vrot.slane %v63, %v103
  %v106 = vadd.f32 %v98, %v104
  %v107 = vadd.f32 %v99, %v104
  %v108 = vld [vmem:[%s1] sm:$0x1]
  %v109 = vld [vmem:[%s1 + $0x1] sm:$0x1]
  %v110 = vpack.c.bf16 %v107, %v106
  %v111 = vld [vmem:[%s4] sm:$0xf]
  %v112 = vld [vmem:[%s4 + $0x4] sm:$0xf]
  %v113 = vld [vmem:[%s4 + $0x8] sm:$0xf]
  %v114 = vld [vmem:[%s4 + $0xc] sm:$0xf]
  %v115 = vld [vmem:[%s5] sm:$0x1]
  %v117 = vlaneseq
  %v118 = vshrl.u32 %v117, 7
  %v119 = vsub.s32 0, %v118
  %v120 = vrot.slane %v115, %v119
  %v126 = vunpack.c.l.b16 %v111
  %v127 = vunpack.c.l.b16 %v112
  %v128 = vunpack.c.l.b16 %v113
  %v129 = vunpack.c.l.b16 %v114
  %v130 = vpack.c.b16 %v127, %v126
  %v131 = vpack.c.b16 %v129, %v128
  %v135 = vsel %vm64, %v110, 0
  %137 = vmatprep.subr.bf16.mxu0 0
  %138 = vmatpush1.bf16.msra.mxu0 %v130
  %139 = vmatprep.subr.bf16.mxu0 0
  %140 = vmatpush1.bf16.msra.mxu0 %v131
  %141 = vmatprep.subr.bf16.mxu0 0
  %142 = vmatpush1.bf16.msra.mxu0 0
  %143 = vmatprep.subr.bf16.mxu0 0
  %144 = vmatpush1.bf16.msra.mxu0 0
  %145 = vmatprep.subr.bf16.mxu0 0
  %146 = vmatpush1.bf16.msra.mxu0 0
  %147 = vmatprep.subr.bf16.mxu0 0
  %148 = vmatpush1.bf16.msra.mxu0 0
  %149 = vmatprep.subr.bf16.mxu0 0
  %150 = vmatpush1.bf16.msra.mxu0 0
  %151 = vmatprep.subr.bf16.mxu0 0
  %152 = vmatpush1.bf16.msra.mxu0 0
  %153 = vmatprep.subr.bf16.mxu0 0
  %154 = vmatpush1.bf16.msra.mxu0 0
  %155 = vmatprep.subr.bf16.mxu0 0
  %156 = vmatpush1.bf16.msra.mxu0 0
  %157 = vmatprep.subr.bf16.mxu0 0
  %158 = vmatpush1.bf16.msra.mxu0 0
  %159 = vmatprep.subr.bf16.mxu0 0
  %160 = vmatpush1.bf16.msra.mxu0 0
  %161 = vmatprep.subr.bf16.mxu0 0
  %162 = vmatpush1.bf16.msra.mxu0 0
  %163 = vmatprep.subr.bf16.mxu0 0
  %164 = vmatpush1.bf16.msra.mxu0 0
  %165 = vmatprep.subr.bf16.mxu0 0
  %166 = vmatpush1.bf16.msra.mxu0 0
  %167 = vmatprep.subr.bf16.mxu0 0
  %168 = vmatpush1.bf16.msra.mxu0 0
  %169 = vmatprep.mubr.bf16.mxu0 0
  %170 = vmatmul.mubr.bf16.gmra.mrb[0].mxu0 %v135
  %v171 = vpop.f32.mrb[0].mxu0
  %v172 = vadd.f32 %v120, %v171
  %v173 = vpop.f32.mrb[0].mxu0
  %v174 = vpop.f32.mrb[0].mxu0
  %v175 = vadd.f32 %v120, %v174
  %v176 = vpop.f32.mrb[0].mxu0
  %177 = vdwg.mxu0
  %v178 = vpack.c.bf16 %v175, %v172
  %v180 = vunpack.c.l.b16 %v178
  %v181 = vunpack.c.h.b16 %v178
  %v182 = vpack.c.b16 %v180, %v180
  %v183 = vpack.c.b16 %v181, %v181
  %v186 = vlaneseq
  %v187 = vshrl.u32 %v186, 7
  %v188 = vsub.s32 0, %v187
  %v189 = vrot.slane %v108, %v188
  %v190 = vlaneseq
  %v191 = vshrl.u32 %v190, 7
  %v192 = vsub.s32 0, %v191
  %v193 = vrot.slane %v109, %v192
  %196 = vrot.lane.b32.xlu0 %v182, 96
  %v197 = vpop.permute.xlu0 %196
  %vm198 = vcmask 64512
  %v200 = vsel %vm198, %v182, 0
  %v203 = vsel %vm198, %v197, 0
  %205 = vmatprep.subr.bf16.mxu0 0
  %206 = vmatpush1.bf16.xpose.msra.mxu0 %v203
  %207 = vmatprep.subr.bf16.mxu0 0
  %208 = vmatpush1.bf16.xpose.msra.mxu0 0
  %209 = vmatprep.subr.bf16.mxu0 0
  %210 = vmatpush1.bf16.xpose.msra.mxu0 0
  %211 = vmatprep.subr.bf16.mxu0 0
  %212 = vmatpush1.bf16.xpose.msra.mxu0 0
  %213 = vmatprep.subr.bf16.mxu0 0
  %214 = vmatpush1.bf16.xpose.msra.mxu0 0
  %215 = vmatprep.subr.bf16.mxu0 0
  %216 = vmatpush1.bf16.xpose.msra.mxu0 0
  %217 = vmatprep.subr.bf16.mxu0 0
  %218 = vmatpush1.bf16.xpose.msra.mxu0 0
  %219 = vmatprep.subr.bf16.mxu0 0
  %220 = vmatpush1.bf16.xpose.msra.mxu0 0
  %221 = vmatprep.subr.bf16.mxu0 0
  %222 = vmatpush1.bf16.xpose.msra.mxu0 0
  %223 = vmatprep.subr.bf16.mxu0 0
  %224 = vmatpush1.bf16.xpose.msra.mxu0 0
  %225 = vmatprep.subr.bf16.mxu0 0
  %226 = vmatpush1.bf16.xpose.msra.mxu0 0
  %227 = vmatprep.subr.bf16.mxu0 0
  %228 = vmatpush1.bf16.xpose.msra.mxu0 0
  %229 = vmatprep.subr.bf16.mxu0 0
  %230 = vmatpush1.bf16.xpose.msra.mxu0 0
  %231 = vmatprep.subr.bf16.mxu0 0
  %232 = vmatpush1.bf16.xpose.msra.mxu0 0
  %233 = vmatprep.subr.bf16.mxu0 0
  %234 = vmatpush1.bf16.xpose.msra.mxu0 0
  %235 = vmatprep.subr.bf16.mxu0 0
  %236 = vmatpush1.bf16.xpose.msra.mxu0 0
  %237 = vmatprep.mubr.bf16.mxu0 0
  %238 = vmatmul.mubr.bf16.gmra.mrb[0].mxu0 %v200
  %v239 = vpop.f32.mrb[0].mxu0
  %v240 = vadd.f32 %v189, %v239
  %v241 = vpop.f32.mrb[0].mxu0
  %v242 = vpop.f32.mrb[0].mxu0
  %v243 = vpop.f32.mrb[0].mxu0
  %244 = vdwg.mxu0
  %245 = vrot.lane.b32.xlu0 %v183, 96
  %v246 = vpop.permute.xlu0 %245
  %v248 = vsel %vm198, %v183, 0
  %v251 = vsel %vm198, %v246, 0
  %253 = vmatprep.subr.bf16.mxu0 0
  %254 = vmatpush1.bf16.xpose.msra.mxu0 %v251
  %255 = vmatprep.subr.bf16.mxu0 0
  %256 = vmatpush1.bf16.xpose.msra.mxu0 0
  %257 = vmatprep.subr.bf16.mxu0 0
  %258 = vmatpush1.bf16.xpose.msra.mxu0 0
  %259 = vmatprep.subr.bf16.mxu0 0
  %260 = vmatpush1.bf16.xpose.msra.mxu0 0
  %261 = vmatprep.subr.bf16.mxu0 0
  %262 = vmatpush1.bf16.xpose.msra.mxu0 0
  %263 = vmatprep.subr.bf16.mxu0 0
  %264 = vmatpush1.bf16.xpose.msra.mxu0 0
  %265 = vmatprep.subr.bf16.mxu0 0
  %266 = vmatpush1.bf16.xpose.msra.mxu0 0
  %267 = vmatprep.subr.bf16.mxu0 0
  %268 = vmatpush1.bf16.xpose.msra.mxu0 0
  %269 = vmatprep.subr.bf16.mxu0 0
  %270 = vmatpush1.bf16.xpose.msra.mxu0 0
  %271 = vmatprep.subr.bf16.mxu0 0
  %272 = vmatpush1.bf16.xpose.msra.mxu0 0
  %273 = vmatprep.subr.bf16.mxu0 0
  %274 = vmatpush1.bf16.xpose.msra.mxu0 0
  %275 = vmatprep.subr.bf16.mxu0 0
  %276 = vmatpush1.bf16.xpose.msra.mxu0 0
  %277 = vmatprep.subr.bf16.mxu0 0
  %278 = vmatpush1.bf16.xpose.msra.mxu0 0
  %279 = vmatprep.subr.bf16.mxu0 0
  %280 = vmatpush1.bf16.xpose.msra.mxu0 0
  %281 = vmatprep.subr.bf16.mxu0 0
  %282 = vmatpush1.bf16.xpose.msra.mxu0 0
  %283 = vmatprep.subr.bf16.mxu0 0
  %284 = vmatpush1.bf16.xpose.msra.mxu0 0
  %285 = vmatprep.mubr.bf16.mxu0 0
  %286 = vmatmul.mubr.bf16.gmra.mrb[0].mxu0 %v248
  %v287 = vpop.f32.mrb[0].mxu0
  %v288 = vadd.f32 %v193, %v287
  %v289 = vpop.f32.mrb[0].mxu0
  %v290 = vpop.f32.mrb[0].mxu0
  %v291 = vpop.f32.mrb[0].mxu0
  %292 = vdwg.mxu0
  %v293 = vsel %vm198, %v240, -inf
  %294 = vmax.xlane.f32.xlu0 %v293
  %v295 = vpop.xlane.xlu0 %294
  %v296 = vsel %vm198, %v288, -inf
  %297 = vmax.xlane.f32.xlu0 %v296
  %v298 = vpop.xlane.xlu0 %297
  %v299 = vsub.f32 %v240, %v295
  %v300 = vsub.f32 %v288, %v298
  %v301 = vmul.f32 %v299, 1.442695
  %v302 = vpow.pop %v301
  %v303 = vmul.f32 %v300, 1.442695
  %v304 = vpow.pop %v303
  %v305 = vsel %vm198, %v302, 0.0
  %306 = vadd.xlane.f32.xlu0 %v305
  %v307 = vpop.xlane.xlu0 %306
  %v308 = vsel %vm198, %v304, 0.0
  %309 = vadd.xlane.f32.xlu0 %v308
  %v310 = vpop.xlane.xlu0 %309
  %v311 = vrcp.pop %v307
  %v312 = vrcp.pop %v310
  %v313 = vmul.f32 %v302, %v311
  %v314 = vmul.f32 %v304, %v312
  %v315 = vpack.c.bf16 %v313, %v313
  %v316 = vpack.c.bf16 %v314, %v314
  %317 = vrot.lane.b32.xlu0 %v182, 64
  %v318 = vpop.permute.xlu0 %317
  %v320 = vsel %vm198, %v315, 0
  %vm322 = vcmask 1043456
  %v324 = vsel %vm322, %v318, 0
  %326 = vmatprep.subr.bf16.mxu0 0
  %327 = vmatpush1.bf16.msra.mxu0 %v324
  %328 = vmatprep.subr.bf16.mxu0 0
  %329 = vmatpush1.bf16.msra.mxu0 0
  %330 = vmatprep.subr.bf16.mxu0 0
  %331 = vmatpush1.bf16.msra.mxu0 0
  %332 = vmatprep.subr.bf16.mxu0 0
  %333 = vmatpush1.bf16.msra.mxu0 0
  %334 = vmatprep.subr.bf16.mxu0 0
  %335 = vmatpush1.bf16.msra.mxu0 0
  %336 = vmatprep.subr.bf16.mxu0 0
  %337 = vmatpush1.bf16.msra.mxu0 0
  %338 = vmatprep.subr.bf16.mxu0 0
  %339 = vmatpush1.bf16.msra.mxu0 0
  %340 = vmatprep.subr.bf16.mxu0 0
  %341 = vmatpush1.bf16.msra.mxu0 0
  %342 = vmatprep.subr.bf16.mxu0 0
  %343 = vmatpush1.bf16.msra.mxu0 0
  %344 = vmatprep.subr.bf16.mxu0 0
  %345 = vmatpush1.bf16.msra.mxu0 0
  %346 = vmatprep.subr.bf16.mxu0 0
  %347 = vmatpush1.bf16.msra.mxu0 0
  %348 = vmatprep.subr.bf16.mxu0 0
  %349 = vmatpush1.bf16.msra.mxu0 0
  %350 = vmatprep.subr.bf16.mxu0 0
  %351 = vmatpush1.bf16.msra.mxu0 0
  %352 = vmatprep.subr.bf16.mxu0 0
  %353 = vmatpush1.bf16.msra.mxu0 0
  %354 = vmatprep.subr.bf16.mxu0 0
  %355 = vmatpush1.bf16.msra.mxu0 0
  %356 = vmatprep.subr.bf16.mxu0 0
  %357 = vmatpush1.bf16.msra.mxu0 0
  %358 = vmatprep.mubr.bf16.mxu0 0
  %359 = vmatmul.mubr.bf16.gmra.mrb[0].mxu0 %v320
  %v360 = vpop.f32.mrb[0].mxu0
  %v361 = vadd.f32 0.0, %v360
  %v362 = vpop.f32.mrb[0].mxu0
  %v363 = vpop.f32.mrb[0].mxu0
  %v364 = vpop.f32.mrb[0].mxu0
  %365 = vdwg.mxu0
  %366 = vrot.lane.b32.xlu0 %v183, 64
  %v367 = vpop.permute.xlu0 %366
  %v369 = vsel %vm198, %v316, 0
  %v372 = vsel %vm322, %v367, 0
  %374 = vmatprep.subr.bf16.mxu0 0
  %375 = vmatpush1.bf16.msra.mxu0 %v372
  %376 = vmatprep.subr.bf16.mxu0 0
  %377 = vmatpush1.bf16.msra.mxu0 0
  %378 = vmatprep.subr.bf16.mxu0 0
  %379 = vmatpush1.bf16.msra.mxu0 0
  %380 = vmatprep.subr.bf16.mxu0 0
  %381 = vmatpush1.bf16.msra.mxu0 0
  %382 = vmatprep.subr.bf16.mxu0 0
  %383 = vmatpush1.bf16.msra.mxu0 0
  %384 = vmatprep.subr.bf16.mxu0 0
  %385 = vmatpush1.bf16.msra.mxu0 0
  %386 = vmatprep.subr.bf16.mxu0 0
  %387 = vmatpush1.bf16.msra.mxu0 0
  %388 = vmatprep.subr.bf16.mxu0 0
  %389 = vmatpush1.bf16.msra.mxu0 0
  %390 = vmatprep.subr.bf16.mxu0 0
  %391 = vmatpush1.bf16.msra.mxu0 0
  %392 = vmatprep.subr.bf16.mxu0 0
  %393 = vmatpush1.bf16.msra.mxu0 0
  %394 = vmatprep.subr.bf16.mxu0 0
  %395 = vmatpush1.bf16.msra.mxu0 0
  %396 = vmatprep.subr.bf16.mxu0 0
  %397 = vmatpush1.bf16.msra.mxu0 0
  %398 = vmatprep.subr.bf16.mxu0 0
  %399 = vmatpush1.bf16.msra.mxu0 0
  %400 = vmatprep.subr.bf16.mxu0 0
  %401 = vmatpush1.bf16.msra.mxu0 0
  %402 = vmatprep.subr.bf16.mxu0 0
  %403 = vmatpush1.bf16.msra.mxu0 0
  %404 = vmatprep.subr.bf16.mxu0 0
  %405 = vmatpush1.bf16.msra.mxu0 0
  %406 = vmatprep.mubr.bf16.mxu0 0
  %407 = vmatmul.mubr.bf16.gmra.mrb[0].mxu0 %v369
  %v408 = vpop.f32.mrb[0].mxu0
  %v409 = vadd.f32 0.0, %v408
  %v410 = vpop.f32.mrb[0].mxu0
  %v411 = vpop.f32.mrb[0].mxu0
  %v412 = vpop.f32.mrb[0].mxu0
  %413 = vdwg.mxu0
  %414 = vrot.lane.b32.xlu0 %v182, 120
  %v415 = vpop.permute.xlu0 %414
  %416 = vrot.lane.b32.xlu0 %v182, 88
  %v417 = vpop.permute.xlu0 %416
  %v419 = vsel %vm198, %v415, 0
  %v422 = vsel %vm198, %v417, 0
  %424 = vmatprep.subr.bf16.mxu0 0
  %425 = vmatpush1.bf16.xpose.msra.mxu0 %v422
  %426 = vmatprep.subr.bf16.mxu0 0
  %427 = vmatpush1.bf16.xpose.msra.mxu0 0
  %428 = vmatprep.subr.bf16.mxu0 0
  %429 = vmatpush1.bf16.xpose.msra.mxu0 0
  %430 = vmatprep.subr.bf16.mxu0 0
  %431 = vmatpush1.bf16.xpose.msra.mxu0 0
  %432 = vmatprep.subr.bf16.mxu0 0
  %433 = vmatpush1.bf16.xpose.msra.mxu0 0
  %434 = vmatprep.subr.bf16.mxu0 0
  %435 = vmatpush1.bf16.xpose.msra.mxu0 0
  %436 = vmatprep.subr.bf16.mxu0 0
  %437 = vmatpush1.bf16.xpose.msra.mxu0 0
  %438 = vmatprep.subr.bf16.mxu0 0
  %439 = vmatpush1.bf16.xpose.msra.mxu0 0
  %440 = vmatprep.subr.bf16.mxu0 0
  %441 = vmatpush1.bf16.xpose.msra.mxu0 0
  %442 = vmatprep.subr.bf16.mxu0 0
  %443 = vmatpush1.bf16.xpose.msra.mxu0 0
  %444 = vmatprep.subr.bf16.mxu0 0
  %445 = vmatpush1.bf16.xpose.msra.mxu0 0
  %446 = vmatprep.subr.bf16.mxu0 0
  %447 = vmatpush1.bf16.xpose.msra.mxu0 0
  %448 = vmatprep.subr.bf16.mxu0 0
  %449 = vmatpush1.bf16.xpose.msra.mxu0 0
  %450 = vmatprep.subr.bf16.mxu0 0
  %451 = vmatpush1.bf16.xpose.msra.mxu0 0
  %452 = vmatprep.subr.bf16.mxu0 0
  %453 = vmatpush1.bf16.xpose.msra.mxu0 0
  %454 = vmatprep.subr.bf16.mxu0 0
  %455 = vmatpush1.bf16.xpose.msra.mxu0 0
  %456 = vmatprep.mubr.bf16.mxu0 0
  %457 = vmatmul.mubr.bf16.gmra.mrb[0].mxu0 %v419
  %v458 = vpop.f32.mrb[0].mxu0
  %v459 = vadd.f32 %v189, %v458
  %v460 = vpop.f32.mrb[0].mxu0
  %v461 = vpop.f32.mrb[0].mxu0
  %v462 = vpop.f32.mrb[0].mxu0
  %463 = vdwg.mxu0
  %464 = vrot.lane.b32.xlu0 %v183, 120
  %v465 = vpop.permute.xlu0 %464
  %466 = vrot.lane.b32.xlu0 %v183, 88
  %v467 = vpop.permute.xlu0 %466
  %v469 = vsel %vm198, %v465, 0
  %v472 = vsel %vm198, %v467, 0
  %474 = vmatprep.subr.bf16.mxu0 0
  %475 = vmatpush1.bf16.xpose.msra.mxu0 %v472
  %476 = vmatprep.subr.bf16.mxu0 0
  %477 = vmatpush1.bf16.xpose.msra.mxu0 0
  %478 = vmatprep.subr.bf16.mxu0 0
  %479 = vmatpush1.bf16.xpose.msra.mxu0 0
  %480 = vmatprep.subr.bf16.mxu0 0
  %481 = vmatpush1.bf16.xpose.msra.mxu0 0
  %482 = vmatprep.subr.bf16.mxu0 0
  %483 = vmatpush1.bf16.xpose.msra.mxu0 0
  %484 = vmatprep.subr.bf16.mxu0 0
  %485 = vmatpush1.bf16.xpose.msra.mxu0 0
  %486 = vmatprep.subr.bf16.mxu0 0
  %487 = vmatpush1.bf16.xpose.msra.mxu0 0
  %488 = vmatprep.subr.bf16.mxu0 0
  %489 = vmatpush1.bf16.xpose.msra.mxu0 0
  %490 = vmatprep.subr.bf16.mxu0 0
  %491 = vmatpush1.bf16.xpose.msra.mxu0 0
  %492 = vmatprep.subr.bf16.mxu0 0
  %493 = vmatpush1.bf16.xpose.msra.mxu0 0
  %494 = vmatprep.subr.bf16.mxu0 0
  %495 = vmatpush1.bf16.xpose.msra.mxu0 0
  %496 = vmatprep.subr.bf16.mxu0 0
  %497 = vmatpush1.bf16.xpose.msra.mxu0 0
  %498 = vmatprep.subr.bf16.mxu0 0
  %499 = vmatpush1.bf16.xpose.msra.mxu0 0
  %500 = vmatprep.subr.bf16.mxu0 0
  %501 = vmatpush1.bf16.xpose.msra.mxu0 0
  %502 = vmatprep.subr.bf16.mxu0 0
  %503 = vmatpush1.bf16.xpose.msra.mxu0 0
  %504 = vmatprep.subr.bf16.mxu0 0
  %505 = vmatpush1.bf16.xpose.msra.mxu0 0
  %506 = vmatprep.mubr.bf16.mxu0 0
  %507 = vmatmul.mubr.bf16.gmra.mrb[0].mxu0 %v469
  %v508 = vpop.f32.mrb[0].mxu0
  %v509 = vadd.f32 %v193, %v508
  %v510 = vpop.f32.mrb[0].mxu0
  %v511 = vpop.f32.mrb[0].mxu0
  %v512 = vpop.f32.mrb[0].mxu0
  %513 = vdwg.mxu0
  %v514 = vsel %vm198, %v459, -inf
  %515 = vmax.xlane.f32.xlu0 %v514
  %v516 = vpop.xlane.xlu0 %515
  %v517 = vsel %vm198, %v509, -inf
  %518 = vmax.xlane.f32.xlu0 %v517
  %v519 = vpop.xlane.xlu0 %518
  %v520 = vsub.f32 %v459, %v516
  %v521 = vsub.f32 %v509, %v519
  %v522 = vmul.f32 %v520, 1.442695
  %v523 = vpow.pop %v522
  %v524 = vmul.f32 %v521, 1.442695
  %v525 = vpow.pop %v524
  %v526 = vsel %vm198, %v523, 0.0
  %527 = vadd.xlane.f32.xlu0 %v526
  %v528 = vpop.xlane.xlu0 %527
  %v529 = vsel %vm198, %v525, 0.0
  %530 = vadd.xlane.f32.xlu0 %v529
  %v531 = vpop.xlane.xlu0 %530
  %v532 = vrcp.pop %v528
  %v533 = vrcp.pop %v531
  %v534 = vmul.f32 %v523, %v532
  %v535 = vmul.f32 %v525, %v533
  %v536 = vpack.c.bf16 %v534, %v534
  %v537 = vpack.c.bf16 %v535, %v535
  %538 = vrot.lane.b32.xlu0 %v182, 56
  %v539 = vpop.permute.xlu0 %538
  %v541 = vsel %vm198, %v536, 0
  %v544 = vsel %vm322, %v539, 0
  %546 = vmatprep.subr.bf16.mxu0 0
  %547 = vmatpush1.bf16.msra.mxu0 %v544
  %548 = vmatprep.subr.bf16.mxu0 0
  %549 = vmatpush1.bf16.msra.mxu0 0
  %550 = vmatprep.subr.bf16.mxu0 0
  %551 = vmatpush1.bf16.msra.mxu0 0
  %552 = vmatprep.subr.bf16.mxu0 0
  %553 = vmatpush1.bf16.msra.mxu0 0
  %554 = vmatprep.subr.bf16.mxu0 0
  %555 = vmatpush1.bf16.msra.mxu0 0
  %556 = vmatprep.subr.bf16.mxu0 0
  %557 = vmatpush1.bf16.msra.mxu0 0
  %558 = vmatprep.subr.bf16.mxu0 0
  %559 = vmatpush1.bf16.msra.mxu0 0
  %560 = vmatprep.subr.bf16.mxu0 0
  %561 = vmatpush1.bf16.msra.mxu0 0
  %562 = vmatprep.subr.bf16.mxu0 0
  %563 = vmatpush1.bf16.msra.mxu0 0
  %564 = vmatprep.subr.bf16.mxu0 0
  %565 = vmatpush1.bf16.msra.mxu0 0
  %566 = vmatprep.subr.bf16.mxu0 0
  %567 = vmatpush1.bf16.msra.mxu0 0
  %568 = vmatprep.subr.bf16.mxu0 0
  %569 = vmatpush1.bf16.msra.mxu0 0
  %570 = vmatprep.subr.bf16.mxu0 0
  %571 = vmatpush1.bf16.msra.mxu0 0
  %572 = vmatprep.subr.bf16.mxu0 0
  %573 = vmatpush1.bf16.msra.mxu0 0
  %574 = vmatprep.subr.bf16.mxu0 0
  %575 = vmatpush1.bf16.msra.mxu0 0
  %576 = vmatprep.subr.bf16.mxu0 0
  %577 = vmatpush1.bf16.msra.mxu0 0
  %578 = vmatprep.mubr.bf16.mxu0 0
  %579 = vmatmul.mubr.bf16.gmra.mrb[0].mxu0 %v541
  %v580 = vpop.f32.mrb[0].mxu0
  %v581 = vadd.f32 0.0, %v580
  %v582 = vpop.f32.mrb[0].mxu0
  %v583 = vpop.f32.mrb[0].mxu0
  %v584 = vpop.f32.mrb[0].mxu0
  %585 = vdwg.mxu0
  %586 = vrot.lane.b32.xlu0 %v183, 56
  %v587 = vpop.permute.xlu0 %586
  %v589 = vsel %vm198, %v537, 0
  %v592 = vsel %vm322, %v587, 0
  %594 = vmatprep.subr.bf16.mxu0 0
  %595 = vmatpush1.bf16.msra.mxu0 %v592
  %596 = vmatprep.subr.bf16.mxu0 0
  %597 = vmatpush1.bf16.msra.mxu0 0
  %598 = vmatprep.subr.bf16.mxu0 0
  %599 = vmatpush1.bf16.msra.mxu0 0
  %600 = vmatprep.subr.bf16.mxu0 0
  %601 = vmatpush1.bf16.msra.mxu0 0
  %602 = vmatprep.subr.bf16.mxu0 0
  %603 = vmatpush1.bf16.msra.mxu0 0
  %604 = vmatprep.subr.bf16.mxu0 0
  %605 = vmatpush1.bf16.msra.mxu0 0
  %606 = vmatprep.subr.bf16.mxu0 0
  %607 = vmatpush1.bf16.msra.mxu0 0
  %608 = vmatprep.subr.bf16.mxu0 0
  %609 = vmatpush1.bf16.msra.mxu0 0
  %610 = vmatprep.subr.bf16.mxu0 0
  %611 = vmatpush1.bf16.msra.mxu0 0
  %612 = vmatprep.subr.bf16.mxu0 0
  %613 = vmatpush1.bf16.msra.mxu0 0
  %614 = vmatprep.subr.bf16.mxu0 0
  %615 = vmatpush1.bf16.msra.mxu0 0
  %616 = vmatprep.subr.bf16.mxu0 0
  %617 = vmatpush1.bf16.msra.mxu0 0
  %618 = vmatprep.subr.bf16.mxu0 0
  %619 = vmatpush1.bf16.msra.mxu0 0
  %620 = vmatprep.subr.bf16.mxu0 0
  %621 = vmatpush1.bf16.msra.mxu0 0
  %622 = vmatprep.subr.bf16.mxu0 0
  %623 = vmatpush1.bf16.msra.mxu0 0
  %624 = vmatprep.subr.bf16.mxu0 0
  %625 = vmatpush1.bf16.msra.mxu0 0
  %626 = vmatprep.mubr.bf16.mxu0 0
  %627 = vmatmul.mubr.bf16.gmra.mrb[0].mxu0 %v589
  %v628 = vpop.f32.mrb[0].mxu0
  %v629 = vadd.f32 0.0, %v628
  %v630 = vpop.f32.mrb[0].mxu0
  %v631 = vpop.f32.mrb[0].mxu0
  %v632 = vpop.f32.mrb[0].mxu0
  %633 = vdwg.mxu0
  %634 = vrot.lane.b32.xlu0 %v182, 112
  %v635 = vpop.permute.xlu0 %634
  %636 = vrot.lane.b32.xlu0 %v182, 80
  %v637 = vpop.permute.xlu0 %636
  %v639 = vsel %vm198, %v635, 0
  %v642 = vsel %vm198, %v637, 0
  %644 = vmatprep.subr.bf16.mxu0 0
  %645 = vmatpush1.bf16.xpose.msra.mxu0 %v642
  %646 = vmatprep.subr.bf16.mxu0 0
  %647 = vmatpush1.bf16.xpose.msra.mxu0 0
  %648 = vmatprep.subr.bf16.mxu0 0
  %649 = vmatpush1.bf16.xpose.msra.mxu0 0
  %650 = vmatprep.subr.bf16.mxu0 0
  %651 = vmatpush1.bf16.xpose.msra.mxu0 0
  %652 = vmatprep.subr.bf16.mxu0 0
  %653 = vmatpush1.bf16.xpose.msra.mxu0 0
  %654 = vmatprep.subr.bf16.mxu0 0
  %655 = vmatpush1.bf16.xpose.msra.mxu0 0
  %656 = vmatprep.subr.bf16.mxu0 0
  %657 = vmatpush1.bf16.xpose.msra.mxu0 0
  %658 = vmatprep.subr.bf16.mxu0 0
  %659 = vmatpush1.bf16.xpose.msra.mxu0 0
  %660 = vmatprep.subr.bf16.mxu0 0
  %661 = vmatpush1.bf16.xpose.msra.mxu0 0
  %662 = vmatprep.subr.bf16.mxu0 0
  %663 = vmatpush1.bf16.xpose.msra.mxu0 0
  %664 = vmatprep.subr.bf16.mxu0 0
  %665 = vmatpush1.bf16.xpose.msra.mxu0 0
  %666 = vmatprep.subr.bf16.mxu0 0
  %667 = vmatpush1.bf16.xpose.msra.mxu0 0
  %668 = vmatprep.subr.bf16.mxu0 0
  %669 = vmatpush1.bf16.xpose.msra.mxu0 0
  %670 = vmatprep.subr.bf16.mxu0 0
  %671 = vmatpush1.bf16.xpose.msra.mxu0 0
  %672 = vmatprep.subr.bf16.mxu0 0
  %673 = vmatpush1.bf16.xpose.msra.mxu0 0
  %674 = vmatprep.subr.bf16.mxu0 0
  %675 = vmatpush1.bf16.xpose.msra.mxu0 0
  %676 = vmatprep.mubr.bf16.mxu0 0
  %677 = vmatmul.mubr.bf16.gmra.mrb[0].mxu0 %v639
  %v678 = vpop.f32.mrb[0].mxu0
  %v679 = vadd.f32 %v189, %v678
  %v680 = vpop.f32.mrb[0].mxu0
  %v681 = vpop.f32.mrb[0].mxu0
  %v682 = vpop.f32.mrb[0].mxu0
  %683 = vdwg.mxu0
  %684 = vrot.lane.b32.xlu0 %v183, 112
  %v685 = vpop.permute.xlu0 %684
  %686 = vrot.lane.b32.xlu0 %v183, 80
  %v687 = vpop.permute.xlu0 %686
  %v689 = vsel %vm198, %v685, 0
  %v692 = vsel %vm198, %v687, 0
  %694 = vmatprep.subr.bf16.mxu0 0
  %695 = vmatpush1.bf16.xpose.msra.mxu0 %v692
  %696 = vmatprep.subr.bf16.mxu0 0
  %697 = vmatpush1.bf16.xpose.msra.mxu0 0
  %698 = vmatprep.subr.bf16.mxu0 0
  %699 = vmatpush1.bf16.xpose.msra.mxu0 0
  %700 = vmatprep.subr.bf16.mxu0 0
  %701 = vmatpush1.bf16.xpose.msra.mxu0 0
  %702 = vmatprep.subr.bf16.mxu0 0
  %703 = vmatpush1.bf16.xpose.msra.mxu0 0
  %704 = vmatprep.subr.bf16.mxu0 0
  %705 = vmatpush1.bf16.xpose.msra.mxu0 0
  %706 = vmatprep.subr.bf16.mxu0 0
  %707 = vmatpush1.bf16.xpose.msra.mxu0 0
  %708 = vmatprep.subr.bf16.mxu0 0
  %709 = vmatpush1.bf16.xpose.msra.mxu0 0
  %710 = vmatprep.subr.bf16.mxu0 0
  %711 = vmatpush1.bf16.xpose.msra.mxu0 0
  %712 = vmatprep.subr.bf16.mxu0 0
  %713 = vmatpush1.bf16.xpose.msra.mxu0 0
  %714 = vmatprep.subr.bf16.mxu0 0
  %715 = vmatpush1.bf16.xpose.msra.mxu0 0
  %716 = vmatprep.subr.bf16.mxu0 0
  %717 = vmatpush1.bf16.xpose.msra.mxu0 0
  %718 = vmatprep.subr.bf16.mxu0 0
  %719 = vmatpush1.bf16.xpose.msra.mxu0 0
  %720 = vmatprep.subr.bf16.mxu0 0
  %721 = vmatpush1.bf16.xpose.msra.mxu0 0
  %722 = vmatprep.subr.bf16.mxu0 0
  %723 = vmatpush1.bf16.xpose.msra.mxu0 0
  %724 = vmatprep.subr.bf16.mxu0 0
  %725 = vmatpush1.bf16.xpose.msra.mxu0 0
  %726 = vmatprep.mubr.bf16.mxu0 0
  %727 = vmatmul.mubr.bf16.gmra.mrb[0].mxu0 %v689
  %v728 = vpop.f32.mrb[0].mxu0
  %v729 = vadd.f32 %v193, %v728
  %v730 = vpop.f32.mrb[0].mxu0
  %v731 = vpop.f32.mrb[0].mxu0
  %v732 = vpop.f32.mrb[0].mxu0
  %733 = vdwg.mxu0
  %v734 = vsel %vm198, %v679, -inf
  %735 = vmax.xlane.f32.xlu0 %v734
  %v736 = vpop.xlane.xlu0 %735
  %v737 = vsel %vm198, %v729, -inf
  %738 = vmax.xlane.f32.xlu0 %v737
  %v739 = vpop.xlane.xlu0 %738
  %v740 = vsub.f32 %v679, %v736
  %v741 = vsub.f32 %v729, %v739
  %v742 = vmul.f32 %v740, 1.442695
  %v743 = vpow.pop %v742
  %v744 = vmul.f32 %v741, 1.442695
  %v745 = vpow.pop %v744
  %v746 = vsel %vm198, %v743, 0.0
  %747 = vadd.xlane.f32.xlu0 %v746
  %v748 = vpop.xlane.xlu0 %747
  %v749 = vsel %vm198, %v745, 0.0
  %750 = vadd.xlane.f32.xlu0 %v749
  %v751 = vpop.xlane.xlu0 %750
  %v752 = vrcp.pop %v748
  %v753 = vrcp.pop %v751
  %v754 = vmul.f32 %v743, %v752
  %v755 = vmul.f32 %v745, %v753
  %v756 = vpack.c.bf16 %v754, %v754
  %v757 = vpack.c.bf16 %v755, %v755
  %758 = vrot.lane.b32.xlu0 %v182, 48
  %v759 = vpop.permute.xlu0 %758
  %v761 = vsel %vm198, %v756, 0
  %v764 = vsel %vm322, %v759, 0
  %766 = vmatprep.subr.bf16.mxu0 0
  %767 = vmatpush1.bf16.msra.mxu0 %v764
  %768 = vmatprep.subr.bf16.mxu0 0
  %769 = vmatpush1.bf16.msra.mxu0 0
  %770 = vmatprep.subr.bf16.mxu0 0
  %771 = vmatpush1.bf16.msra.mxu0 0
  %772 = vmatprep.subr.bf16.mxu0 0
  %773 = vmatpush1.bf16.msra.mxu0 0
  %774 = vmatprep.subr.bf16.mxu0 0
  %775 = vmatpush1.bf16.msra.mxu0 0
  %776 = vmatprep.subr.bf16.mxu0 0
  %777 = vmatpush1.bf16.msra.mxu0 0
  %778 = vmatprep.subr.bf16.mxu0 0
  %779 = vmatpush1.bf16.msra.mxu0 0
  %780 = vmatprep.subr.bf16.mxu0 0
  %781 = vmatpush1.bf16.msra.mxu0 0
  %782 = vmatprep.subr.bf16.mxu0 0
  %783 = vmatpush1.bf16.msra.mxu0 0
  %784 = vmatprep.subr.bf16.mxu0 0
  %785 = vmatpush1.bf16.msra.mxu0 0
  %786 = vmatprep.subr.bf16.mxu0 0
  %787 = vmatpush1.bf16.msra.mxu0 0
  %788 = vmatprep.subr.bf16.mxu0 0
  %789 = vmatpush1.bf16.msra.mxu0 0
  %790 = vmatprep.subr.bf16.mxu0 0
  %791 = vmatpush1.bf16.msra.mxu0 0
  %792 = vmatprep.subr.bf16.mxu0 0
  %793 = vmatpush1.bf16.msra.mxu0 0
  %794 = vmatprep.subr.bf16.mxu0 0
  %795 = vmatpush1.bf16.msra.mxu0 0
  %796 = vmatprep.subr.bf16.mxu0 0
  %797 = vmatpush1.bf16.msra.mxu0 0
  %798 = vmatprep.mubr.bf16.mxu0 0
  %799 = vmatmul.mubr.bf16.gmra.mrb[0].mxu0 %v761
  %v800 = vpop.f32.mrb[0].mxu0
  %v801 = vadd.f32 0.0, %v800
  %v802 = vpop.f32.mrb[0].mxu0
  %v803 = vpop.f32.mrb[0].mxu0
  %v804 = vpop.f32.mrb[0].mxu0
  %805 = vdwg.mxu0
  %806 = vrot.lane.b32.xlu0 %v183, 48
  %v807 = vpop.permute.xlu0 %806
  %v809 = vsel %vm198, %v757, 0
  %v812 = vsel %vm322, %v807, 0
  %814 = vmatprep.subr.bf16.mxu0 0
  %815 = vmatpush1.bf16.msra.mxu0 %v812
  %816 = vmatprep.subr.bf16.mxu0 0
  %817 = vmatpush1.bf16.msra.mxu0 0
  %818 = vmatprep.subr.bf16.mxu0 0
  %819 = vmatpush1.bf16.msra.mxu0 0
  %820 = vmatprep.subr.bf16.mxu0 0
  %821 = vmatpush1.bf16.msra.mxu0 0
  %822 = vmatprep.subr.bf16.mxu0 0
  %823 = vmatpush1.bf16.msra.mxu0 0
  %824 = vmatprep.subr.bf16.mxu0 0
  %825 = vmatpush1.bf16.msra.mxu0 0
  %826 = vmatprep.subr.bf16.mxu0 0
  %827 = vmatpush1.bf16.msra.mxu0 0
  %828 = vmatprep.subr.bf16.mxu0 0
  %829 = vmatpush1.bf16.msra.mxu0 0
  %830 = vmatprep.subr.bf16.mxu0 0
  %831 = vmatpush1.bf16.msra.mxu0 0
  %832 = vmatprep.subr.bf16.mxu0 0
  %833 = vmatpush1.bf16.msra.mxu0 0
  %834 = vmatprep.subr.bf16.mxu0 0
  %835 = vmatpush1.bf16.msra.mxu0 0
  %836 = vmatprep.subr.bf16.mxu0 0
  %837 = vmatpush1.bf16.msra.mxu0 0
  %838 = vmatprep.subr.bf16.mxu0 0
  %839 = vmatpush1.bf16.msra.mxu0 0
  %840 = vmatprep.subr.bf16.mxu0 0
  %841 = vmatpush1.bf16.msra.mxu0 0
  %842 = vmatprep.subr.bf16.mxu0 0
  %843 = vmatpush1.bf16.msra.mxu0 0
  %844 = vmatprep.subr.bf16.mxu0 0
  %845 = vmatpush1.bf16.msra.mxu0 0
  %846 = vmatprep.mubr.bf16.mxu0 0
  %847 = vmatmul.mubr.bf16.gmra.mrb[0].mxu0 %v809
  %v848 = vpop.f32.mrb[0].mxu0
  %v849 = vadd.f32 0.0, %v848
  %v850 = vpop.f32.mrb[0].mxu0
  %v851 = vpop.f32.mrb[0].mxu0
  %v852 = vpop.f32.mrb[0].mxu0
  %853 = vdwg.mxu0
  %854 = vrot.lane.b32.xlu0 %v182, 104
  %v855 = vpop.permute.xlu0 %854
  %856 = vrot.lane.b32.xlu0 %v182, 72
  %v857 = vpop.permute.xlu0 %856
  %v859 = vsel %vm198, %v855, 0
  %v862 = vsel %vm198, %v857, 0
  %864 = vmatprep.subr.bf16.mxu0 0
  %865 = vmatpush1.bf16.xpose.msra.mxu0 %v862
  %866 = vmatprep.subr.bf16.mxu0 0
  %867 = vmatpush1.bf16.xpose.msra.mxu0 0
  %868 = vmatprep.subr.bf16.mxu0 0
  %869 = vmatpush1.bf16.xpose.msra.mxu0 0
  %870 = vmatprep.subr.bf16.mxu0 0
  %871 = vmatpush1.bf16.xpose.msra.mxu0 0
  %872 = vmatprep.subr.bf16.mxu0 0
  %873 = vmatpush1.bf16.xpose.msra.mxu0 0
  %874 = vmatprep.subr.bf16.mxu0 0
  %875 = vmatpush1.bf16.xpose.msra.mxu0 0
  %876 = vmatprep.subr.bf16.mxu0 0
  %877 = vmatpush1.bf16.xpose.msra.mxu0 0
  %878 = vmatprep.subr.bf16.mxu0 0
  %879 = vmatpush1.bf16.xpose.msra.mxu0 0
  %880 = vmatprep.subr.bf16.mxu0 0
  %881 = vmatpush1.bf16.xpose.msra.mxu0 0
  %882 = vmatprep.subr.bf16.mxu0 0
  %883 = vmatpush1.bf16.xpose.msra.mxu0 0
  %884 = vmatprep.subr.bf16.mxu0 0
  %885 = vmatpush1.bf16.xpose.msra.mxu0 0
  %886 = vmatprep.subr.bf16.mxu0 0
  %887 = vmatpush1.bf16.xpose.msra.mxu0 0
  %888 = vmatprep.subr.bf16.mxu0 0
  %889 = vmatpush1.bf16.xpose.msra.mxu0 0
  %890 = vmatprep.subr.bf16.mxu0 0
  %891 = vmatpush1.bf16.xpose.msra.mxu0 0
  %892 = vmatprep.subr.bf16.mxu0 0
  %893 = vmatpush1.bf16.xpose.msra.mxu0 0
  %894 = vmatprep.subr.bf16.mxu0 0
  %895 = vmatpush1.bf16.xpose.msra.mxu0 0
  %896 = vmatprep.mubr.bf16.mxu0 0
  %897 = vmatmul.mubr.bf16.gmra.mrb[0].mxu0 %v859
  %v898 = vpop.f32.mrb[0].mxu0
  %v899 = vadd.f32 %v189, %v898
  %v900 = vpop.f32.mrb[0].mxu0
  %v901 = vpop.f32.mrb[0].mxu0
  %v902 = vpop.f32.mrb[0].mxu0
  %903 = vdwg.mxu0
  %904 = vrot.lane.b32.xlu0 %v183, 104
  %v905 = vpop.permute.xlu0 %904
  %906 = vrot.lane.b32.xlu0 %v183, 72
  %v907 = vpop.permute.xlu0 %906
  %v909 = vsel %vm198, %v905, 0
  %v912 = vsel %vm198, %v907, 0
  %914 = vmatprep.subr.bf16.mxu0 0
  %915 = vmatpush1.bf16.xpose.msra.mxu0 %v912
  %916 = vmatprep.subr.bf16.mxu0 0
  %917 = vmatpush1.bf16.xpose.msra.mxu0 0
  %918 = vmatprep.subr.bf16.mxu0 0
  %919 = vmatpush1.bf16.xpose.msra.mxu0 0
  %920 = vmatprep.subr.bf16.mxu0 0
  %921 = vmatpush1.bf16.xpose.msra.mxu0 0
  %922 = vmatprep.subr.bf16.mxu0 0
  %923 = vmatpush1.bf16.xpose.msra.mxu0 0
  %924 = vmatprep.subr.bf16.mxu0 0
  %925 = vmatpush1.bf16.xpose.msra.mxu0 0
  %926 = vmatprep.subr.bf16.mxu0 0
  %927 = vmatpush1.bf16.xpose.msra.mxu0 0
  %928 = vmatprep.subr.bf16.mxu0 0
  %929 = vmatpush1.bf16.xpose.msra.mxu0 0
  %930 = vmatprep.subr.bf16.mxu0 0
  %931 = vmatpush1.bf16.xpose.msra.mxu0 0
  %932 = vmatprep.subr.bf16.mxu0 0
  %933 = vmatpush1.bf16.xpose.msra.mxu0 0
  %934 = vmatprep.subr.bf16.mxu0 0
  %935 = vmatpush1.bf16.xpose.msra.mxu0 0
  %936 = vmatprep.subr.bf16.mxu0 0
  %937 = vmatpush1.bf16.xpose.msra.mxu0 0
  %938 = vmatprep.subr.bf16.mxu0 0
  %939 = vmatpush1.bf16.xpose.msra.mxu0 0
  %940 = vmatprep.subr.bf16.mxu0 0
  %941 = vmatpush1.bf16.xpose.msra.mxu0 0
  %942 = vmatprep.subr.bf16.mxu0 0
  %943 = vmatpush1.bf16.xpose.msra.mxu0 0
  %944 = vmatprep.subr.bf16.mxu0 0
  %945 = vmatpush1.bf16.xpose.msra.mxu0 0
  %946 = vmatprep.mubr.bf16.mxu0 0
  %947 = vmatmul.mubr.bf16.gmra.mrb[0].mxu0 %v909
  %v948 = vpop.f32.mrb[0].mxu0
  %v949 = vadd.f32 %v193, %v948
  %v950 = vpop.f32.mrb[0].mxu0
  %v951 = vpop.f32.mrb[0].mxu0
  %v952 = vpop.f32.mrb[0].mxu0
  %953 = vdwg.mxu0
  %v954 = vsel %vm198, %v899, -inf
  %955 = vmax.xlane.f32.xlu0 %v954
  %v956 = vpop.xlane.xlu0 %955
  %v957 = vsel %vm198, %v949, -inf
  %958 = vmax.xlane.f32.xlu0 %v957
  %v959 = vpop.xlane.xlu0 %958
  %v960 = vsub.f32 %v899, %v956
  %v961 = vsub.f32 %v949, %v959
  %v962 = vmul.f32 %v960, 1.442695
  %v963 = vpow.pop %v962
  %v964 = vmul.f32 %v961, 1.442695
  %v965 = vpow.pop %v964
  %v966 = vsel %vm198, %v963, 0.0
  %967 = vadd.xlane.f32.xlu0 %v966
  %v968 = vpop.xlane.xlu0 %967
  %v969 = vsel %vm198, %v965, 0.0
  %970 = vadd.xlane.f32.xlu0 %v969
  %v971 = vpop.xlane.xlu0 %970
  %v972 = vrcp.pop %v968
  %v973 = vrcp.pop %v971
  %v974 = vmul.f32 %v963, %v972
  %v975 = vmul.f32 %v965, %v973
  %v976 = vpack.c.bf16 %v974, %v974
  %v977 = vpack.c.bf16 %v975, %v975
  %978 = vrot.lane.b32.xlu0 %v182, 40
  %v979 = vpop.permute.xlu0 %978
  %v981 = vsel %vm198, %v976, 0
  %v984 = vsel %vm322, %v979, 0
  %986 = vmatprep.subr.bf16.mxu0 0
  %987 = vmatpush1.bf16.msra.mxu0 %v984
  %988 = vmatprep.subr.bf16.mxu0 0
  %989 = vmatpush1.bf16.msra.mxu0 0
  %990 = vmatprep.subr.bf16.mxu0 0
  %991 = vmatpush1.bf16.msra.mxu0 0
  %992 = vmatprep.subr.bf16.mxu0 0
  %993 = vmatpush1.bf16.msra.mxu0 0
  %994 = vmatprep.subr.bf16.mxu0 0
  %995 = vmatpush1.bf16.msra.mxu0 0
  %996 = vmatprep.subr.bf16.mxu0 0
  %997 = vmatpush1.bf16.msra.mxu0 0
  %998 = vmatprep.subr.bf16.mxu0 0
  %999 = vmatpush1.bf16.msra.mxu0 0
  %1000 = vmatprep.subr.bf16.mxu0 0
  %1001 = vmatpush1.bf16.msra.mxu0 0
  %1002 = vmatprep.subr.bf16.mxu0 0
  %1003 = vmatpush1.bf16.msra.mxu0 0
  %1004 = vmatprep.subr.bf16.mxu0 0
  %1005 = vmatpush1.bf16.msra.mxu0 0
  %1006 = vmatprep.subr.bf16.mxu0 0
  %1007 = vmatpush1.bf16.msra.mxu0 0
  %1008 = vmatprep.subr.bf16.mxu0 0
  %1009 = vmatpush1.bf16.msra.mxu0 0
  %1010 = vmatprep.subr.bf16.mxu0 0
  %1011 = vmatpush1.bf16.msra.mxu0 0
  %1012 = vmatprep.subr.bf16.mxu0 0
  %1013 = vmatpush1.bf16.msra.mxu0 0
  %1014 = vmatprep.subr.bf16.mxu0 0
  %1015 = vmatpush1.bf16.msra.mxu0 0
  %1016 = vmatprep.subr.bf16.mxu0 0
  %1017 = vmatpush1.bf16.msra.mxu0 0
  %1018 = vmatprep.mubr.bf16.mxu0 0
  %1019 = vmatmul.mubr.bf16.gmra.mrb[0].mxu0 %v981
  %v1020 = vpop.f32.mrb[0].mxu0
  %v1021 = vadd.f32 0.0, %v1020
  %v1022 = vpop.f32.mrb[0].mxu0
  %v1023 = vpop.f32.mrb[0].mxu0
  %v1024 = vpop.f32.mrb[0].mxu0
  %1025 = vdwg.mxu0
  %1026 = vrot.lane.b32.xlu0 %v183, 40
  %v1027 = vpop.permute.xlu0 %1026
  %v1029 = vsel %vm198, %v977, 0
  %v1032 = vsel %vm322, %v1027, 0
  %1034 = vmatprep.subr.bf16.mxu0 0
  %1035 = vmatpush1.bf16.msra.mxu0 %v1032
  %1036 = vmatprep.subr.bf16.mxu0 0
  %1037 = vmatpush1.bf16.msra.mxu0 0
  %1038 = vmatprep.subr.bf16.mxu0 0
  %1039 = vmatpush1.bf16.msra.mxu0 0
  %1040 = vmatprep.subr.bf16.mxu0 0
  %1041 = vmatpush1.bf16.msra.mxu0 0
  %1042 = vmatprep.subr.bf16.mxu0 0
  %1043 = vmatpush1.bf16.msra.mxu0 0
  %1044 = vmatprep.subr.bf16.mxu0 0
  %1045 = vmatpush1.bf16.msra.mxu0 0
  %1046 = vmatprep.subr.bf16.mxu0 0
  %1047 = vmatpush1.bf16.msra.mxu0 0
  %1048 = vmatprep.subr.bf16.mxu0 0
  %1049 = vmatpush1.bf16.msra.mxu0 0
  %1050 = vmatprep.subr.bf16.mxu0 0
  %1051 = vmatpush1.bf16.msra.mxu0 0
  %1052 = vmatprep.subr.bf16.mxu0 0
  %1053 = vmatpush1.bf16.msra.mxu0 0
  %1054 = vmatprep.subr.bf16.mxu0 0
  %1055 = vmatpush1.bf16.msra.mxu0 0
  %1056 = vmatprep.subr.bf16.mxu0 0
  %1057 = vmatpush1.bf16.msra.mxu0 0
  %1058 = vmatprep.subr.bf16.mxu0 0
  %1059 = vmatpush1.bf16.msra.mxu0 0
  %1060 = vmatprep.subr.bf16.mxu0 0
  %1061 = vmatpush1.bf16.msra.mxu0 0
  %1062 = vmatprep.subr.bf16.mxu0 0
  %1063 = vmatpush1.bf16.msra.mxu0 0
  %1064 = vmatprep.subr.bf16.mxu0 0
  %1065 = vmatpush1.bf16.msra.mxu0 0
  %1066 = vmatprep.mubr.bf16.mxu0 0
  %1067 = vmatmul.mubr.bf16.gmra.mrb[0].mxu0 %v1029
  %v1068 = vpop.f32.mrb[0].mxu0
  %v1069 = vadd.f32 0.0, %v1068
  %v1070 = vpop.f32.mrb[0].mxu0
  %v1071 = vpop.f32.mrb[0].mxu0
  %v1072 = vpop.f32.mrb[0].mxu0
  %1073 = vdwg.mxu0
  %1076 = vrot.lane.b32.xlu0 %v581, 8
  %v1077 = vpop.permute.xlu0 %1076
  %1078 = vrot.lane.b32.xlu0 %v629, 8
  %v1079 = vpop.permute.xlu0 %1078
  %1084 = vrot.lane.b32.xlu0 %v801, 16
  %v1085 = vpop.permute.xlu0 %1084
  %1086 = vrot.lane.b32.xlu0 %v849, 16
  %v1087 = vpop.permute.xlu0 %1086
  %1092 = vrot.lane.b32.xlu0 %v1021, 24
  %v1093 = vpop.permute.xlu0 %1092
  %1094 = vrot.lane.b32.xlu0 %v1069, 24
  %v1095 = vpop.permute.xlu0 %1094
  %v1098 = vsel %vm198, %v361, %v1077
  %v1099 = vsel %vm198, %v409, %v1079
  %vm1100 = vcmask 130048
  %v1101 = vsel %vm1100, %v1098, %v1085
  %v1102 = vsel %vm1100, %v1099, %v1087
  %vm1103 = vcmask 195584
  %v1104 = vsel %vm1103, %v1101, %v1093
  %v1105 = vsel %vm1103, %v1102, %v1095
  %v1106 = vpack.c.bf16 %v1105, %v1104
  %v1107 = vld [vmem:[%s6] sm:$0xf]
  %v1108 = vld [vmem:[%s6 + $0x4] sm:$0xf]
  %v1109 = vld [vmem:[%s6 + $0x8] sm:$0xf]
  %v1110 = vld [vmem:[%s6 + $0xc] sm:$0xf]
  %v1111 = vld [vmem:[%s7] sm:$0x1]
  %v1113 = vlaneseq
  %v1114 = vshrl.u32 %v1113, 7
  %v1115 = vsub.s32 0, %v1114
  %v1116 = vrot.slane %v1111, %v1115
  %v1122 = vunpack.c.l.b16 %v1107
  %v1123 = vunpack.c.l.b16 %v1108
  %v1124 = vunpack.c.l.b16 %v1109
  %v1125 = vunpack.c.l.b16 %v1110
  %v1126 = vpack.c.b16 %v1123, %v1122
  %v1127 = vpack.c.b16 %v1125, %v1124
  %v1131 = vsel %vm64, %v1106, 0
  %1133 = vmatprep.subr.bf16.mxu0 0
  %1134 = vmatpush1.bf16.msra.mxu0 %v1126
  %1135 = vmatprep.subr.bf16.mxu0 0
  %1136 = vmatpush1.bf16.msra.mxu0 %v1127
  %1137 = vmatprep.subr.bf16.mxu0 0
  %1138 = vmatpush1.bf16.msra.mxu0 0
  %1139 = vmatprep.subr.bf16.mxu0 0
  %1140 = vmatpush1.bf16.msra.mxu0 0
  %1141 = vmatprep.subr.bf16.mxu0 0
  %1142 = vmatpush1.bf16.msra.mxu0 0
  %1143 = vmatprep.subr.bf16.mxu0 0
  %1144 = vmatpush1.bf16.msra.mxu0 0
  %1145 = vmatprep.subr.bf16.mxu0 0
  %1146 = vmatpush1.bf16.msra.mxu0 0
  %1147 = vmatprep.subr.bf16.mxu0 0
  %1148 = vmatpush1.bf16.msra.mxu0 0
  %1149 = vmatprep.subr.bf16.mxu0 0
  %1150 = vmatpush1.bf16.msra.mxu0 0
  %1151 = vmatprep.subr.bf16.mxu0 0
  %1152 = vmatpush1.bf16.msra.mxu0 0
  %1153 = vmatprep.subr.bf16.mxu0 0
  %1154 = vmatpush1.bf16.msra.mxu0 0
  %1155 = vmatprep.subr.bf16.mxu0 0
  %1156 = vmatpush1.bf16.msra.mxu0 0
  %1157 = vmatprep.subr.bf16.mxu0 0
  %1158 = vmatpush1.bf16.msra.mxu0 0
  %1159 = vmatprep.subr.bf16.mxu0 0
  %1160 = vmatpush1.bf16.msra.mxu0 0
  %1161 = vmatprep.subr.bf16.mxu0 0
  %1162 = vmatpush1.bf16.msra.mxu0 0
  %1163 = vmatprep.subr.bf16.mxu0 0
  %1164 = vmatpush1.bf16.msra.mxu0 0
  %1165 = vmatprep.mubr.bf16.mxu0 0
  %1166 = vmatmul.mubr.bf16.gmra.mrb[0].mxu0 %v1131
  %v1167 = vpop.f32.mrb[0].mxu0
  %v1168 = vadd.f32 %v1116, %v1167
  %v1169 = vpop.f32.mrb[0].mxu0
  %v1170 = vpop.f32.mrb[0].mxu0
  %v1171 = vadd.f32 %v1116, %v1170
  %v1172 = vpop.f32.mrb[0].mxu0
  %1173 = vdwg.mxu0
  %v1174 = vadd.f32 %v106, %v1168
  %v1175 = vadd.f32 %v107, %v1171
  %v1176 = vld [vmem:[%s8] sm:$0x1]
  %v1177 = vld [vmem:[%s9] sm:$0x1]
  %v1178 = vsel %vm64, %v1174, 0.0
  %1179 = vadd.xlane.f32.xlu0 %v1178
  %v1180 = vpop.xlane.xlu0 %1179
  %v1181 = vsel %vm64, %v1175, 0.0
  %1182 = vadd.xlane.f32.xlu0 %v1181
  %v1183 = vpop.xlane.xlu0 %1182
  %v1184 = vmul.f32 %v1180, %v71
  %v1185 = vmul.f32 %v1183, %v71
  %v1186 = vsub.f32 %v1174, %v1184
  %v1187 = vsub.f32 %v1175, %v1185
  %v1188 = vmul.f32 %v1186, %v1186
  %v1189 = vmul.f32 %v1187, %v1187
  %v1190 = vsel %vm64, %v1188, 0.0
  %1191 = vadd.xlane.f32.xlu0 %v1190
  %v1192 = vpop.xlane.xlu0 %1191
  %v1193 = vsel %vm64, %v1189, 0.0
  %1194 = vadd.xlane.f32.xlu0 %v1193
  %v1195 = vpop.xlane.xlu0 %1194
  %v1196 = vmul.f32 %v1192, %v71
  %v1197 = vmul.f32 %v1195, %v71
  %v1198 = vadd.f32 %v1196, 1e-12
  %v1199 = vadd.f32 %v1197, 1e-12
  %v1200 = vrsqrt.pop %v1198
  %v1201 = vrsqrt.pop %v1199
  %v1202 = vmul.f32 %v1186, %v1200
  %v1203 = vmul.f32 %v1187, %v1201
  %v1205 = vlaneseq
  %v1206 = vshrl.u32 %v1205, 7
  %v1207 = vsub.s32 0, %v1206
  %v1208 = vrot.slane %v1176, %v1207
  %v1210 = vmul.f32 %v1202, %v1208
  %v1211 = vmul.f32 %v1203, %v1208
  %v1213 = vlaneseq
  %v1214 = vshrl.u32 %v1213, 7
  %v1215 = vsub.s32 0, %v1214
  %v1216 = vrot.slane %v1177, %v1215
  %v1218 = vadd.f32 %v1210, %v1216
  %v1219 = vadd.f32 %v1211, %v1216
  %v1220 = vpack.c.bf16 %v1219, %v1218
  %v1221 = vld [vmem:[%s10] sm:$0xf]
  %v1222 = vld [vmem:[%s10 + $0x4] sm:$0xf]
  %v1223 = vld [vmem:[%s10 + $0x8] sm:$0xf]
  %v1224 = vld [vmem:[%s10 + $0xc] sm:$0xf]
  %v1225 = vld [vmem:[%s11] sm:$0x1]
  %v1227 = vlaneseq
  %v1228 = vshrl.u32 %v1227, 7
  %v1229 = vsub.s32 0, %v1228
  %v1230 = vrot.slane %v1225, %v1229
  %v1236 = vunpack.c.l.b16 %v1221
  %v1237 = vunpack.c.l.b16 %v1222
  %v1238 = vunpack.c.l.b16 %v1223
  %v1239 = vunpack.c.l.b16 %v1224
  %v1240 = vpack.c.b16 %v1237, %v1236
  %v1241 = vpack.c.b16 %v1239, %v1238
  %v1245 = vsel %vm64, %v1220, 0
  %1247 = vmatprep.subr.bf16.mxu0 0
  %1248 = vmatpush1.bf16.msra.mxu0 %v1240
  %1249 = vmatprep.subr.bf16.mxu0 0
  %1250 = vmatpush1.bf16.msra.mxu0 %v1241
  %1251 = vmatprep.subr.bf16.mxu0 0
  %1252 = vmatpush1.bf16.msra.mxu0 0
  %1253 = vmatprep.subr.bf16.mxu0 0
  %1254 = vmatpush1.bf16.msra.mxu0 0
  %1255 = vmatprep.subr.bf16.mxu0 0
  %1256 = vmatpush1.bf16.msra.mxu0 0
  %1257 = vmatprep.subr.bf16.mxu0 0
  %1258 = vmatpush1.bf16.msra.mxu0 0
  %1259 = vmatprep.subr.bf16.mxu0 0
  %1260 = vmatpush1.bf16.msra.mxu0 0
  %1261 = vmatprep.subr.bf16.mxu0 0
  %1262 = vmatpush1.bf16.msra.mxu0 0
  %1263 = vmatprep.subr.bf16.mxu0 0
  %1264 = vmatpush1.bf16.msra.mxu0 0
  %1265 = vmatprep.subr.bf16.mxu0 0
  %1266 = vmatpush1.bf16.msra.mxu0 0
  %1267 = vmatprep.subr.bf16.mxu0 0
  %1268 = vmatpush1.bf16.msra.mxu0 0
  %1269 = vmatprep.subr.bf16.mxu0 0
  %1270 = vmatpush1.bf16.msra.mxu0 0
  %1271 = vmatprep.subr.bf16.mxu0 0
  %1272 = vmatpush1.bf16.msra.mxu0 0
  %1273 = vmatprep.subr.bf16.mxu0 0
  %1274 = vmatpush1.bf16.msra.mxu0 0
  %1275 = vmatprep.subr.bf16.mxu0 0
  %1276 = vmatpush1.bf16.msra.mxu0 0
  %1277 = vmatprep.subr.bf16.mxu0 0
  %1278 = vmatpush1.bf16.msra.mxu0 0
  %1279 = vmatprep.mubr.bf16.mxu0 0
  %1280 = vmatmul.mubr.bf16.gmra.mrb[0].mxu0 %v1245
  %v1281 = vpop.f32.mrb[0].mxu0
  %v1282 = vadd.f32 %v1230, %v1281
  %v1283 = vpop.f32.mrb[0].mxu0
  %v1284 = vpop.f32.mrb[0].mxu0
  %v1285 = vadd.f32 %v1230, %v1284
  %v1286 = vpop.f32.mrb[0].mxu0
  %1287 = vdwg.mxu0
  %v1288 = vmul.f32 %v1282, 0.5
  %v1289 = vmul.f32 %v1285, 0.5
  %v1290 = vmul.f32 %v1282, 0.044715
  %v1291 = vmul.f32 %v1285, 0.044715
  %v1292 = vmul.f32 %v1290, %v1282
  %v1293 = vmul.f32 %v1291, %v1285
  %v1294 = vmul.f32 %v1292, %v1282
  %v1295 = vmul.f32 %v1293, %v1285
  %v1296 = vadd.f32 %v1282, %v1294
  %v1297 = vadd.f32 %v1285, %v1295
  %v1298 = vmul.f32 %v1296, 0.7978846
  %v1299 = vmul.f32 %v1297, 0.7978846
  %v1300 = vtanh.pop %v1298
  %v1301 = vtanh.pop %v1299
  %v1302 = vadd.f32 %v1300, 1.0
  %v1303 = vadd.f32 %v1301, 1.0
  %v1304 = vmul.f32 %v1288, %v1302
  %v1305 = vmul.f32 %v1289, %v1303
  %v1306 = vpack.c.bf16 %v1305, %v1304
  %v1307 = vld [vmem:[%s12] sm:$0xf]
  %v1308 = vld [vmem:[%s12 + $0x4] sm:$0xf]
  %v1309 = vld [vmem:[%s12 + $0x8] sm:$0xf]
  %v1310 = vld [vmem:[%s12 + $0xc] sm:$0xf]
  %v1311 = vld [vmem:[%s12 + $0x10] sm:$0xf]
  %v1312 = vld [vmem:[%s12 + $0x14] sm:$0xf]
  %v1313 = vld [vmem:[%s12 + $0x18] sm:$0xf]
  %v1314 = vld [vmem:[%s12 + $0x1c] sm:$0xf]
  %v1315 = vld [vmem:[%s13] sm:$0x1]
  %v1317 = vlaneseq
  %v1318 = vshrl.u32 %v1317, 7
  %v1319 = vsub.s32 0, %v1318
  %v1320 = vrot.slane %v1315, %v1319
  %v1330 = vunpack.c.l.b16 %v1307
  %v1331 = vunpack.c.l.b16 %v1308
  %v1332 = vunpack.c.l.b16 %v1309
  %v1333 = vunpack.c.l.b16 %v1310
  %v1334 = vunpack.c.l.b16 %v1311
  %v1335 = vunpack.c.l.b16 %v1312
  %v1336 = vunpack.c.l.b16 %v1313
  %v1337 = vunpack.c.l.b16 %v1314
  %v1338 = vpack.c.b16 %v1331, %v1330
  %v1339 = vpack.c.b16 %v1333, %v1332
  %v1340 = vpack.c.b16 %v1335, %v1334
  %v1341 = vpack.c.b16 %v1337, %v1336
  %vm1346 = vcmask 523264
  %v1348 = vsel %vm1346, %v1306, 0
  %1350 = vmatprep.subr.bf16.mxu0 0
  %1351 = vmatpush1.bf16.msra.mxu0 %v1338
  %1352 = vmatprep.subr.bf16.mxu0 0
  %1353 = vmatpush1.bf16.msra.mxu0 %v1339
  %1354 = vmatprep.subr.bf16.mxu0 0
  %1355 = vmatpush1.bf16.msra.mxu0 %v1340
  %1356 = vmatprep.subr.bf16.mxu0 0
  %1357 = vmatpush1.bf16.msra.mxu0 %v1341
  %1358 = vmatprep.subr.bf16.mxu0 0
  %1359 = vmatpush1.bf16.msra.mxu0 0
  %1360 = vmatprep.subr.bf16.mxu0 0
  %1361 = vmatpush1.bf16.msra.mxu0 0
  %1362 = vmatprep.subr.bf16.mxu0 0
  %1363 = vmatpush1.bf16.msra.mxu0 0
  %1364 = vmatprep.subr.bf16.mxu0 0
  %1365 = vmatpush1.bf16.msra.mxu0 0
  %1366 = vmatprep.subr.bf16.mxu0 0
  %1367 = vmatpush1.bf16.msra.mxu0 0
  %1368 = vmatprep.subr.bf16.mxu0 0
  %1369 = vmatpush1.bf16.msra.mxu0 0
  %1370 = vmatprep.subr.bf16.mxu0 0
  %1371 = vmatpush1.bf16.msra.mxu0 0
  %1372 = vmatprep.subr.bf16.mxu0 0
  %1373 = vmatpush1.bf16.msra.mxu0 0
  %1374 = vmatprep.subr.bf16.mxu0 0
  %1375 = vmatpush1.bf16.msra.mxu0 0
  %1376 = vmatprep.subr.bf16.mxu0 0
  %1377 = vmatpush1.bf16.msra.mxu0 0
  %1378 = vmatprep.subr.bf16.mxu0 0
  %1379 = vmatpush1.bf16.msra.mxu0 0
  %1380 = vmatprep.subr.bf16.mxu0 0
  %1381 = vmatpush1.bf16.msra.mxu0 0
  %1382 = vmatprep.mubr.bf16.mxu0 0
  %1383 = vmatmul.mubr.bf16.gmra.mrb[0].mxu0 %v1348
  %v1384 = vpop.f32.mrb[0].mxu0
  %v1385 = vadd.f32 %v1320, %v1384
  %v1386 = vpop.f32.mrb[0].mxu0
  %v1387 = vpop.f32.mrb[0].mxu0
  %v1388 = vadd.f32 %v1320, %v1387
  %v1389 = vpop.f32.mrb[0].mxu0
  %1390 = vdwg.mxu0
  %v1391 = vadd.f32 %v1218, %v1385
  %v1392 = vadd.f32 %v1219, %v1388
  %v1393 = vld [vmem:[%s14] sm:$0x1]
  %v1394 = vld [vmem:[%s15] sm:$0x1]
  %v1395 = vsel %vm64, %v1391, 0.0
  %1396 = vadd.xlane.f32.xlu0 %v1395
  %v1397 = vpop.xlane.xlu0 %1396
  %v1398 = vsel %vm64, %v1392, 0.0
  %1399 = vadd.xlane.f32.xlu0 %v1398
  %v1400 = vpop.xlane.xlu0 %1399
  %v1401 = vmul.f32 %v1397, %v71
  %v1402 = vmul.f32 %v1400, %v71
  %v1403 = vsub.f32 %v1391, %v1401
  %v1404 = vsub.f32 %v1392, %v1402
  %v1405 = vmul.f32 %v1403, %v1403
  %v1406 = vmul.f32 %v1404, %v1404
  %v1407 = vsel %vm64, %v1405, 0.0
  %1408 = vadd.xlane.f32.xlu0 %v1407
  %v1409 = vpop.xlane.xlu0 %1408
  %v1410 = vsel %vm64, %v1406, 0.0
  %1411 = vadd.xlane.f32.xlu0 %v1410
  %v1412 = vpop.xlane.xlu0 %1411
  %v1413 = vmul.f32 %v1409, %v71
  %v1414 = vmul.f32 %v1412, %v71
  %v1415 = vadd.f32 %v1413, 1e-12
  %v1416 = vadd.f32 %v1414, 1e-12
  %v1417 = vrsqrt.pop %v1415
  %v1418 = vrsqrt.pop %v1416
  %v1419 = vmul.f32 %v1403, %v1417
  %v1420 = vmul.f32 %v1404, %v1418
  %v1422 = vlaneseq
  %v1423 = vshrl.u32 %v1422, 7
  %v1424 = vsub.s32 0, %v1423
  %v1425 = vrot.slane %v1393, %v1424
  %v1427 = vmul.f32 %v1419, %v1425
  %v1428 = vmul.f32 %v1420, %v1425
  %v1430 = vlaneseq
  %v1431 = vshrl.u32 %v1430, 7
  %v1432 = vsub.s32 0, %v1431
  %v1433 = vrot.slane %v1394, %v1432
  %v1435 = vadd.f32 %v1427, %v1433
  %v1436 = vadd.f32 %v1428, %v1433
  %v1437 = vpack.c.bf16 %v1436, %v1435
  %s1438 = scalar_lea.vmem %s4, 16
  %v1439 = vld [vmem:[%s1438] sm:$0xf]
  %v1440 = vld [vmem:[%s1438 + $0x4] sm:$0xf]
  %v1441 = vld [vmem:[%s1438 + $0x8] sm:$0xf]
  %v1442 = vld [vmem:[%s1438 + $0xc] sm:$0xf]
  %s1443 = scalar_lea.vmem %s5, 1
  %v1444 = vld [vmem:[%s1443] sm:$0x1]
  %v1446 = vlaneseq
  %v1447 = vshrl.u32 %v1446, 7
  %v1448 = vsub.s32 0, %v1447
  %v1449 = vrot.slane %v1444, %v1448
  %v1455 = vunpack.c.l.b16 %v1439
  %v1456 = vunpack.c.l.b16 %v1440
  %v1457 = vunpack.c.l.b16 %v1441
  %v1458 = vunpack.c.l.b16 %v1442
  %v1459 = vpack.c.b16 %v1456, %v1455
  %v1460 = vpack.c.b16 %v1458, %v1457
  %v1464 = vsel %vm64, %v1437, 0
  %1466 = vmatprep.subr.bf16.mxu0 0
  %1467 = vmatpush1.bf16.msra.mxu0 %v1459
  %1468 = vmatprep.subr.bf16.mxu0 0
  %1469 = vmatpush1.bf16.msra.mxu0 %v1460
  %1470 = vmatprep.subr.bf16.mxu0 0
  %1471 = vmatpush1.bf16.msra.mxu0 0
  %1472 = vmatprep.subr.bf16.mxu0 0
  %1473 = vmatpush1.bf16.msra.mxu0 0
  %1474 = vmatprep.subr.bf16.mxu0 0
  %1475 = vmatpush1.bf16.msra.mxu0 0
  %1476 = vmatprep.subr.bf16.mxu0 0
  %1477 = vmatpush1.bf16.msra.mxu0 0
  %1478 = vmatprep.subr.bf16.mxu0 0
  %1479 = vmatpush1.bf16.msra.mxu0 0
  %1480 = vmatprep.subr.bf16.mxu0 0
  %1481 = vmatpush1.bf16.msra.mxu0 0
  %1482 = vmatprep.subr.bf16.mxu0 0
  %1483 = vmatpush1.bf16.msra.mxu0 0
  %1484 = vmatprep.subr.bf16.mxu0 0
  %1485 = vmatpush1.bf16.msra.mxu0 0
  %1486 = vmatprep.subr.bf16.mxu0 0
  %1487 = vmatpush1.bf16.msra.mxu0 0
  %1488 = vmatprep.subr.bf16.mxu0 0
  %1489 = vmatpush1.bf16.msra.mxu0 0
  %1490 = vmatprep.subr.bf16.mxu0 0
  %1491 = vmatpush1.bf16.msra.mxu0 0
  %1492 = vmatprep.subr.bf16.mxu0 0
  %1493 = vmatpush1.bf16.msra.mxu0 0
  %1494 = vmatprep.subr.bf16.mxu0 0
  %1495 = vmatpush1.bf16.msra.mxu0 0
  %1496 = vmatprep.subr.bf16.mxu0 0
  %1497 = vmatpush1.bf16.msra.mxu0 0
  %1498 = vmatprep.mubr.bf16.mxu0 0
  %1499 = vmatmul.mubr.bf16.gmra.mrb[0].mxu0 %v1464
  %v1500 = vpop.f32.mrb[0].mxu0
  %v1501 = vadd.f32 %v1449, %v1500
  %v1502 = vpop.f32.mrb[0].mxu0
  %v1503 = vpop.f32.mrb[0].mxu0
  %v1504 = vadd.f32 %v1449, %v1503
  %v1505 = vpop.f32.mrb[0].mxu0
  %1506 = vdwg.mxu0
  %v1507 = vpack.c.bf16 %v1504, %v1501
  %v1509 = vunpack.c.l.b16 %v1507
  %v1510 = vunpack.c.h.b16 %v1507
  %v1511 = vpack.c.b16 %v1509, %v1509
  %v1512 = vpack.c.b16 %v1510, %v1510
  %1513 = vrot.lane.b32.xlu0 %v1511, 96
  %v1514 = vpop.permute.xlu0 %1513
  %v1516 = vsel %vm198, %v1511, 0
  %v1519 = vsel %vm198, %v1514, 0
  %1521 = vmatprep.subr.bf16.mxu0 0
  %1522 = vmatpush1.bf16.xpose.msra.mxu0 %v1519
  %1523 = vmatprep.subr.bf16.mxu0 0
  %1524 = vmatpush1.bf16.xpose.msra.mxu0 0
  %1525 = vmatprep.subr.bf16.mxu0 0
  %1526 = vmatpush1.bf16.xpose.msra.mxu0 0
  %1527 = vmatprep.subr.bf16.mxu0 0
  %1528 = vmatpush1.bf16.xpose.msra.mxu0 0
  %1529 = vmatprep.subr.bf16.mxu0 0
  %1530 = vmatpush1.bf16.xpose.msra.mxu0 0
  %1531 = vmatprep.subr.bf16.mxu0 0
  %1532 = vmatpush1.bf16.xpose.msra.mxu0 0
  %1533 = vmatprep.subr.bf16.mxu0 0
  %1534 = vmatpush1.bf16.xpose.msra.mxu0 0
  %1535 = vmatprep.subr.bf16.mxu0 0
  %1536 = vmatpush1.bf16.xpose.msra.mxu0 0
  %1537 = vmatprep.subr.bf16.mxu0 0
  %1538 = vmatpush1.bf16.xpose.msra.mxu0 0
  %1539 = vmatprep.subr.bf16.mxu0 0
  %1540 = vmatpush1.bf16.xpose.msra.mxu0 0
  %1541 = vmatprep.subr.bf16.mxu0 0
  %1542 = vmatpush1.bf16.xpose.msra.mxu0 0
  %1543 = vmatprep.subr.bf16.mxu0 0
  %1544 = vmatpush1.bf16.xpose.msra.mxu0 0
  %1545 = vmatprep.subr.bf16.mxu0 0
  %1546 = vmatpush1.bf16.xpose.msra.mxu0 0
  %1547 = vmatprep.subr.bf16.mxu0 0
  %1548 = vmatpush1.bf16.xpose.msra.mxu0 0
  %1549 = vmatprep.subr.bf16.mxu0 0
  %1550 = vmatpush1.bf16.xpose.msra.mxu0 0
  %1551 = vmatprep.subr.bf16.mxu0 0
  %1552 = vmatpush1.bf16.xpose.msra.mxu0 0
  %1553 = vmatprep.mubr.bf16.mxu0 0
  %1554 = vmatmul.mubr.bf16.gmra.mrb[0].mxu0 %v1516
  %v1555 = vpop.f32.mrb[0].mxu0
  %v1556 = vadd.f32 %v189, %v1555
  %v1557 = vpop.f32.mrb[0].mxu0
  %v1558 = vpop.f32.mrb[0].mxu0
  %v1559 = vpop.f32.mrb[0].mxu0
  %1560 = vdwg.mxu0
  %1561 = vrot.lane.b32.xlu0 %v1512, 96
  %v1562 = vpop.permute.xlu0 %1561
  %v1564 = vsel %vm198, %v1512, 0
  %v1567 = vsel %vm198, %v1562, 0
  %1569 = vmatprep.subr.bf16.mxu0 0
  %1570 = vmatpush1.bf16.xpose.msra.mxu0 %v1567
  %1571 = vmatprep.subr.bf16.mxu0 0
  %1572 = vmatpush1.bf16.xpose.msra.mxu0 0
  %1573 = vmatprep.subr.bf16.mxu0 0
  %1574 = vmatpush1.bf16.xpose.msra.mxu0 0
  %1575 = vmatprep.subr.bf16.mxu0 0
  %1576 = vmatpush1.bf16.xpose.msra.mxu0 0
  %1577 = vmatprep.subr.bf16.mxu0 0
  %1578 = vmatpush1.bf16.xpose.msra.mxu0 0
  %1579 = vmatprep.subr.bf16.mxu0 0
  %1580 = vmatpush1.bf16.xpose.msra.mxu0 0
  %1581 = vmatprep.subr.bf16.mxu0 0
  %1582 = vmatpush1.bf16.xpose.msra.mxu0 0
  %1583 = vmatprep.subr.bf16.mxu0 0
  %1584 = vmatpush1.bf16.xpose.msra.mxu0 0
  %1585 = vmatprep.subr.bf16.mxu0 0
  %1586 = vmatpush1.bf16.xpose.msra.mxu0 0
  %1587 = vmatprep.subr.bf16.mxu0 0
  %1588 = vmatpush1.bf16.xpose.msra.mxu0 0
  %1589 = vmatprep.subr.bf16.mxu0 0
  %1590 = vmatpush1.bf16.xpose.msra.mxu0 0
  %1591 = vmatprep.subr.bf16.mxu0 0
  %1592 = vmatpush1.bf16.xpose.msra.mxu0 0
  %1593 = vmatprep.subr.bf16.mxu0 0
  %1594 = vmatpush1.bf16.xpose.msra.mxu0 0
  %1595 = vmatprep.subr.bf16.mxu0 0
  %1596 = vmatpush1.bf16.xpose.msra.mxu0 0
  %1597 = vmatprep.subr.bf16.mxu0 0
  %1598 = vmatpush1.bf16.xpose.msra.mxu0 0
  %1599 = vmatprep.subr.bf16.mxu0 0
  %1600 = vmatpush1.bf16.xpose.msra.mxu0 0
  %1601 = vmatprep.mubr.bf16.mxu0 0
  %1602 = vmatmul.mubr.bf16.gmra.mrb[0].mxu0 %v1564
  %v1603 = vpop.f32.mrb[0].mxu0
  %v1604 = vadd.f32 %v193, %v1603
  %v1605 = vpop.f32.mrb[0].mxu0
  %v1606 = vpop.f32.mrb[0].mxu0
  %v1607 = vpop.f32.mrb[0].mxu0
  %1608 = vdwg.mxu0
  %v1609 = vsel %vm198, %v1556, -inf
  %1610 = vmax.xlane.f32.xlu0 %v1609
  %v1611 = vpop.xlane.xlu0 %1610
  %v1612 = vsel %vm198, %v1604, -inf
  %1613 = vmax.xlane.f32.xlu0 %v1612
  %v1614 = vpop.xlane.xlu0 %1613
  %v1615 = vsub.f32 %v1556, %v1611
  %v1616 = vsub.f32 %v1604, %v1614
  %v1617 = vmul.f32 %v1615, 1.442695
  %v1618 = vpow.pop %v1617
  %v1619 = vmul.f32 %v1616, 1.442695
  %v1620 = vpow.pop %v1619
  %v1621 = vsel %vm198, %v1618, 0.0
  %1622 = vadd.xlane.f32.xlu0 %v1621
  %v1623 = vpop.xlane.xlu0 %1622
  %v1624 = vsel %vm198, %v1620, 0.0
  %1625 = vadd.xlane.f32.xlu0 %v1624
  %v1626 = vpop.xlane.xlu0 %1625
  %v1627 = vrcp.pop %v1623
  %v1628 = vrcp.pop %v1626
  %v1629 = vmul.f32 %v1618, %v1627
  %v1630 = vmul.f32 %v1620, %v1628
  %v1631 = vpack.c.bf16 %v1629, %v1629
  %v1632 = vpack.c.bf16 %v1630, %v1630
  %1633 = vrot.lane.b32.xlu0 %v1511, 64
  %v1634 = vpop.permute.xlu0 %1633
  %v1636 = vsel %vm198, %v1631, 0
  %v1639 = vsel %vm322, %v1634, 0
  %1641 = vmatprep.subr.bf16.mxu0 0
  %1642 = vmatpush1.bf16.msra.mxu0 %v1639
  %1643 = vmatprep.subr.bf16.mxu0 0
  %1644 = vmatpush1.bf16.msra.mxu0 0
  %1645 = vmatprep.subr.bf16.mxu0 0
  %1646 = vmatpush1.bf16.msra.mxu0 0
  %1647 = vmatprep.subr.bf16.mxu0 0
  %1648 = vmatpush1.bf16.msra.mxu0 0
  %1649 = vmatprep.subr.bf16.mxu0 0
  %1650 = vmatpush1.bf16.msra.mxu0 0
  %1651 = vmatprep.subr.bf16.mxu0 0
  %1652 = vmatpush1.bf16.msra.mxu0 0
  %1653 = vmatprep.subr.bf16.mxu0 0
  %1654 = vmatpush1.bf16.msra.mxu0 0
  %1655 = vmatprep.subr.bf16.mxu0 0
  %1656 = vmatpush1.bf16.msra.mxu0 0
  %1657 = vmatprep.subr.bf16.mxu0 0
  %1658 = vmatpush1.bf16.msra.mxu0 0
  %1659 = vmatprep.subr.bf16.mxu0 0
  %1660 = vmatpush1.bf16.msra.mxu0 0
  %1661 = vmatprep.subr.bf16.mxu0 0
  %1662 = vmatpush1.bf16.msra.mxu0 0
  %1663 = vmatprep.subr.bf16.mxu0 0
  %1664 = vmatpush1.bf16.msra.mxu0 0
  %1665 = vmatprep.subr.bf16.mxu0 0
  %1666 = vmatpush1.bf16.msra.mxu0 0
  %1667 = vmatprep.subr.bf16.mxu0 0
  %1668 = vmatpush1.bf16.msra.mxu0 0
  %1669 = vmatprep.subr.bf16.mxu0 0
  %1670 = vmatpush1.bf16.msra.mxu0 0
  %1671 = vmatprep.subr.bf16.mxu0 0
  %1672 = vmatpush1.bf16.msra.mxu0 0
  %1673 = vmatprep.mubr.bf16.mxu0 0
  %1674 = vmatmul.mubr.bf16.gmra.mrb[0].mxu0 %v1636
  %v1675 = vpop.f32.mrb[0].mxu0
  %v1676 = vadd.f32 0.0, %v1675
  %v1677 = vpop.f32.mrb[0].mxu0
  %v1678 = vpop.f32.mrb[0].mxu0
  %v1679 = vpop.f32.mrb[0].mxu0
  %1680 = vdwg.mxu0
  %1681 = vrot.lane.b32.xlu0 %v1512, 64
  %v1682 = vpop.permute.xlu0 %1681
  %v1684 = vsel %vm198, %v1632, 0
  %v1687 = vsel %vm322, %v1682, 0
  %1689 = vmatprep.subr.bf16.mxu0 0
  %1690 = vmatpush1.bf16.msra.mxu0 %v1687
  %1691 = vmatprep.subr.bf16.mxu0 0
  %1692 = vmatpush1.bf16.msra.mxu0 0
  %1693 = vmatprep.subr.bf16.mxu0 0
  %1694 = vmatpush1.bf16.msra.mxu0 0
  %1695 = vmatprep.subr.bf16.mxu0 0
  %1696 = vmatpush1.bf16.msra.mxu0 0
  %1697 = vmatprep.subr.bf16.mxu0 0
  %1698 = vmatpush1.bf16.msra.mxu0 0
  %1699 = vmatprep.subr.bf16.mxu0 0
  %1700 = vmatpush1.bf16.msra.mxu0 0
  %1701 = vmatprep.subr.bf16.mxu0 0
  %1702 = vmatpush1.bf16.msra.mxu0 0
  %1703 = vmatprep.subr.bf16.mxu0 0
  %1704 = vmatpush1.bf16.msra.mxu0 0
  %1705 = vmatprep.subr.bf16.mxu0 0
  %1706 = vmatpush1.bf16.msra.mxu0 0
  %1707 = vmatprep.subr.bf16.mxu0 0
  %1708 = vmatpush1.bf16.msra.mxu0 0
  %1709 = vmatprep.subr.bf16.mxu0 0
  %1710 = vmatpush1.bf16.msra.mxu0 0
  %1711 = vmatprep.subr.bf16.mxu0 0
  %1712 = vmatpush1.bf16.msra.mxu0 0
  %1713 = vmatprep.subr.bf16.mxu0 0
  %1714 = vmatpush1.bf16.msra.mxu0 0
  %1715 = vmatprep.subr.bf16.mxu0 0
  %1716 = vmatpush1.bf16.msra.mxu0 0
  %1717 = vmatprep.subr.bf16.mxu0 0
  %1718 = vmatpush1.bf16.msra.mxu0 0
  %1719 = vmatprep.subr.bf16.mxu0 0
  %1720 = vmatpush1.bf16.msra.mxu0 0
  %1721 = vmatprep.mubr.bf16.mxu0 0
  %1722 = vmatmul.mubr.bf16.gmra.mrb[0].mxu0 %v1684
  %v1723 = vpop.f32.mrb[0].mxu0
  %v1724 = vadd.f32 0.0, %v1723
  %v1725 = vpop.f32.mrb[0].mxu0
  %v1726 = vpop.f32.mrb[0].mxu0
  %v1727 = vpop.f32.mrb[0].mxu0
  %1728 = vdwg.mxu0
  %1729 = vrot.lane.b32.xlu0 %v1511, 120
  %v1730 = vpop.permute.xlu0 %1729
  %1731 = vrot.lane.b32.xlu0 %v1511, 88
  %v1732 = vpop.permute.xlu0 %1731
  %v1734 = vsel %vm198, %v1730, 0
  %v1737 = vsel %vm198, %v1732, 0
  %1739 = vmatprep.subr.bf16.mxu0 0
  %1740 = vmatpush1.bf16.xpose.msra.mxu0 %v1737
  %1741 = vmatprep.subr.bf16.mxu0 0
  %1742 = vmatpush1.bf16.xpose.msra.mxu0 0
  %1743 = vmatprep.subr.bf16.mxu0 0
  %1744 = vmatpush1.bf16.xpose.msra.mxu0 0
  %1745 = vmatprep.subr.bf16.mxu0 0
  %1746 = vmatpush1.bf16.xpose.msra.mxu0 0
  %1747 = vmatprep.subr.bf16.mxu0 0
  %1748 = vmatpush1.bf16.xpose.msra.mxu0 0
  %1749 = vmatprep.subr.bf16.mxu0 0
  %1750 = vmatpush1.bf16.xpose.msra.mxu0 0
  %1751 = vmatprep.subr.bf16.mxu0 0
  %1752 = vmatpush1.bf16.xpose.msra.mxu0 0
  %1753 = vmatprep.subr.bf16.mxu0 0
  %1754 = vmatpush1.bf16.xpose.msra.mxu0 0
  %1755 = vmatprep.subr.bf16.mxu0 0
  %1756 = vmatpush1.bf16.xpose.msra.mxu0 0
  %1757 = vmatprep.subr.bf16.mxu0 0
  %1758 = vmatpush1.bf16.xpose.msra.mxu0 0
  %1759 = vmatprep.subr.bf16.mxu0 0
  %1760 = vmatpush1.bf16.xpose.msra.mxu0 0
  %1761 = vmatprep.subr.bf16.mxu0 0
  %1762 = vmatpush1.bf16.xpose.msra.mxu0 0
  %1763 = vmatprep.subr.bf16.mxu0 0
  %1764 = vmatpush1.bf16.xpose.msra.mxu0 0
  %1765 = vmatprep.subr.bf16.mxu0 0
  %1766 = vmatpush1.bf16.xpose.msra.mxu0 0
  %1767 = vmatprep.subr.bf16.mxu0 0
  %1768 = vmatpush1.bf16.xpose.msra.mxu0 0
  %1769 = vmatprep.subr.bf16.mxu0 0
  %1770 = vmatpush1.bf16.xpose.msra.mxu0 0
  %1771 = vmatprep.mubr.bf16.mxu0 0
  %1772 = vmatmul.mubr.bf16.gmra.mrb[0].mxu0 %v1734
  %v1773 = vpop.f32.mrb[0].mxu0
  %v1774 = vadd.f32 %v189, %v1773
  %v1775 = vpop.f32.mrb[0].mxu0
  %v1776 = vpop.f32.mrb[0].mxu0
  %v1777 = vpop.f32.mrb[0].mxu0
  %1778 = vdwg.mxu0
  %1779 = vrot.lane.b32.xlu0 %v1512, 120
  %v1780 = vpop.permute.xlu0 %1779
  %1781 = vrot.lane.b32.xlu0 %v1512, 88
  %v1782 = vpop.permute.xlu0 %1781
  %v1784 = vsel %vm198, %v1780, 0
  %v1787 = vsel %vm198, %v1782, 0
  %1789 = vmatprep.subr.bf16.mxu0 0
  %1790 = vmatpush1.bf16.xpose.msra.mxu0 %v1787
  %1791 = vmatprep.subr.bf16.mxu0 0
  %1792 = vmatpush1.bf16.xpose.msra.mxu0 0
  %1793 = vmatprep.subr.bf16.mxu0 0
  %1794 = vmatpush1.bf16.xpose.msra.mxu0 0
  %1795 = vmatprep.subr.bf16.mxu0 0
  %1796 = vmatpush1.bf16.xpose.msra.mxu0 0
  %1797 = vmatprep.subr.bf16.mxu0 0
  %1798 = vmatpush1.bf16.xpose.msra.mxu0 0
  %1799 = vmatprep.subr.bf16.mxu0 0
  %1800 = vmatpush1.bf16.xpose.msra.mxu0 0
  %1801 = vmatprep.subr.bf16.mxu0 0
  %1802 = vmatpush1.bf16.xpose.msra.mxu0 0
  %1803 = vmatprep.subr.bf16.mxu0 0
  %1804 = vmatpush1.bf16.xpose.msra.mxu0 0
  %1805 = vmatprep.subr.bf16.mxu0 0
  %1806 = vmatpush1.bf16.xpose.msra.mxu0 0
  %1807 = vmatprep.subr.bf16.mxu0 0
  %1808 = vmatpush1.bf16.xpose.msra.mxu0 0
  %1809 = vmatprep.subr.bf16.mxu0 0
  %1810 = vmatpush1.bf16.xpose.msra.mxu0 0
  %1811 = vmatprep.subr.bf16.mxu0 0
  %1812 = vmatpush1.bf16.xpose.msra.mxu0 0
  %1813 = vmatprep.subr.bf16.mxu0 0
  %1814 = vmatpush1.bf16.xpose.msra.mxu0 0
  %1815 = vmatprep.subr.bf16.mxu0 0
  %1816 = vmatpush1.bf16.xpose.msra.mxu0 0
  %1817 = vmatprep.subr.bf16.mxu0 0
  %1818 = vmatpush1.bf16.xpose.msra.mxu0 0
  %1819 = vmatprep.subr.bf16.mxu0 0
  %1820 = vmatpush1.bf16.xpose.msra.mxu0 0
  %1821 = vmatprep.mubr.bf16.mxu0 0
  %1822 = vmatmul.mubr.bf16.gmra.mrb[0].mxu0 %v1784
  %v1823 = vpop.f32.mrb[0].mxu0
  %v1824 = vadd.f32 %v193, %v1823
  %v1825 = vpop.f32.mrb[0].mxu0
  %v1826 = vpop.f32.mrb[0].mxu0
  %v1827 = vpop.f32.mrb[0].mxu0
  %1828 = vdwg.mxu0
  %v1829 = vsel %vm198, %v1774, -inf
  %1830 = vmax.xlane.f32.xlu0 %v1829
  %v1831 = vpop.xlane.xlu0 %1830
  %v1832 = vsel %vm198, %v1824, -inf
  %1833 = vmax.xlane.f32.xlu0 %v1832
  %v1834 = vpop.xlane.xlu0 %1833
  %v1835 = vsub.f32 %v1774, %v1831
  %v1836 = vsub.f32 %v1824, %v1834
  %v1837 = vmul.f32 %v1835, 1.442695
  %v1838 = vpow.pop %v1837
  %v1839 = vmul.f32 %v1836, 1.442695
  %v1840 = vpow.pop %v1839
  %v1841 = vsel %vm198, %v1838, 0.0
  %1842 = vadd.xlane.f32.xlu0 %v1841
  %v1843 = vpop.xlane.xlu0 %1842
  %v1844 = vsel %vm198, %v1840, 0.0
  %1845 = vadd.xlane.f32.xlu0 %v1844
  %v1846 = vpop.xlane.xlu0 %1845
  %v1847 = vrcp.pop %v1843
  %v1848 = vrcp.pop %v1846
  %v1849 = vmul.f32 %v1838, %v1847
  %v1850 = vmul.f32 %v1840, %v1848
  %v1851 = vpack.c.bf16 %v1849, %v1849
  %v1852 = vpack.c.bf16 %v1850, %v1850
  %1853 = vrot.lane.b32.xlu0 %v1511, 56
  %v1854 = vpop.permute.xlu0 %1853
  %v1856 = vsel %vm198, %v1851, 0
  %v1859 = vsel %vm322, %v1854, 0
  %1861 = vmatprep.subr.bf16.mxu0 0
  %1862 = vmatpush1.bf16.msra.mxu0 %v1859
  %1863 = vmatprep.subr.bf16.mxu0 0
  %1864 = vmatpush1.bf16.msra.mxu0 0
  %1865 = vmatprep.subr.bf16.mxu0 0
  %1866 = vmatpush1.bf16.msra.mxu0 0
  %1867 = vmatprep.subr.bf16.mxu0 0
  %1868 = vmatpush1.bf16.msra.mxu0 0
  %1869 = vmatprep.subr.bf16.mxu0 0
  %1870 = vmatpush1.bf16.msra.mxu0 0
  %1871 = vmatprep.subr.bf16.mxu0 0
  %1872 = vmatpush1.bf16.msra.mxu0 0
  %1873 = vmatprep.subr.bf16.mxu0 0
  %1874 = vmatpush1.bf16.msra.mxu0 0
  %1875 = vmatprep.subr.bf16.mxu0 0
  %1876 = vmatpush1.bf16.msra.mxu0 0
  %1877 = vmatprep.subr.bf16.mxu0 0
  %1878 = vmatpush1.bf16.msra.mxu0 0
  %1879 = vmatprep.subr.bf16.mxu0 0
  %1880 = vmatpush1.bf16.msra.mxu0 0
  %1881 = vmatprep.subr.bf16.mxu0 0
  %1882 = vmatpush1.bf16.msra.mxu0 0
  %1883 = vmatprep.subr.bf16.mxu0 0
  %1884 = vmatpush1.bf16.msra.mxu0 0
  %1885 = vmatprep.subr.bf16.mxu0 0
  %1886 = vmatpush1.bf16.msra.mxu0 0
  %1887 = vmatprep.subr.bf16.mxu0 0
  %1888 = vmatpush1.bf16.msra.mxu0 0
  %1889 = vmatprep.subr.bf16.mxu0 0
  %1890 = vmatpush1.bf16.msra.mxu0 0
  %1891 = vmatprep.subr.bf16.mxu0 0
  %1892 = vmatpush1.bf16.msra.mxu0 0
  %1893 = vmatprep.mubr.bf16.mxu0 0
  %1894 = vmatmul.mubr.bf16.gmra.mrb[0].mxu0 %v1856
  %v1895 = vpop.f32.mrb[0].mxu0
  %v1896 = vadd.f32 0.0, %v1895
  %v1897 = vpop.f32.mrb[0].mxu0
  %v1898 = vpop.f32.mrb[0].mxu0
  %v1899 = vpop.f32.mrb[0].mxu0
  %1900 = vdwg.mxu0
  %1901 = vrot.lane.b32.xlu0 %v1512, 56
  %v1902 = vpop.permute.xlu0 %1901
  %v1904 = vsel %vm198, %v1852, 0
  %v1907 = vsel %vm322, %v1902, 0
  %1909 = vmatprep.subr.bf16.mxu0 0
  %1910 = vmatpush1.bf16.msra.mxu0 %v1907
  %1911 = vmatprep.subr.bf16.mxu0 0
  %1912 = vmatpush1.bf16.msra.mxu0 0
  %1913 = vmatprep.subr.bf16.mxu0 0
  %1914 = vmatpush1.bf16.msra.mxu0 0
  %1915 = vmatprep.subr.bf16.mxu0 0
  %1916 = vmatpush1.bf16.msra.mxu0 0
  %1917 = vmatprep.subr.bf16.mxu0 0
  %1918 = vmatpush1.bf16.msra.mxu0 0
  %1919 = vmatprep.subr.bf16.mxu0 0
  %1920 = vmatpush1.bf16.msra.mxu0 0
  %1921 = vmatprep.subr.bf16.mxu0 0
  %1922 = vmatpush1.bf16.msra.mxu0 0
  %1923 = vmatprep.subr.bf16.mxu0 0
  %1924 = vmatpush1.bf16.msra.mxu0 0
  %1925 = vmatprep.subr.bf16.mxu0 0
  %1926 = vmatpush1.bf16.msra.mxu0 0
  %1927 = vmatprep.subr.bf16.mxu0 0
  %1928 = vmatpush1.bf16.msra.mxu0 0
  %1929 = vmatprep.subr.bf16.mxu0 0
  %1930 = vmatpush1.bf16.msra.mxu0 0
  %1931 = vmatprep.subr.bf16.mxu0 0
  %1932 = vmatpush1.bf16.msra.mxu0 0
  %1933 = vmatprep.subr.bf16.mxu0 0
  %1934 = vmatpush1.bf16.msra.mxu0 0
  %1935 = vmatprep.subr.bf16.mxu0 0
  %1936 = vmatpush1.bf16.msra.mxu0 0
  %1937 = vmatprep.subr.bf16.mxu0 0
  %1938 = vmatpush1.bf16.msra.mxu0 0
  %1939 = vmatprep.subr.bf16.mxu0 0
  %1940 = vmatpush1.bf16.msra.mxu0 0
  %1941 = vmatprep.mubr.bf16.mxu0 0
  %1942 = vmatmul.mubr.bf16.gmra.mrb[0].mxu0 %v1904
  %v1943 = vpop.f32.mrb[0].mxu0
  %v1944 = vadd.f32 0.0, %v1943
  %v1945 = vpop.f32.mrb[0].mxu0
  %v1946 = vpop.f32.mrb[0].mxu0
  %v1947 = vpop.f32.mrb[0].mxu0
  %1948 = vdwg.mxu0
  %1949 = vrot.lane.b32.xlu0 %v1511, 112
  %v1950 = vpop.permute.xlu0 %1949
  %1951 = vrot.lane.b32.xlu0 %v1511, 80
  %v1952 = vpop.permute.xlu0 %1951
  %v1954 = vsel %vm198, %v1950, 0
  %v1957 = vsel %vm198, %v1952, 0
  %1959 = vmatprep.subr.bf16.mxu0 0
  %1960 = vmatpush1.bf16.xpose.msra.mxu0 %v1957
  %1961 = vmatprep.subr.bf16.mxu0 0
  %1962 = vmatpush1.bf16.xpose.msra.mxu0 0
  %1963 = vmatprep.subr.bf16.mxu0 0
  %1964 = vmatpush1.bf16.xpose.msra.mxu0 0
  %1965 = vmatprep.subr.bf16.mxu0 0
  %1966 = vmatpush1.bf16.xpose.msra.mxu0 0
  %1967 = vmatprep.subr.bf16.mxu0 0
  %1968 = vmatpush1.bf16.xpose.msra.mxu0 0
  %1969 = vmatprep.subr.bf16.mxu0 0
  %1970 = vmatpush1.bf16.xpose.msra.mxu0 0
  %1971 = vmatprep.subr.bf16.mxu0 0
  %1972 = vmatpush1.bf16.xpose.msra.mxu0 0
  %1973 = vmatprep.subr.bf16.mxu0 0
  %1974 = vmatpush1.bf16.xpose.msra.mxu0 0
  %1975 = vmatprep.subr.bf16.mxu0 0
  %1976 = vmatpush1.bf16.xpose.msra.mxu0 0
  %1977 = vmatprep.subr.bf16.mxu0 0
  %1978 = vmatpush1.bf16.xpose.msra.mxu0 0
  %1979 = vmatprep.subr.bf16.mxu0 0
  %1980 = vmatpush1.bf16.xpose.msra.mxu0 0
  %1981 = vmatprep.subr.bf16.mxu0 0
  %1982 = vmatpush1.bf16.xpose.msra.mxu0 0
  %1983 = vmatprep.subr.bf16.mxu0 0
  %1984 = vmatpush1.bf16.xpose.msra.mxu0 0
  %1985 = vmatprep.subr.bf16.mxu0 0
  %1986 = vmatpush1.bf16.xpose.msra.mxu0 0
  %1987 = vmatprep.subr.bf16.mxu0 0
  %1988 = vmatpush1.bf16.xpose.msra.mxu0 0
  %1989 = vmatprep.subr.bf16.mxu0 0
  %1990 = vmatpush1.bf16.xpose.msra.mxu0 0
  %1991 = vmatprep.mubr.bf16.mxu0 0
  %1992 = vmatmul.mubr.bf16.gmra.mrb[0].mxu0 %v1954
  %v1993 = vpop.f32.mrb[0].mxu0
  %v1994 = vadd.f32 %v189, %v1993
  %v1995 = vpop.f32.mrb[0].mxu0
  %v1996 = vpop.f32.mrb[0].mxu0
  %v1997 = vpop.f32.mrb[0].mxu0
  %1998 = vdwg.mxu0
  %1999 = vrot.lane.b32.xlu0 %v1512, 112
  %v2000 = vpop.permute.xlu0 %1999
  %2001 = vrot.lane.b32.xlu0 %v1512, 80
  %v2002 = vpop.permute.xlu0 %2001
  %v2004 = vsel %vm198, %v2000, 0
  %v2007 = vsel %vm198, %v2002, 0
  %2009 = vmatprep.subr.bf16.mxu0 0
  %2010 = vmatpush1.bf16.xpose.msra.mxu0 %v2007
  %2011 = vmatprep.subr.bf16.mxu0 0
  %2012 = vmatpush1.bf16.xpose.msra.mxu0 0
  %2013 = vmatprep.subr.bf16.mxu0 0
  %2014 = vmatpush1.bf16.xpose.msra.mxu0 0
  %2015 = vmatprep.subr.bf16.mxu0 0
  %2016 = vmatpush1.bf16.xpose.msra.mxu0 0
  %2017 = vmatprep.subr.bf16.mxu0 0
  %2018 = vmatpush1.bf16.xpose.msra.mxu0 0
  %2019 = vmatprep.subr.bf16.mxu0 0
  %2020 = vmatpush1.bf16.xpose.msra.mxu0 0
  %2021 = vmatprep.subr.bf16.mxu0 0
  %2022 = vmatpush1.bf16.xpose.msra.mxu0 0
  %2023 = vmatprep.subr.bf16.mxu0 0
  %2024 = vmatpush1.bf16.xpose.msra.mxu0 0
  %2025 = vmatprep.subr.bf16.mxu0 0
  %2026 = vmatpush1.bf16.xpose.msra.mxu0 0
  %2027 = vmatprep.subr.bf16.mxu0 0
  %2028 = vmatpush1.bf16.xpose.msra.mxu0 0
  %2029 = vmatprep.subr.bf16.mxu0 0
  %2030 = vmatpush1.bf16.xpose.msra.mxu0 0
  %2031 = vmatprep.subr.bf16.mxu0 0
  %2032 = vmatpush1.bf16.xpose.msra.mxu0 0
  %2033 = vmatprep.subr.bf16.mxu0 0
  %2034 = vmatpush1.bf16.xpose.msra.mxu0 0
  %2035 = vmatprep.subr.bf16.mxu0 0
  %2036 = vmatpush1.bf16.xpose.msra.mxu0 0
  %2037 = vmatprep.subr.bf16.mxu0 0
  %2038 = vmatpush1.bf16.xpose.msra.mxu0 0
  %2039 = vmatprep.subr.bf16.mxu0 0
  %2040 = vmatpush1.bf16.xpose.msra.mxu0 0
  %2041 = vmatprep.mubr.bf16.mxu0 0
  %2042 = vmatmul.mubr.bf16.gmra.mrb[0].mxu0 %v2004
  %v2043 = vpop.f32.mrb[0].mxu0
  %v2044 = vadd.f32 %v193, %v2043
  %v2045 = vpop.f32.mrb[0].mxu0
  %v2046 = vpop.f32.mrb[0].mxu0
  %v2047 = vpop.f32.mrb[0].mxu0
  %2048 = vdwg.mxu0
  %v2049 = vsel %vm198, %v1994, -inf
  %2050 = vmax.xlane.f32.xlu0 %v2049
  %v2051 = vpop.xlane.xlu0 %2050
  %v2052 = vsel %vm198, %v2044, -inf
  %2053 = vmax.xlane.f32.xlu0 %v2052
  %v2054 = vpop.xlane.xlu0 %2053
  %v2055 = vsub.f32 %v1994, %v2051
  %v2056 = vsub.f32 %v2044, %v2054
  %v2057 = vmul.f32 %v2055, 1.442695
  %v2058 = vpow.pop %v2057
  %v2059 = vmul.f32 %v2056, 1.442695
  %v2060 = vpow.pop %v2059
  %v2061 = vsel %vm198, %v2058, 0.0
  %2062 = vadd.xlane.f32.xlu0 %v2061
  %v2063 = vpop.xlane.xlu0 %2062
  %v2064 = vsel %vm198, %v2060, 0.0
  %2065 = vadd.xlane.f32.xlu0 %v2064
  %v2066 = vpop.xlane.xlu0 %2065
  %v2067 = vrcp.pop %v2063
  %v2068 = vrcp.pop %v2066
  %v2069 = vmul.f32 %v2058, %v2067
  %v2070 = vmul.f32 %v2060, %v2068
  %v2071 = vpack.c.bf16 %v2069, %v2069
  %v2072 = vpack.c.bf16 %v2070, %v2070
  %2073 = vrot.lane.b32.xlu0 %v1511, 48
  %v2074 = vpop.permute.xlu0 %2073
  %v2076 = vsel %vm198, %v2071, 0
  %v2079 = vsel %vm322, %v2074, 0
  %2081 = vmatprep.subr.bf16.mxu0 0
  %2082 = vmatpush1.bf16.msra.mxu0 %v2079
  %2083 = vmatprep.subr.bf16.mxu0 0
  %2084 = vmatpush1.bf16.msra.mxu0 0
  %2085 = vmatprep.subr.bf16.mxu0 0
  %2086 = vmatpush1.bf16.msra.mxu0 0
  %2087 = vmatprep.subr.bf16.mxu0 0
  %2088 = vmatpush1.bf16.msra.mxu0 0
  %2089 = vmatprep.subr.bf16.mxu0 0
  %2090 = vmatpush1.bf16.msra.mxu0 0
  %2091 = vmatprep.subr.bf16.mxu0 0
  %2092 = vmatpush1.bf16.msra.mxu0 0
  %2093 = vmatprep.subr.bf16.mxu0 0
  %2094 = vmatpush1.bf16.msra.mxu0 0
  %2095 = vmatprep.subr.bf16.mxu0 0
  %2096 = vmatpush1.bf16.msra.mxu0 0
  %2097 = vmatprep.subr.bf16.mxu0 0
  %2098 = vmatpush1.bf16.msra.mxu0 0
  %2099 = vmatprep.subr.bf16.mxu0 0
  %2100 = vmatpush1.bf16.msra.mxu0 0
  %2101 = vmatprep.subr.bf16.mxu0 0
  %2102 = vmatpush1.bf16.msra.mxu0 0
  %2103 = vmatprep.subr.bf16.mxu0 0
  %2104 = vmatpush1.bf16.msra.mxu0 0
  %2105 = vmatprep.subr.bf16.mxu0 0
  %2106 = vmatpush1.bf16.msra.mxu0 0
  %2107 = vmatprep.subr.bf16.mxu0 0
  %2108 = vmatpush1.bf16.msra.mxu0 0
  %2109 = vmatprep.subr.bf16.mxu0 0
  %2110 = vmatpush1.bf16.msra.mxu0 0
  %2111 = vmatprep.subr.bf16.mxu0 0
  %2112 = vmatpush1.bf16.msra.mxu0 0
  %2113 = vmatprep.mubr.bf16.mxu0 0
  %2114 = vmatmul.mubr.bf16.gmra.mrb[0].mxu0 %v2076
  %v2115 = vpop.f32.mrb[0].mxu0
  %v2116 = vadd.f32 0.0, %v2115
  %v2117 = vpop.f32.mrb[0].mxu0
  %v2118 = vpop.f32.mrb[0].mxu0
  %v2119 = vpop.f32.mrb[0].mxu0
  %2120 = vdwg.mxu0
  %2121 = vrot.lane.b32.xlu0 %v1512, 48
  %v2122 = vpop.permute.xlu0 %2121
  %v2124 = vsel %vm198, %v2072, 0
  %v2127 = vsel %vm322, %v2122, 0
  %2129 = vmatprep.subr.bf16.mxu0 0
  %2130 = vmatpush1.bf16.msra.mxu0 %v2127
  %2131 = vmatprep.subr.bf16.mxu0 0
  %2132 = vmatpush1.bf16.msra.mxu0 0
  %2133 = vmatprep.subr.bf16.mxu0 0
  %2134 = vmatpush1.bf16.msra.mxu0 0
  %2135 = vmatprep.subr.bf16.mxu0 0
  %2136 = vmatpush1.bf16.msra.mxu0 0
  %2137 = vmatprep.subr.bf16.mxu0 0
  %2138 = vmatpush1.bf16.msra.mxu0 0
  %2139 = vmatprep.subr.bf16.mxu0 0
  %2140 = vmatpush1.bf16.msra.mxu0 0
  %2141 = vmatprep.subr.bf16.mxu0 0
  %2142 = vmatpush1.bf16.msra.mxu0 0
  %2143 = vmatprep.subr.bf16.mxu0 0
  %2144 = vmatpush1.bf16.msra.mxu0 0
  %2145 = vmatprep.subr.bf16.mxu0 0
  %2146 = vmatpush1.bf16.msra.mxu0 0
  %2147 = vmatprep.subr.bf16.mxu0 0
  %2148 = vmatpush1.bf16.msra.mxu0 0
  %2149 = vmatprep.subr.bf16.mxu0 0
  %2150 = vmatpush1.bf16.msra.mxu0 0
  %2151 = vmatprep.subr.bf16.mxu0 0
  %2152 = vmatpush1.bf16.msra.mxu0 0
  %2153 = vmatprep.subr.bf16.mxu0 0
  %2154 = vmatpush1.bf16.msra.mxu0 0
  %2155 = vmatprep.subr.bf16.mxu0 0
  %2156 = vmatpush1.bf16.msra.mxu0 0
  %2157 = vmatprep.subr.bf16.mxu0 0
  %2158 = vmatpush1.bf16.msra.mxu0 0
  %2159 = vmatprep.subr.bf16.mxu0 0
  %2160 = vmatpush1.bf16.msra.mxu0 0
  %2161 = vmatprep.mubr.bf16.mxu0 0
  %2162 = vmatmul.mubr.bf16.gmra.mrb[0].mxu0 %v2124
  %v2163 = vpop.f32.mrb[0].mxu0
  %v2164 = vadd.f32 0.0, %v2163
  %v2165 = vpop.f32.mrb[0].mxu0
  %v2166 = vpop.f32.mrb[0].mxu0
  %v2167 = vpop.f32.mrb[0].mxu0
  %2168 = vdwg.mxu0
  %2169 = vrot.lane.b32.xlu0 %v1511, 104
  %v2170 = vpop.permute.xlu0 %2169
  %2171 = vrot.lane.b32.xlu0 %v1511, 72
  %v2172 = vpop.permute.xlu0 %2171
  %v2174 = vsel %vm198, %v2170, 0
  %v2177 = vsel %vm198, %v2172, 0
  %2179 = vmatprep.subr.bf16.mxu0 0
  %2180 = vmatpush1.bf16.xpose.msra.mxu0 %v2177
  %2181 = vmatprep.subr.bf16.mxu0 0
  %2182 = vmatpush1.bf16.xpose.msra.mxu0 0
  %2183 = vmatprep.subr.bf16.mxu0 0
  %2184 = vmatpush1.bf16.xpose.msra.mxu0 0
  %2185 = vmatprep.subr.bf16.mxu0 0
  %2186 = vmatpush1.bf16.xpose.msra.mxu0 0
  %2187 = vmatprep.subr.bf16.mxu0 0
  %2188 = vmatpush1.bf16.xpose.msra.mxu0 0
  %2189 = vmatprep.subr.bf16.mxu0 0
  %2190 = vmatpush1.bf16.xpose.msra.mxu0 0
  %2191 = vmatprep.subr.bf16.mxu0 0
  %2192 = vmatpush1.bf16.xpose.msra.mxu0 0
  %2193 = vmatprep.subr.bf16.mxu0 0
  %2194 = vmatpush1.bf16.xpose.msra.mxu0 0
  %2195 = vmatprep.subr.bf16.mxu0 0
  %2196 = vmatpush1.bf16.xpose.msra.mxu0 0
  %2197 = vmatprep.subr.bf16.mxu0 0
  %2198 = vmatpush1.bf16.xpose.msra.mxu0 0
  %2199 = vmatprep.subr.bf16.mxu0 0
  %2200 = vmatpush1.bf16.xpose.msra.mxu0 0
  %2201 = vmatprep.subr.bf16.mxu0 0
  %2202 = vmatpush1.bf16.xpose.msra.mxu0 0
  %2203 = vmatprep.subr.bf16.mxu0 0
  %2204 = vmatpush1.bf16.xpose.msra.mxu0 0
  %2205 = vmatprep.subr.bf16.mxu0 0
  %2206 = vmatpush1.bf16.xpose.msra.mxu0 0
  %2207 = vmatprep.subr.bf16.mxu0 0
  %2208 = vmatpush1.bf16.xpose.msra.mxu0 0
  %2209 = vmatprep.subr.bf16.mxu0 0
  %2210 = vmatpush1.bf16.xpose.msra.mxu0 0
  %2211 = vmatprep.mubr.bf16.mxu0 0
  %2212 = vmatmul.mubr.bf16.gmra.mrb[0].mxu0 %v2174
  %v2213 = vpop.f32.mrb[0].mxu0
  %v2214 = vadd.f32 %v189, %v2213
  %v2215 = vpop.f32.mrb[0].mxu0
  %v2216 = vpop.f32.mrb[0].mxu0
  %v2217 = vpop.f32.mrb[0].mxu0
  %2218 = vdwg.mxu0
  %2219 = vrot.lane.b32.xlu0 %v1512, 104
  %v2220 = vpop.permute.xlu0 %2219
  %2221 = vrot.lane.b32.xlu0 %v1512, 72
  %v2222 = vpop.permute.xlu0 %2221
  %v2224 = vsel %vm198, %v2220, 0
  %v2227 = vsel %vm198, %v2222, 0
  %2229 = vmatprep.subr.bf16.mxu0 0
  %2230 = vmatpush1.bf16.xpose.msra.mxu0 %v2227
  %2231 = vmatprep.subr.bf16.mxu0 0
  %2232 = vmatpush1.bf16.xpose.msra.mxu0 0
  %2233 = vmatprep.subr.bf16.mxu0 0
  %2234 = vmatpush1.bf16.xpose.msra.mxu0 0
  %2235 = vmatprep.subr.bf16.mxu0 0
  %2236 = vmatpush1.bf16.xpose.msra.mxu0 0
  %2237 = vmatprep.subr.bf16.mxu0 0
  %2238 = vmatpush1.bf16.xpose.msra.mxu0 0
  %2239 = vmatprep.subr.bf16.mxu0 0
  %2240 = vmatpush1.bf16.xpose.msra.mxu0 0
  %2241 = vmatprep.subr.bf16.mxu0 0
  %2242 = vmatpush1.bf16.xpose.msra.mxu0 0
  %2243 = vmatprep.subr.bf16.mxu0 0
  %2244 = vmatpush1.bf16.xpose.msra.mxu0 0
  %2245 = vmatprep.subr.bf16.mxu0 0
  %2246 = vmatpush1.bf16.xpose.msra.mxu0 0
  %2247 = vmatprep.subr.bf16.mxu0 0
  %2248 = vmatpush1.bf16.xpose.msra.mxu0 0
  %2249 = vmatprep.subr.bf16.mxu0 0
  %2250 = vmatpush1.bf16.xpose.msra.mxu0 0
  %2251 = vmatprep.subr.bf16.mxu0 0
  %2252 = vmatpush1.bf16.xpose.msra.mxu0 0
  %2253 = vmatprep.subr.bf16.mxu0 0
  %2254 = vmatpush1.bf16.xpose.msra.mxu0 0
  %2255 = vmatprep.subr.bf16.mxu0 0
  %2256 = vmatpush1.bf16.xpose.msra.mxu0 0
  %2257 = vmatprep.subr.bf16.mxu0 0
  %2258 = vmatpush1.bf16.xpose.msra.mxu0 0
  %2259 = vmatprep.subr.bf16.mxu0 0
  %2260 = vmatpush1.bf16.xpose.msra.mxu0 0
  %2261 = vmatprep.mubr.bf16.mxu0 0
  %2262 = vmatmul.mubr.bf16.gmra.mrb[0].mxu0 %v2224
  %v2263 = vpop.f32.mrb[0].mxu0
  %v2264 = vadd.f32 %v193, %v2263
  %v2265 = vpop.f32.mrb[0].mxu0
  %v2266 = vpop.f32.mrb[0].mxu0
  %v2267 = vpop.f32.mrb[0].mxu0
  %2268 = vdwg.mxu0
  %v2269 = vsel %vm198, %v2214, -inf
  %2270 = vmax.xlane.f32.xlu0 %v2269
  %v2271 = vpop.xlane.xlu0 %2270
  %v2272 = vsel %vm198, %v2264, -inf
  %2273 = vmax.xlane.f32.xlu0 %v2272
  %v2274 = vpop.xlane.xlu0 %2273
  %v2275 = vsub.f32 %v2214, %v2271
  %v2276 = vsub.f32 %v2264, %v2274
  %v2277 = vmul.f32 %v2275, 1.442695
  %v2278 = vpow.pop %v2277
  %v2279 = vmul.f32 %v2276, 1.442695
  %v2280 = vpow.pop %v2279
  %v2281 = vsel %vm198, %v2278, 0.0
  %2282 = vadd.xlane.f32.xlu0 %v2281
  %v2283 = vpop.xlane.xlu0 %2282
  %v2284 = vsel %vm198, %v2280, 0.0
  %2285 = vadd.xlane.f32.xlu0 %v2284
  %v2286 = vpop.xlane.xlu0 %2285
  %v2287 = vrcp.pop %v2283
  %v2288 = vrcp.pop %v2286
  %v2289 = vmul.f32 %v2278, %v2287
  %v2290 = vmul.f32 %v2280, %v2288
  %v2291 = vpack.c.bf16 %v2289, %v2289
  %v2292 = vpack.c.bf16 %v2290, %v2290
  %2293 = vrot.lane.b32.xlu0 %v1511, 40
  %v2294 = vpop.permute.xlu0 %2293
  %v2296 = vsel %vm198, %v2291, 0
  %v2299 = vsel %vm322, %v2294, 0
  %2301 = vmatprep.subr.bf16.mxu0 0
  %2302 = vmatpush1.bf16.msra.mxu0 %v2299
  %2303 = vmatprep.subr.bf16.mxu0 0
  %2304 = vmatpush1.bf16.msra.mxu0 0
  %2305 = vmatprep.subr.bf16.mxu0 0
  %2306 = vmatpush1.bf16.msra.mxu0 0
  %2307 = vmatprep.subr.bf16.mxu0 0
  %2308 = vmatpush1.bf16.msra.mxu0 0
  %2309 = vmatprep.subr.bf16.mxu0 0
  %2310 = vmatpush1.bf16.msra.mxu0 0
  %2311 = vmatprep.subr.bf16.mxu0 0
  %2312 = vmatpush1.bf16.msra.mxu0 0
  %2313 = vmatprep.subr.bf16.mxu0 0
  %2314 = vmatpush1.bf16.msra.mxu0 0
  %2315 = vmatprep.subr.bf16.mxu0 0
  %2316 = vmatpush1.bf16.msra.mxu0 0
  %2317 = vmatprep.subr.bf16.mxu0 0
  %2318 = vmatpush1.bf16.msra.mxu0 0
  %2319 = vmatprep.subr.bf16.mxu0 0
  %2320 = vmatpush1.bf16.msra.mxu0 0
  %2321 = vmatprep.subr.bf16.mxu0 0
  %2322 = vmatpush1.bf16.msra.mxu0 0
  %2323 = vmatprep.subr.bf16.mxu0 0
  %2324 = vmatpush1.bf16.msra.mxu0 0
  %2325 = vmatprep.subr.bf16.mxu0 0
  %2326 = vmatpush1.bf16.msra.mxu0 0
  %2327 = vmatprep.subr.bf16.mxu0 0
  %2328 = vmatpush1.bf16.msra.mxu0 0
  %2329 = vmatprep.subr.bf16.mxu0 0
  %2330 = vmatpush1.bf16.msra.mxu0 0
  %2331 = vmatprep.subr.bf16.mxu0 0
  %2332 = vmatpush1.bf16.msra.mxu0 0
  %2333 = vmatprep.mubr.bf16.mxu0 0
  %2334 = vmatmul.mubr.bf16.gmra.mrb[0].mxu0 %v2296
  %v2335 = vpop.f32.mrb[0].mxu0
  %v2336 = vadd.f32 0.0, %v2335
  %v2337 = vpop.f32.mrb[0].mxu0
  %v2338 = vpop.f32.mrb[0].mxu0
  %v2339 = vpop.f32.mrb[0].mxu0
  %2340 = vdwg.mxu0
  %2341 = vrot.lane.b32.xlu0 %v1512, 40
  %v2342 = vpop.permute.xlu0 %2341
  %v2344 = vsel %vm198, %v2292, 0
  %v2347 = vsel %vm322, %v2342, 0
  %2349 = vmatprep.subr.bf16.mxu0 0
  %2350 = vmatpush1.bf16.msra.mxu0 %v2347
  %2351 = vmatprep.subr.bf16.mxu0 0
  %2352 = vmatpush1.bf16.msra.mxu0 0
  %2353 = vmatprep.subr.bf16.mxu0 0
  %2354 = vmatpush1.bf16.msra.mxu0 0
  %2355 = vmatprep.subr.bf16.mxu0 0
  %2356 = vmatpush1.bf16.msra.mxu0 0
  %2357 = vmatprep.subr.bf16.mxu0 0
  %2358 = vmatpush1.bf16.msra.mxu0 0
  %2359 = vmatprep.subr.bf16.mxu0 0
  %2360 = vmatpush1.bf16.msra.mxu0 0
  %2361 = vmatprep.subr.bf16.mxu0 0
  %2362 = vmatpush1.bf16.msra.mxu0 0
  %2363 = vmatprep.subr.bf16.mxu0 0
  %2364 = vmatpush1.bf16.msra.mxu0 0
  %2365 = vmatprep.subr.bf16.mxu0 0
  %2366 = vmatpush1.bf16.msra.mxu0 0
  %2367 = vmatprep.subr.bf16.mxu0 0
  %2368 = vmatpush1.bf16.msra.mxu0 0
  %2369 = vmatprep.subr.bf16.mxu0 0
  %2370 = vmatpush1.bf16.msra.mxu0 0
  %2371 = vmatprep.subr.bf16.mxu0 0
  %2372 = vmatpush1.bf16.msra.mxu0 0
  %2373 = vmatprep.subr.bf16.mxu0 0
  %2374 = vmatpush1.bf16.msra.mxu0 0
  %2375 = vmatprep.subr.bf16.mxu0 0
  %2376 = vmatpush1.bf16.msra.mxu0 0
  %2377 = vmatprep.subr.bf16.mxu0 0
  %2378 = vmatpush1.bf16.msra.mxu0 0
  %2379 = vmatprep.subr.bf16.mxu0 0
  %2380 = vmatpush1.bf16.msra.mxu0 0
  %2381 = vmatprep.mubr.bf16.mxu0 0
  %2382 = vmatmul.mubr.bf16.gmra.mrb[0].mxu0 %v2344
  %v2383 = vpop.f32.mrb[0].mxu0
  %v2384 = vadd.f32 0.0, %v2383
  %v2385 = vpop.f32.mrb[0].mxu0
  %v2386 = vpop.f32.mrb[0].mxu0
  %v2387 = vpop.f32.mrb[0].mxu0
  %2388 = vdwg.mxu0
  %2391 = vrot.lane.b32.xlu0 %v1896, 8
  %v2392 = vpop.permute.xlu0 %2391
  %2393 = vrot.lane.b32.xlu0 %v1944, 8
  %v2394 = vpop.permute.xlu0 %2393
  %2399 = vrot.lane.b32.xlu0 %v2116, 16
  %v2400 = vpop.permute.xlu0 %2399
  %2401 = vrot.lane.b32.xlu0 %v2164, 16
  %v2402 = vpop.permute.xlu0 %2401
  %2407 = vrot.lane.b32.xlu0 %v2336, 24
  %v2408 = vpop.permute.xlu0 %2407
  %2409 = vrot.lane.b32.xlu0 %v2384, 24
  %v2410 = vpop.permute.xlu0 %2409
  %v2413 = vsel %vm198, %v1676, %v2392
  %v2414 = vsel %vm198, %v1724, %v2394
  %v2415 = vsel %vm1100, %v2413, %v2400
  %v2416 = vsel %vm1100, %v2414, %v2402
  %v2417 = vsel %vm1103, %v2415, %v2408
  %v2418 = vsel %vm1103, %v2416, %v2410
  %v2419 = vpack.c.bf16 %v2418, %v2417
  %s2420 = scalar_lea.vmem %s6, 16
  %v2421 = vld [vmem:[%s2420] sm:$0xf]
  %v2422 = vld [vmem:[%s2420 + $0x4] sm:$0xf]
  %v2423 = vld [vmem:[%s2420 + $0x8] sm:$0xf]
  %v2424 = vld [vmem:[%s2420 + $0xc] sm:$0xf]
  %s2425 = scalar_lea.vmem %s7, 1
  %v2426 = vld [vmem:[%s2425] sm:$0x1]
  %v2428 = vlaneseq
  %v2429 = vshrl.u32 %v2428, 7
  %v2430 = vsub.s32 0, %v2429
  %v2431 = vrot.slane %v2426, %v2430
  %v2437 = vunpack.c.l.b16 %v2421
  %v2438 = vunpack.c.l.b16 %v2422
  %v2439 = vunpack.c.l.b16 %v2423
  %v2440 = vunpack.c.l.b16 %v2424
  %v2441 = vpack.c.b16 %v2438, %v2437
  %v2442 = vpack.c.b16 %v2440, %v2439
  %v2446 = vsel %vm64, %v2419, 0
  %2448 = vmatprep.subr.bf16.mxu0 0
  %2449 = vmatpush1.bf16.msra.mxu0 %v2441
  %2450 = vmatprep.subr.bf16.mxu0 0
  %2451 = vmatpush1.bf16.msra.mxu0 %v2442
  %2452 = vmatprep.subr.bf16.mxu0 0
  %2453 = vmatpush1.bf16.msra.mxu0 0
  %2454 = vmatprep.subr.bf16.mxu0 0
  %2455 = vmatpush1.bf16.msra.mxu0 0
  %2456 = vmatprep.subr.bf16.mxu0 0
  %2457 = vmatpush1.bf16.msra.mxu0 0
  %2458 = vmatprep.subr.bf16.mxu0 0
  %2459 = vmatpush1.bf16.msra.mxu0 0
  %2460 = vmatprep.subr.bf16.mxu0 0
  %2461 = vmatpush1.bf16.msra.mxu0 0
  %2462 = vmatprep.subr.bf16.mxu0 0
  %2463 = vmatpush1.bf16.msra.mxu0 0
  %2464 = vmatprep.subr.bf16.mxu0 0
  %2465 = vmatpush1.bf16.msra.mxu0 0
  %2466 = vmatprep.subr.bf16.mxu0 0
  %2467 = vmatpush1.bf16.msra.mxu0 0
  %2468 = vmatprep.subr.bf16.mxu0 0
  %2469 = vmatpush1.bf16.msra.mxu0 0
  %2470 = vmatprep.subr.bf16.mxu0 0
  %2471 = vmatpush1.bf16.msra.mxu0 0
  %2472 = vmatprep.subr.bf16.mxu0 0
  %2473 = vmatpush1.bf16.msra.mxu0 0
  %2474 = vmatprep.subr.bf16.mxu0 0
  %2475 = vmatpush1.bf16.msra.mxu0 0
  %2476 = vmatprep.subr.bf16.mxu0 0
  %2477 = vmatpush1.bf16.msra.mxu0 0
  %2478 = vmatprep.subr.bf16.mxu0 0
  %2479 = vmatpush1.bf16.msra.mxu0 0
  %2480 = vmatprep.mubr.bf16.mxu0 0
  %2481 = vmatmul.mubr.bf16.gmra.mrb[0].mxu0 %v2446
  %v2482 = vpop.f32.mrb[0].mxu0
  %v2483 = vadd.f32 %v2431, %v2482
  %v2484 = vpop.f32.mrb[0].mxu0
  %v2485 = vpop.f32.mrb[0].mxu0
  %v2486 = vadd.f32 %v2431, %v2485
  %v2487 = vpop.f32.mrb[0].mxu0
  %2488 = vdwg.mxu0
  %v2489 = vadd.f32 %v1435, %v2483
  %v2490 = vadd.f32 %v1436, %v2486
  %s2491 = scalar_lea.vmem %s8, 1
  %v2492 = vld [vmem:[%s2491] sm:$0x1]
  %s2493 = scalar_lea.vmem %s9, 1
  %v2494 = vld [vmem:[%s2493] sm:$0x1]
  %v2495 = vsel %vm64, %v2489, 0.0
  %2496 = vadd.xlane.f32.xlu0 %v2495
  %v2497 = vpop.xlane.xlu0 %2496
  %v2498 = vsel %vm64, %v2490, 0.0
  %2499 = vadd.xlane.f32.xlu0 %v2498
  %v2500 = vpop.xlane.xlu0 %2499
  %v2501 = vmul.f32 %v2497, %v71
  %v2502 = vmul.f32 %v2500, %v71
  %v2503 = vsub.f32 %v2489, %v2501
  %v2504 = vsub.f32 %v2490, %v2502
  %v2505 = vmul.f32 %v2503, %v2503
  %v2506 = vmul.f32 %v2504, %v2504
  %v2507 = vsel %vm64, %v2505, 0.0
  %2508 = vadd.xlane.f32.xlu0 %v2507
  %v2509 = vpop.xlane.xlu0 %2508
  %v2510 = vsel %vm64, %v2506, 0.0
  %2511 = vadd.xlane.f32.xlu0 %v2510
  %v2512 = vpop.xlane.xlu0 %2511
  %v2513 = vmul.f32 %v2509, %v71
  %v2514 = vmul.f32 %v2512, %v71
  %v2515 = vadd.f32 %v2513, 1e-12
  %v2516 = vadd.f32 %v2514, 1e-12
  %v2517 = vrsqrt.pop %v2515
  %v2518 = vrsqrt.pop %v2516
  %v2519 = vmul.f32 %v2503, %v2517
  %v2520 = vmul.f32 %v2504, %v2518
  %v2522 = vlaneseq
  %v2523 = vshrl.u32 %v2522, 7
  %v2524 = vsub.s32 0, %v2523
  %v2525 = vrot.slane %v2492, %v2524
  %v2527 = vmul.f32 %v2519, %v2525
  %v2528 = vmul.f32 %v2520, %v2525
  %v2530 = vlaneseq
  %v2531 = vshrl.u32 %v2530, 7
  %v2532 = vsub.s32 0, %v2531
  %v2533 = vrot.slane %v2494, %v2532
  %v2535 = vadd.f32 %v2527, %v2533
  %v2536 = vadd.f32 %v2528, %v2533
  %v2537 = vpack.c.bf16 %v2536, %v2535
  %s2538 = scalar_lea.vmem %s10, 16
  %v2539 = vld [vmem:[%s2538] sm:$0xf]
  %v2540 = vld [vmem:[%s2538 + $0x4] sm:$0xf]
  %v2541 = vld [vmem:[%s2538 + $0x8] sm:$0xf]
  %v2542 = vld [vmem:[%s2538 + $0xc] sm:$0xf]
  %s2543 = scalar_lea.vmem %s11, 1
  %v2544 = vld [vmem:[%s2543] sm:$0x1]
  %v2546 = vlaneseq
  %v2547 = vshrl.u32 %v2546, 7
  %v2548 = vsub.s32 0, %v2547
  %v2549 = vrot.slane %v2544, %v2548
  %v2555 = vunpack.c.l.b16 %v2539
  %v2556 = vunpack.c.l.b16 %v2540
  %v2557 = vunpack.c.l.b16 %v2541
  %v2558 = vunpack.c.l.b16 %v2542
  %v2559 = vpack.c.b16 %v2556, %v2555
  %v2560 = vpack.c.b16 %v2558, %v2557
  %v2564 = vsel %vm64, %v2537, 0
  %2566 = vmatprep.subr.bf16.mxu0 0
  %2567 = vmatpush1.bf16.msra.mxu0 %v2559
  %2568 = vmatprep.subr.bf16.mxu0 0
  %2569 = vmatpush1.bf16.msra.mxu0 %v2560
  %2570 = vmatprep.subr.bf16.mxu0 0
  %2571 = vmatpush1.bf16.msra.mxu0 0
  %2572 = vmatprep.subr.bf16.mxu0 0
  %2573 = vmatpush1.bf16.msra.mxu0 0
  %2574 = vmatprep.subr.bf16.mxu0 0
  %2575 = vmatpush1.bf16.msra.mxu0 0
  %2576 = vmatprep.subr.bf16.mxu0 0
  %2577 = vmatpush1.bf16.msra.mxu0 0
  %2578 = vmatprep.subr.bf16.mxu0 0
  %2579 = vmatpush1.bf16.msra.mxu0 0
  %2580 = vmatprep.subr.bf16.mxu0 0
  %2581 = vmatpush1.bf16.msra.mxu0 0
  %2582 = vmatprep.subr.bf16.mxu0 0
  %2583 = vmatpush1.bf16.msra.mxu0 0
  %2584 = vmatprep.subr.bf16.mxu0 0
  %2585 = vmatpush1.bf16.msra.mxu0 0
  %2586 = vmatprep.subr.bf16.mxu0 0
  %2587 = vmatpush1.bf16.msra.mxu0 0
  %2588 = vmatprep.subr.bf16.mxu0 0
  %2589 = vmatpush1.bf16.msra.mxu0 0
  %2590 = vmatprep.subr.bf16.mxu0 0
  %2591 = vmatpush1.bf16.msra.mxu0 0
  %2592 = vmatprep.subr.bf16.mxu0 0
  %2593 = vmatpush1.bf16.msra.mxu0 0
  %2594 = vmatprep.subr.bf16.mxu0 0
  %2595 = vmatpush1.bf16.msra.mxu0 0
  %2596 = vmatprep.subr.bf16.mxu0 0
  %2597 = vmatpush1.bf16.msra.mxu0 0
  %2598 = vmatprep.mubr.bf16.mxu0 0
  %2599 = vmatmul.mubr.bf16.gmra.mrb[0].mxu0 %v2564
  %v2600 = vpop.f32.mrb[0].mxu0
  %v2601 = vadd.f32 %v2549, %v2600
  %v2602 = vpop.f32.mrb[0].mxu0
  %v2603 = vpop.f32.mrb[0].mxu0
  %v2604 = vadd.f32 %v2549, %v2603
  %v2605 = vpop.f32.mrb[0].mxu0
  %2606 = vdwg.mxu0
  %v2607 = vmul.f32 %v2601, 0.5
  %v2608 = vmul.f32 %v2604, 0.5
  %v2609 = vmul.f32 %v2601, 0.044715
  %v2610 = vmul.f32 %v2604, 0.044715
  %v2611 = vmul.f32 %v2609, %v2601
  %v2612 = vmul.f32 %v2610, %v2604
  %v2613 = vmul.f32 %v2611, %v2601
  %v2614 = vmul.f32 %v2612, %v2604
  %v2615 = vadd.f32 %v2601, %v2613
  %v2616 = vadd.f32 %v2604, %v2614
  %v2617 = vmul.f32 %v2615, 0.7978846
  %v2618 = vmul.f32 %v2616, 0.7978846
  %v2619 = vtanh.pop %v2617
  %v2620 = vtanh.pop %v2618
  %v2621 = vadd.f32 %v2619, 1.0
  %v2622 = vadd.f32 %v2620, 1.0
  %v2623 = vmul.f32 %v2607, %v2621
  %v2624 = vmul.f32 %v2608, %v2622
  %v2625 = vpack.c.bf16 %v2624, %v2623
  %s2626 = scalar_lea.vmem %s12, 32
  %v2627 = vld [vmem:[%s2626] sm:$0xf]
  %v2628 = vld [vmem:[%s2626 + $0x4] sm:$0xf]
  %v2629 = vld [vmem:[%s2626 + $0x8] sm:$0xf]
  %v2630 = vld [vmem:[%s2626 + $0xc] sm:$0xf]
  %v2631 = vld [vmem:[%s2626 + $0x10] sm:$0xf]
  %v2632 = vld [vmem:[%s2626 + $0x14] sm:$0xf]
  %v2633 = vld [vmem:[%s2626 + $0x18] sm:$0xf]
  %v2634 = vld [vmem:[%s2626 + $0x1c] sm:$0xf]
  %s2635 = scalar_lea.vmem %s13, 1
  %v2636 = vld [vmem:[%s2635] sm:$0x1]
  %v2638 = vlaneseq
  %v2639 = vshrl.u32 %v2638, 7
  %v2640 = vsub.s32 0, %v2639
  %v2641 = vrot.slane %v2636, %v2640
  %v2651 = vunpack.c.l.b16 %v2627
  %v2652 = vunpack.c.l.b16 %v2628
  %v2653 = vunpack.c.l.b16 %v2629
  %v2654 = vunpack.c.l.b16 %v2630
  %v2655 = vunpack.c.l.b16 %v2631
  %v2656 = vunpack.c.l.b16 %v2632
  %v2657 = vunpack.c.l.b16 %v2633
  %v2658 = vunpack.c.l.b16 %v2634
  %v2659 = vpack.c.b16 %v2652, %v2651
  %v2660 = vpack.c.b16 %v2654, %v2653
  %v2661 = vpack.c.b16 %v2656, %v2655
  %v2662 = vpack.c.b16 %v2658, %v2657
  %v2668 = vsel %vm1346, %v2625, 0
  %2670 = vmatprep.subr.bf16.mxu0 0
  %2671 = vmatpush1.bf16.msra.mxu0 %v2659
  %2672 = vmatprep.subr.bf16.mxu0 0
  %2673 = vmatpush1.bf16.msra.mxu0 %v2660
  %2674 = vmatprep.subr.bf16.mxu0 0
  %2675 = vmatpush1.bf16.msra.mxu0 %v2661
  %2676 = vmatprep.subr.bf16.mxu0 0
  %2677 = vmatpush1.bf16.msra.mxu0 %v2662
  %2678 = vmatprep.subr.bf16.mxu0 0
  %2679 = vmatpush1.bf16.msra.mxu0 0
  %2680 = vmatprep.subr.bf16.mxu0 0
  %2681 = vmatpush1.bf16.msra.mxu0 0
  %2682 = vmatprep.subr.bf16.mxu0 0
  %2683 = vmatpush1.bf16.msra.mxu0 0
  %2684 = vmatprep.subr.bf16.mxu0 0
  %2685 = vmatpush1.bf16.msra.mxu0 0
  %2686 = vmatprep.subr.bf16.mxu0 0
  %2687 = vmatpush1.bf16.msra.mxu0 0
  %2688 = vmatprep.subr.bf16.mxu0 0
  %2689 = vmatpush1.bf16.msra.mxu0 0
  %2690 = vmatprep.subr.bf16.mxu0 0
  %2691 = vmatpush1.bf16.msra.mxu0 0
  %2692 = vmatprep.subr.bf16.mxu0 0
  %2693 = vmatpush1.bf16.msra.mxu0 0
  %2694 = vmatprep.subr.bf16.mxu0 0
  %2695 = vmatpush1.bf16.msra.mxu0 0
  %2696 = vmatprep.subr.bf16.mxu0 0
  %2697 = vmatpush1.bf16.msra.mxu0 0
  %2698 = vmatprep.subr.bf16.mxu0 0
  %2699 = vmatpush1.bf16.msra.mxu0 0
  %2700 = vmatprep.subr.bf16.mxu0 0
  %2701 = vmatpush1.bf16.msra.mxu0 0
  %2702 = vmatprep.mubr.bf16.mxu0 0
  %2703 = vmatmul.mubr.bf16.gmra.mrb[0].mxu0 %v2668
  %v2704 = vpop.f32.mrb[0].mxu0
  %v2705 = vadd.f32 %v2641, %v2704
  %v2706 = vpop.f32.mrb[0].mxu0
  %v2707 = vpop.f32.mrb[0].mxu0
  %v2708 = vadd.f32 %v2641, %v2707
  %v2709 = vpop.f32.mrb[0].mxu0
  %2710 = vdwg.mxu0
  %v2711 = vadd.f32 %v2535, %v2705
  %v2712 = vadd.f32 %v2536, %v2708
  %s2713 = scalar_lea.vmem %s14, 1
  %v2714 = vld [vmem:[%s2713] sm:$0x1]
  %s2715 = scalar_lea.vmem %s15, 1
  %v2716 = vld [vmem:[%s2715] sm:$0x1]
  %v2717 = vsel %vm64, %v2711, 0.0
  %2718 = vadd.xlane.f32.xlu0 %v2717
  %v2719 = vpop.xlane.xlu0 %2718
  %v2720 = vsel %vm64, %v2712, 0.0
  %2721 = vadd.xlane.f32.xlu0 %v2720
  %v2722 = vpop.xlane.xlu0 %2721
  %v2723 = vmul.f32 %v2719, %v71
  %v2724 = vmul.f32 %v2722, %v71
  %v2725 = vsub.f32 %v2711, %v2723
  %v2726 = vsub.f32 %v2712, %v2724
  %v2727 = vmul.f32 %v2725, %v2725
  %v2728 = vmul.f32 %v2726, %v2726
  %v2729 = vsel %vm64, %v2727, 0.0
  %2730 = vadd.xlane.f32.xlu0 %v2729
  %v2731 = vpop.xlane.xlu0 %2730
  %v2732 = vsel %vm64, %v2728, 0.0
  %2733 = vadd.xlane.f32.xlu0 %v2732
  %v2734 = vpop.xlane.xlu0 %2733
  %v2735 = vmul.f32 %v2731, %v71
  %v2736 = vmul.f32 %v2734, %v71
  %v2737 = vadd.f32 %v2735, 1e-12
  %v2738 = vadd.f32 %v2736, 1e-12
  %v2739 = vrsqrt.pop %v2737
  %v2740 = vrsqrt.pop %v2738
  %v2741 = vmul.f32 %v2725, %v2739
  %v2742 = vmul.f32 %v2726, %v2740
  %v2744 = vlaneseq
  %v2745 = vshrl.u32 %v2744, 7
  %v2746 = vsub.s32 0, %v2745
  %v2747 = vrot.slane %v2714, %v2746
  %v2749 = vmul.f32 %v2741, %v2747
  %v2750 = vmul.f32 %v2742, %v2747
  %v2752 = vlaneseq
  %v2753 = vshrl.u32 %v2752, 7
  %v2754 = vsub.s32 0, %v2753
  %v2755 = vrot.slane %v2716, %v2754
  %v2757 = vadd.f32 %v2749, %v2755
  %v2758 = vadd.f32 %v2750, %v2755
  %v2759 = vld [vmem:[%s16] sm:$0xff]
  %v2760 = vld [vmem:[%s16 + $0x8] sm:$0xff]
  %v2761 = vld [vmem:[%s16 + $0x10] sm:$0xff]
  %v2762 = vld [vmem:[%s16 + $0x18] sm:$0xff]
  %v2763 = vld [vmem:[%s17] sm:$0x1]
  %v2765 = vlaneseq
  %v2766 = vshrl.u32 %v2765, 7
  %v2767 = vsub.s32 0, %v2766
  %v2768 = vrot.slane %v2763, %v2767
  %v2772 = vrot.slane %v2758, 7
  %vm2773 = vcmask 1041409
  %v2774 = vsel %vm2773, %v2772, %v2757
  %v2775 = vsel %vm64, %v2774, 0
  %2777 = vmatprep.subr.mxu0 0.0
  %2778 = vmatpush1.msra.mxu0 %v2759
  %2779 = vmatprep.subr.mxu0 0.0
  %2780 = vmatpush1.msra.mxu0 %v2760
  %2781 = vmatprep.subr.mxu0 0.0
  %2782 = vmatpush1.msra.mxu0 %v2761
  %2783 = vmatprep.subr.mxu0 0.0
  %2784 = vmatpush1.msra.mxu0 %v2762
  %2785 = vmatprep.subr.mxu0 0.0
  %2786 = vmatpush1.msra.mxu0 0.0
  %2787 = vmatprep.subr.mxu0 0.0
  %2788 = vmatpush1.msra.mxu0 0.0
  %2789 = vmatprep.subr.mxu0 0.0
  %2790 = vmatpush1.msra.mxu0 0.0
  %2791 = vmatprep.subr.mxu0 0.0
  %2792 = vmatpush1.msra.mxu0 0.0
  %2793 = vmatprep.subr.mxu0 0.0
  %2794 = vmatpush1.msra.mxu0 0.0
  %2795 = vmatprep.subr.mxu0 0.0
  %2796 = vmatpush1.msra.mxu0 0.0
  %2797 = vmatprep.subr.mxu0 0.0
  %2798 = vmatpush1.msra.mxu0 0.0
  %2799 = vmatprep.subr.mxu0 0.0
  %2800 = vmatpush1.msra.mxu0 0.0
  %2801 = vmatprep.subr.mxu0 0.0
  %2802 = vmatpush1.msra.mxu0 0.0
  %2803 = vmatprep.subr.mxu0 0.0
  %2804 = vmatpush1.msra.mxu0 0.0
  %2805 = vmatprep.subr.mxu0 0.0
  %2806 = vmatpush1.msra.mxu0 0.0
  %2807 = vmatprep.subr.mxu0 0.0
  %2808 = vmatpush1.msra.mxu0 0.0
  %2809 = vmatprep.subr.mxu0 0.0
  %2810 = vmatpush1.msra.mxu0 0.0
  %2811 = vmatprep.subr.mxu0 0.0
  %2812 = vmatpush1.msra.mxu0 0.0
  %2813 = vmatprep.subr.mxu0 0.0
  %2814 = vmatpush1.msra.mxu0 0.0
  %2815 = vmatprep.subr.mxu0 0.0
  %2816 = vmatpush1.msra.mxu0 0.0
  %2817 = vmatprep.subr.mxu0 0.0
  %2818 = vmatpush1.msra.mxu0 0.0
  %2819 = vmatprep.subr.mxu0 0.0
  %2820 = vmatpush1.msra.mxu0 0.0
  %2821 = vmatprep.subr.mxu0 0.0
  %2822 = vmatpush1.msra.mxu0 0.0
  %2823 = vmatprep.subr.mxu0 0.0
  %2824 = vmatpush1.msra.mxu0 0.0
  %2825 = vmatprep.subr.mxu0 0.0
  %2826 = vmatpush1.msra.mxu0 0.0
  %2827 = vmatprep.subr.mxu0 0.0
  %2828 = vmatpush1.msra.mxu0 0.0
  %2829 = vmatprep.subr.mxu0 0.0
  %2830 = vmatpush1.msra.mxu0 0.0
  %2831 = vmatprep.subr.mxu0 0.0
  %2832 = vmatpush1.msra.mxu0 0.0
  %2833 = vmatprep.subr.mxu0 0.0
  %2834 = vmatpush1.msra.mxu0 0.0
  %2835 = vmatprep.subr.mxu0 0.0
  %2836 = vmatpush1.msra.mxu0 0.0
  %2837 = vmatprep.subr.mxu0 0.0
  %2838 = vmatpush1.msra.mxu0 0.0
  %2839 = vmatprep.subr.mxu0 0.0
  %2840 = vmatpush1.msra.mxu0 0.0
  %2841 = vmatprep.mubr.f32.mxu0 0.0
  %2842 = vmatmul.mubr.f32.gmra.mrb[0].mxu0 %v2775
  %v2843 = vpop.f32.mrb[0].mxu0
  %v2844 = vadd.f32 %v2768, %v2843
  %v2845 = vpop.f32.mrb[0].mxu0
  %2846 = vdwg.mxu0
  %2847 = vst [vmem:[%s18] sm:$0x3] %v2844
  // Predicated region
  $region74: #{bert_dssm_forward.1} parent=0 // pred_check
    _
  $region75: #{bert_dssm_forward.1} parent=0 // pred_check_branch
    %2849 = sbr.rel (0) target = $region77
  $region76: #{bert_dssm_forward.1} parent=0 // pred_region
    _
  $region77: #{bert_dssm_forward.1} parent=0 // pred_fallthru
    _
  // Predicated region
  $region78: #{bert_dssm_forward.1} parent=0 // pred_check
    _
  $region79: #{bert_dssm_forward.1} parent=0 // pred_check_branch
    %2851 = sbr.rel (0) target = $region81
  $region80: #{bert_dssm_forward.1} parent=0 // pred_region
    _
  $region81: #{bert_dssm_forward.1} parent=0 // pred_fallthru
    _

</llo_original>
